<compile_context>
chip_gen: v7x
topology: tpu7x:2x2x1
jax: 0.10.0
libtpu: 0.0.40
codegen_flags: <defaults>
</compile_context>

<pallas_src>
import jax
import jax.numpy as jnp
from jax.experimental import pallas as pl
from jax.experimental.pallas import tpu as pltpu

LANE = 128
SUBLANE_ALIGN = 32        # row alignment safe for f32/bf16/int8 tilings
MAX_BLOCK_ROWS = 2048     # 2048x128 blocks: ~1 MiB/input (f32), amortizes per-step overhead
PALLAS_MIN_ELEMS = 65536  # below this, fixed pallas/pad costs dominate -> pure-JAX fallback


def _cdiv(a, b):
    return -(-a // b)


def _round_up(a, b):
    return _cdiv(a, b) * b


def _num_tensorcores():
    """TensorCore count for the parallel split (2 on v7x; 1 on v5e/v6e). Defensive."""
    try:
        info = pltpu.get_tpu_info()
        for name in ("num_cores", "core_count", "num_tensorcores", "tensorcore_count"):
            v = getattr(info, name, None)
            if isinstance(v, int) and 1 <= v <= 8:
                return v
    except Exception:
        pass
    return 2


NUM_SPLITS = _num_tensorcores()


def _make_kl_kernel(n_valid, block_rows, inner):
    """Per-module KL-sum kernel. n_valid / block_rows / inner are static Python ints."""
    elems_per_block = block_rows * LANE

    def kernel(mu_ref, rho_ref, out_ref, acc_ref):
        c = pl.program_id(0)          # parallel split (megacore on v7x)
        i = pl.program_id(1)          # reduction axis (last in grid)

        @pl.when(i == 0)
        def _init():
            acc_ref[...] = jnp.zeros_like(acc_ref)

        # Native-dtype load, upcast before any math (no bf16 VPU/EUP on v5e).
        mu = mu_ref[...].astype(jnp.float32)
        rho = rho_ref[...].astype(jnp.float32)

        # Numerically stable softplus for the posterior std.
        sp = jnp.maximum(rho, 0.0) + jnp.log1p(jnp.exp(-jnp.abs(rho)))
        # Closed-form KL( N(mu, sp^2) || N(0, 1) ), PRIOR_STD = 1 folded in.
        # (3 transcendentals/elem -> EUP-bound on v7x; accepted, see review.)
        kl = 0.5 * (sp * sp + mu * mu) - jnp.log(sp) - 0.5

        # Only the block(s) containing the zero-padded tail pay for the mask.
        # NOTE: block_start is i32; fine for < 2^31 elements per module.
        block_start = (c * inner + i) * elems_per_block
        has_pad = block_start + elems_per_block > n_valid

        @pl.when(jnp.logical_not(has_pad))
        def _full():
            acc_ref[...] += kl

        @pl.when(has_pad)
        def _tail():
            row_ids = jax.lax.broadcasted_iota(jnp.int32, (block_rows, LANE), 0)
            col_ids = jax.lax.broadcasted_iota(jnp.int32, (block_rows, LANE), 1)
            idx = block_start + row_ids * LANE + col_ids
            acc_ref[...] += jnp.where(idx < n_valid, kl, 0.0)

        # Collapse the resident accumulator in-kernel: only (8,128) is written back.
        @pl.when(i == inner - 1)
        def _finalize():
            acc = acc_ref[...]
            out_ref[...] = jnp.sum(acc.reshape(block_rows // 8, 8, LANE), axis=0)

    return kernel


def _pallas_kl_sum(mu_flat, rho_flat):
    """Sum of per-element KL over one module's flat (mu, rho) via a Pallas kernel."""
    n = int(mu_flat.shape[0])
    rows_needed = max(_cdiv(n, LANE), 1)
    block_rows = min(MAX_BLOCK_ROWS,
                     _round_up(_cdiv(rows_needed, NUM_SPLITS), SUBLANE_ALIGN))
    rows_pad = _round_up(rows_needed, NUM_SPLITS * block_rows)
    inner = rows_pad // (NUM_SPLITS * block_rows)
    pad = rows_pad * LANE - n

    def prep(x):
        if pad:
            x = jnp.pad(x, (0, pad))          # native dtype, zeros (masked in-kernel)
        return x.reshape(rows_pad, LANE)

    mu2 = prep(mu_flat)
    rho2 = prep(rho_flat)

    kernel = _make_kl_kernel(n, block_rows, inner)

    partial = pl.pallas_call(
        kernel,
        out_shape=jax.ShapeDtypeStruct((NUM_SPLITS * 8, LANE), jnp.float32),
        grid_spec=pltpu.PrefetchScalarGridSpec(
            num_scalar_prefetch=0,
            grid=(NUM_SPLITS, inner),
            in_specs=[
                pl.BlockSpec((block_rows, LANE), lambda c, i: (c * inner + i, 0)),
                pl.BlockSpec((block_rows, LANE), lambda c, i: (c * inner + i, 0)),
            ],
            out_specs=pl.BlockSpec((8, LANE), lambda c, i: (c, 0)),
            scratch_shapes=[pltpu.VMEM((block_rows, LANE), jnp.float32)],
        ),
        compiler_params=pltpu.CompilerParams(
            dimension_semantics=("parallel", "arbitrary")),
    )(mu2, rho2)

    # Tiny (NUM_SPLITS*8, 128) cross-lane reduction, paid once per module.
    return jnp.sum(partial)


def _kl_sum_small(mu_flat, rho_flat):
    """Pure-JAX fallback for small modules (pallas fixed costs would dominate)."""
    mu = mu_flat.astype(jnp.float32)
    sp = jax.nn.softplus(rho_flat.astype(jnp.float32))
    kl = 0.5 * (sp * sp + mu * mu) - jnp.log(sp) - 0.5
    return jnp.sum(kl)


class KLDivergenceLoss:
    """JAX/Pallas port of illia KLDivergenceLoss.forward.

    `bayesian_modules` is a list of (mu, rho) parameter pairs (any shape), standing
    in for iterating `model.modules()` and calling `module.kl_cost()`.
    Only reduction="mean" exists in the reference; the argument is stored as-is.
    """

    def __init__(self, reduction="mean", weight=1.0):
        self.reduction = reduction
        self.weight = weight

    def __call__(self, bayesian_modules):
        kl_global_cost = jnp.asarray(0.0, jnp.float32)
        num_params = 1
        for mu, rho in bayesian_modules:
            mu_flat = jnp.ravel(mu)
            rho_flat = jnp.ravel(rho)
            n = int(mu_flat.shape[0])
            if n >= PALLAS_MIN_ELEMS:
                kl_cost = _pallas_kl_sum(mu_flat, rho_flat)
            else:
                kl_cost = _kl_sum_small(mu_flat, rho_flat)
            kl_global_cost = kl_global_cost + kl_cost
            num_params = n                     # reference quirk: LAST module's count
        kl_global_cost = kl_global_cost / num_params
        kl_global_cost = kl_global_cost * self.weight
        return kl_global_cost


class ELBOLoss:
    """JAX/Pallas port of illia ELBOLoss.forward (recon loss stays user-supplied JAX)."""

    def __init__(self, loss_function, num_samples=1, kl_weight=0.001):
        self.loss_function = loss_function
        self.num_samples = num_samples
        self.kl_weight = kl_weight
        self.kl_loss = KLDivergenceLoss(weight=kl_weight)

    def __call__(self, outputs, targets, bayesian_modules):
        loss_value = jnp.asarray(0.0, jnp.float32)
        for _ in range(self.num_samples):
            loss_value = loss_value + self.loss_function(outputs, targets) \
                         + self.kl_loss(bayesian_modules)
        loss_value = loss_value / self.num_samples
        return loss_value


# ---------------------------------------------------------------------------
# Pure-JAX references for verification
# ---------------------------------------------------------------------------
def _kl_reference(bayesian_modules, weight=1.0):
    total = jnp.asarray(0.0, jnp.float32)
    num_params = 1
    for mu, rho in bayesian_modules:
        mu = jnp.ravel(mu).astype(jnp.float32)
        sp = jax.nn.softplus(jnp.ravel(rho).astype(jnp.float32))
        kl = 0.5 * (sp * sp + mu * mu) - jnp.log(sp) - 0.5
        total = total + jnp.sum(kl)
        num_params = int(mu.size)
    return total / num_params * weight


def _elbo_reference(outputs, targets, modules, loss_fn, num_samples, kl_weight):
    loss = jnp.asarray(0.0, jnp.float32)
    for _ in range(num_samples):
        loss = loss + loss_fn(outputs, targets) + _kl_reference(modules, weight=kl_weight)
    return loss / num_samples


def _make_bayesian_module(key, weight_shape, bias_shape):
    """Deterministic synthetic Bayesian module: flattened (mu, rho) vectors."""
    k1, k2, k3, k4 = jax.random.split(key, 4)
    w_mu = 0.1 * jax.random.normal(k1, weight_shape, jnp.float32)
    b_mu = 0.1 * jax.random.normal(k2, bias_shape, jnp.float32)
    w_rho = -3.0 + 0.1 * jax.random.normal(k3, weight_shape, jnp.float32)
    b_rho = -3.0 + 0.1 * jax.random.normal(k4, bias_shape, jnp.float32)
    mu_flat = jnp.concatenate([w_mu.reshape(-1), b_mu.reshape(-1)])
    rho_flat = jnp.concatenate([w_rho.reshape(-1), b_rho.reshape(-1)])
    return mu_flat, rho_flat


if __name__ == "__main__":
    key = jax.random.PRNGKey(0)
    k_lin, k_conv, k_big, k_out, k_tgt = jax.random.split(key, 5)

    # Synthetic "model" with three Bayesian modules:
    #   BayesianLinear : weight (32, 16),      bias (32,)  ->    544 params (JAX fallback)
    #   BayesianConv2d : weight (4, 4, 3, 3),  bias (4,)   ->    148 params (JAX fallback)
    #   BayesianLinear : weight (512, 256),    bias (512,) -> 131584 params (Pallas kernel)
    modules = [
        _make_bayesian_module(k_lin, (32, 16), (32,)),
        _make_bayesian_module(k_conv, (4, 4, 3, 3), (4,)),
        _make_bayesian_module(k_big, (512, 256), (512,)),
    ]

    # Small predictions/targets for the reconstruction term (batch=2, features=8).
    outputs = jax.random.normal(k_out, (2, 8), jnp.float32)
    targets = jax.random.normal(k_tgt, (2, 8), jnp.float32)
    mse = lambda o, t: jnp.mean((o - t) ** 2)

    # KL-only check over all modules (small ones via fallback, big one via Pallas).
    kl_fn = KLDivergenceLoss(reduction="mean", weight=1.0)
    kl_out = jax.block_until_ready(kl_fn(modules))
    kl_ref = jax.block_until_ready(_kl_reference(modules, weight=1.0))
    assert jnp.allclose(kl_out, kl_ref, rtol=1e-5, atol=1e-5), (kl_out, kl_ref)

    # Pallas hot path alone (big module only).
    big_only = [modules[2]]
    kl_big = jax.block_until_ready(kl_fn(big_only))
    kl_big_ref = jax.block_until_ready(_kl_reference(big_only, weight=1.0))
    assert jnp.allclose(kl_big, kl_big_ref, rtol=1e-5, atol=1e-5), (kl_big, kl_big_ref)

    # Full ELBO forward.
    elbo = ELBOLoss(loss_function=mse, num_samples=2, kl_weight=0.001)
    out = jax.block_until_ready(elbo(outputs, targets, modules))
    ref = jax.block_until_ready(
        _elbo_reference(outputs, targets, modules, mse, num_samples=2, kl_weight=0.001))
    assert jnp.allclose(out, ref, rtol=1e-5, atol=1e-6), (out, ref)

    print("KERNEL_OK")
</pallas_src>

<mosaic_0001>
module attributes {stable_mosaic.version = 11 : i64} {
  func.func @kernel(%arg0: i32, %arg1: i32, %arg2: memref<544x128xf32, #tpu.memory_space<vmem>>, %arg3: memref<544x128xf32, #tpu.memory_space<vmem>>, %arg4: memref<8x128xf32, #tpu.memory_space<vmem>>, %arg5: memref<544x128xf32, #tpu.memory_space<vmem>>) attributes {dimension_semantics = [#tpu.dimension_semantics<parallel>, #tpu.dimension_semantics<arbitrary>], iteration_bounds = array<i64: 2, 1>, scalar_prefetch = 0 : i64, scratch_operands = 1 : i64, tpu.core_type = #tpu.core_type<tc>, window_params = [{transform_indices = @transform_0, window_bounds = array<i64: 544, 128>}, {transform_indices = @transform_1, window_bounds = array<i64: 544, 128>}, {transform_indices = @transform_2, window_bounds = array<i64: 8, 128>}]} {
    %c0_i32 = arith.constant 0 : i32
    %0 = arith.cmpi eq, %arg1, %c0_i32 : i32
    %1 = arith.extui %0 : i1 to i32
    %c0_i32_0 = arith.constant 0 : i32
    %2 = arith.cmpi ne, %1, %c0_i32_0 : i32
    scf.if %2 {
      %cst_12 = arith.constant 0.000000e+00 : f32
      %35 = vector.broadcast %cst_12 : f32 to vector<544x128xf32>
      %c0_13 = arith.constant 0 : index
      %c0_14 = arith.constant 0 : index
      %36 = vector.load %arg5[%c0_13, %c0_14] : memref<544x128xf32, #tpu.memory_space<vmem>>, vector<544x128xf32>
      tpu.vector_store %arg5[%c0_13, %c0_14], %35 {strides = array<i32>} : memref<544x128xf32, #tpu.memory_space<vmem>>, vector<544x128xf32>,
    } else {
    }
    %c0 = arith.constant 0 : index
    %c0_1 = arith.constant 0 : index
    %3 = vector.load %arg2[%c0, %c0_1] : memref<544x128xf32, #tpu.memory_space<vmem>>, vector<544x128xf32>
    %c0_2 = arith.constant 0 : index
    %c0_3 = arith.constant 0 : index
    %4 = vector.load %arg3[%c0_2, %c0_3] : memref<544x128xf32, #tpu.memory_space<vmem>>, vector<544x128xf32>
    %cst = arith.constant 0.000000e+00 : f32
    %5 = vector.broadcast %cst : f32 to vector<544x128xf32>
    %6 = arith.maximumf %4, %5 : vector<544x128xf32>
    %7 = math.absf %4 : vector<544x128xf32>
    %cst_4 = arith.constant 0.000000e+00 : f32
    %8 = vector.broadcast %cst_4 : f32 to vector<544x128xf32>
    %9 = arith.subf %8, %7 : vector<544x128xf32>
    %10 = math.exp %9 : vector<544x128xf32>
    %11 = math.log1p %10 : vector<544x128xf32>
    %12 = arith.addf %6, %11 : vector<544x128xf32>
    %13 = arith.mulf %12, %12 : vector<544x128xf32>
    %14 = arith.mulf %3, %3 : vector<544x128xf32>
    %15 = arith.addf %13, %14 : vector<544x128xf32>
    %cst_5 = arith.constant 5.000000e-01 : f32
    %16 = vector.broadcast %cst_5 : f32 to vector<544x128xf32>
    %17 = arith.mulf %16, %15 : vector<544x128xf32>
    %18 = math.log %12 : vector<544x128xf32>
    %19 = arith.subf %17, %18 : vector<544x128xf32>
    %cst_6 = arith.constant 5.000000e-01 : f32
    %20 = vector.broadcast %cst_6 : f32 to vector<544x128xf32>
    %21 = arith.subf %19, %20 : vector<544x128xf32>
    %c1_i32 = arith.constant 1 : i32
    %22 = arith.muli %arg0, %c1_i32 : i32
    %23 = arith.addi %22, %arg1 : i32
    %c69632_i32 = arith.constant 69632 : i32
    %24 = arith.muli %23, %c69632_i32 : i32
    %c69632_i32_7 = arith.constant 69632 : i32
    %25 = arith.addi %24, %c69632_i32_7 : i32
    %c131584_i32 = arith.constant 131584 : i32
    %26 = arith.cmpi sgt, %25, %c131584_i32 : i32
    %true = arith.constant true
    %27 = arith.xori %26, %true : i1
    %28 = arith.extui %27 : i1 to i32
    %c0_i32_8 = arith.constant 0 : i32
    %29 = arith.cmpi ne, %28, %c0_i32_8 : i32
    scf.if %29 {
      %c0_12 = arith.constant 0 : index
      %c0_13 = arith.constant 0 : index
      %35 = vector.load %arg5[%c0_12, %c0_13] : memref<544x128xf32, #tpu.memory_space<vmem>>, vector<544x128xf32>
      %36 = arith.addf %35, %21 : vector<544x128xf32>
      %c0_14 = arith.constant 0 : index
      %c0_15 = arith.constant 0 : index
      %37 = vector.load %arg5[%c0_14, %c0_15] : memref<544x128xf32, #tpu.memory_space<vmem>>, vector<544x128xf32>
      tpu.vector_store %arg5[%c0_14, %c0_15], %36 {strides = array<i32>} : memref<544x128xf32, #tpu.memory_space<vmem>>, vector<544x128xf32>,
    } else {
    }
    %30 = arith.extui %26 : i1 to i32
    %c0_i32_9 = arith.constant 0 : i32
    %31 = arith.cmpi ne, %30, %c0_i32_9 : i32
    scf.if %31 {
      %35 = tpu.iota {dimensions = array<i32: 0>} : vector<544x128xi32>
      %36 = tpu.iota {dimensions = array<i32: 1>} : vector<544x128xi32>
      %c128_i32 = arith.constant 128 : i32
      %37 = vector.broadcast %c128_i32 : i32 to vector<544x128xi32>
      %38 = arith.muli %35, %37 : vector<544x128xi32>
      %39 = vector.broadcast %24 : i32 to vector<544x128xi32>
      %40 = arith.addi %39, %38 : vector<544x128xi32>
      %41 = arith.addi %40, %36 : vector<544x128xi32>
      %c0_12 = arith.constant 0 : index
      %c0_13 = arith.constant 0 : index
      %42 = vector.load %arg5[%c0_12, %c0_13] : memref<544x128xf32, #tpu.memory_space<vmem>>, vector<544x128xf32>
      %c131584_i32_14 = arith.constant 131584 : i32
      %43 = vector.broadcast %c131584_i32_14 : i32 to vector<544x128xi32>
      %44 = arith.cmpi slt, %41, %43 : vector<544x128xi32>
      %cst_15 = arith.constant 0.000000e+00 : f32
      %45 = vector.broadcast %cst_15 : f32 to vector<544x128xf32>
      %46 = arith.select %44, %21, %45 : vector<544x128xi1>, vector<544x128xf32>
      %47 = arith.addf %42, %46 : vector<544x128xf32>
      %c0_16 = arith.constant 0 : index
      %c0_17 = arith.constant 0 : index
      %48 = vector.load %arg5[%c0_16, %c0_17] : memref<544x128xf32, #tpu.memory_space<vmem>>, vector<544x128xf32>
      tpu.vector_store %arg5[%c0_16, %c0_17], %47 {strides = array<i32>} : memref<544x128xf32, #tpu.memory_space<vmem>>, vector<544x128xf32>,
    } else {
    }
    %c0_i32_10 = arith.constant 0 : i32
    %32 = arith.cmpi eq, %arg1, %c0_i32_10 : i32
    %33 = arith.extui %32 : i1 to i32
    %c0_i32_11 = arith.constant 0 : i32
    %34 = arith.cmpi ne, %33, %c0_i32_11 : i32
    scf.if %34 {
      %c0_12 = arith.constant 0 : index
      %c0_13 = arith.constant 0 : index
      %35 = vector.load %arg5[%c0_12, %c0_13] : memref<544x128xf32, #tpu.memory_space<vmem>>, vector<544x128xf32>
      %36 = vector.shape_cast %35 : vector<544x128xf32> to vector<68x8x128xf32>
      %cst_14 = arith.constant dense<0.000000e+00> : vector<8x128xf32>
      %37 = vector.multi_reduction <add>, %36, %cst_14 [0] : vector<68x8x128xf32> to vector<8x128xf32>
      %c0_15 = arith.constant 0 : index
      %c0_16 = arith.constant 0 : index
      %38 = vector.load %arg4[%c0_15, %c0_16] : memref<8x128xf32, #tpu.memory_space<vmem>>, vector<8x128xf32>
      tpu.vector_store %arg4[%c0_15, %c0_16], %37 {strides = array<i32>} : memref<8x128xf32, #tpu.memory_space<vmem>>, vector<8x128xf32>,
    } else {
    }
    return
  }
  func.func @transform_0(%arg0: i32, %arg1: i32) -> (i32, i32) {
    %c1_i32 = arith.constant 1 : i32
    %0 = arith.muli %arg0, %c1_i32 : i32
    %1 = arith.addi %0, %arg1 : i32
    %c0_i32 = arith.constant 0 : i32
    %c0_i32_0 = arith.constant 0 : i32
    return %1, %c0_i32 : i32, i32
  }
  func.func @transform_1(%arg0: i32, %arg1: i32) -> (i32, i32) {
    %c1_i32 = arith.constant 1 : i32
    %0 = arith.muli %arg0, %c1_i32 : i32
    %1 = arith.addi %0, %arg1 : i32
    %c0_i32 = arith.constant 0 : i32
    %c0_i32_0 = arith.constant 0 : i32
    return %1, %c0_i32 : i32, i32
  }
  func.func @transform_2(%arg0: i32, %arg1: i32) -> (i32, i32) {
    %c0_i32 = arith.constant 0 : i32
    %c0_i32_0 = arith.constant 0 : i32
    return %arg0, %c0_i32 : i32, i32
  }
}

</mosaic_0001>

<llo_original>
// kernel: tpu_custom_call.1
$region0: #{tpu_custom_call.1}
  #allocation0 [shape = 'u32[]', space=smem, size = 0x4, offset = 0x4, fixed_abs, tag = 'smem constant byte address 0x4 - core index']
  #allocation1 [shape = 'u32[144,128]{1,0:T(1,128)}', space=vmem, size = 0x12000, scoped, tag = 'internal scratch']
  #allocation2 [shape = 'f32[544,128]{1,0:T(8,128)}', space=vmem, size = 0x44000, scoped, tag = 'scratch operand']
  %s0 = inlined_call_operand.hbm [shape: f32[1088,128], index: 0, kind: input, shape index: {}]
  %s1 = inlined_call_operand.hbm [shape: f32[1088,128], index: 1, kind: input, shape index: {}]
  %s2 = inlined_call_operand.hbm [shape: f32[16,128], index: 2, kind: output, shape index: {}]
  %s3 = sld [smem:[#allocation0]]
  $region65: #{tpu_custom_call.1} parent=0
    _
  %s5 = ssub.s32 1, %s3
  %s6 = scalar_select 0, %s5, %s3
  $region1: #{tpu_custom_call.1} parent=0
    #allocation3 [shape = 'u8[557056]{0}', space=vmem, size = 0x88000, scoped, tag = 'input window, operand 0']
    #allocation4 [shape = 's32[2]{0}', space=sflag, size = 0x8, scoped, tag = 'scoped memory for tpu_custom_call.1']
    #allocation5 [shape = 's32[2]{0}', space=sflag, size = 0x8, scoped, tag = 'scoped memory for tpu_custom_call.1']
    #allocation6 [shape = 'u8[557056]{0}', space=vmem, size = 0x88000, scoped, tag = 'input window, operand 1']
    #allocation7 [shape = 's32[2]{0}', space=sflag, size = 0x8, scoped, tag = 'scoped memory for tpu_custom_call.1']
    #allocation8 [shape = 'u8[8192]{0}', space=vmem, size = 0x2000, scoped, tag = 'output window, operand 0']
    %7 = vsyncpa [#allocation4], 0
    %s8 = scalar_lea.sflag [#allocation4], 1
    %9 = vsyncpa %s8, 0
    %10 = vsyncpa [#allocation7], 0
    %s11 = scalar_lea.sflag [#allocation7], 1
    %12 = vsyncpa %s11, 0
    %13 = vsyncpa [#allocation5], 0
    %s14 = scalar_lea.sflag [#allocation5], 1
    %15 = vsyncpa %s14, 0
    loop: start=0, step=1, limit=4
    $region2: #{tpu_custom_call.1} parent=1 // loop_pre_header
      _
    $region3: #{tpu_custom_call.1} parent=1 // loop_header
      %s17 = sphi 0, %s21
      %p18 = scmp.ge.s32.totalorder %s17, 4
      %s24 = sphi 0, %s36
      %s25 = sphi 0, %s32
      %s26 = sphi 0, %s24
      %s27 = sphi 0, %s25
      %s28 = sphi 0, %s26
      %s29 = sphi 0, %s27
      %s41 = sphi 0, %s43
      %s44 = sphi 0, %s41
      %s45 = sphi 0, %s44
      %s61 = sphi 0, %s45
      %s69 = sphi 0, %s71
      %s72 = sphi 0, %s69
      %s73 = sphi 0, %s72
      %s89 = sphi 0, %s73
      %s95 = sphi 0, %s97
      %s98 = sphi 0, %s95
      %s99 = sphi 0, %s98
      %s115 = sphi 0, %s99
    $region4: #{tpu_custom_call.1} parent=1 // loop_header_branch
      %20 = sbr.rel (%p18) target = $region8
    $region5: #{tpu_custom_call.1} parent=1 // loop_body
      %s22 = ssub.s32 %s17, 1
      %s23 = ssub.s32 %s17, 2
      %s30 = sadd.s32 1, %s25
      %p31 = scmp.ge.s32.totalorder %s30, 1
      %s32 = scalar_select %p31, 0, %s30
      %s33 = sadd.s32 1, %s24
      %s34 = scalar_select %p31, %s33, %s24
      %p35 = scmp.ge.s32.totalorder %s34, 2
      %s36 = scalar_select %p35, 0, %s34
      %s37 = sadd.s32 %s24, %s25
      %s38 = sadd.s32 %s36, %s32
      %s39 = ssub.s32 %s37, %s38
      %p40 = scmp.eq.s32.totalorder %s39, 0
      %s42 = sadd.s32 %s41, 1
      %s43 = scalar_select %p40, %s41, %s42
      %p46 = pneg %p40
      %p47 = scmp.eq.s32.totalorder %s17, 1
      %p48 = por %p46, %p47
      %p49 = scmp.ne.s32.totalorder %s41, %s44
      %p50 = scmp.eq.s32.totalorder %s17, 0
      %p51 = por %p49, %p50
      %p52 = scmp.ne.s32.totalorder %s41, %s44
      %p53 = scmp.eq.s32.totalorder %s22, 1
      %p54 = por %p52, %p53
      %p55 = scmp.ne.s32.totalorder %s44, %s45
      %p56 = scmp.eq.s32.totalorder %s22, 0
      %p57 = por %p55, %p56
      %p58 = scmp.ne.s32.totalorder %s44, %s45
      %p59 = scmp.eq.s32.totalorder %s23, 1
      %p60 = por %p58, %p59
      %p62 = scmp.ne.s32.totalorder %s45, %s61
      %p63 = scmp.eq.s32.totalorder %s23, 0
      %p64 = por %p62, %p63
      %s65 = sadd.s32 %s24, %s25
      %s66 = sadd.s32 %s36, %s32
      %s67 = ssub.s32 %s65, %s66
      %p68 = scmp.eq.s32.totalorder %s67, 0
      %s70 = sadd.s32 %s69, 1
      %s71 = scalar_select %p68, %s69, %s70
      %p74 = pneg %p68
      %p75 = scmp.eq.s32.totalorder %s17, 1
      %p76 = por %p74, %p75
      %p77 = scmp.ne.s32.totalorder %s69, %s72
      %p78 = scmp.eq.s32.totalorder %s17, 0
      %p79 = por %p77, %p78
      %p80 = scmp.ne.s32.totalorder %s69, %s72
      %p81 = scmp.eq.s32.totalorder %s22, 1
      %p82 = por %p80, %p81
      %p83 = scmp.ne.s32.totalorder %s72, %s73
      %p84 = scmp.eq.s32.totalorder %s22, 0
      %p85 = por %p83, %p84
      %p86 = scmp.ne.s32.totalorder %s72, %s73
      %p87 = scmp.eq.s32.totalorder %s23, 1
      %p88 = por %p86, %p87
      %p90 = scmp.ne.s32.totalorder %s73, %s89
      %p91 = scmp.eq.s32.totalorder %s23, 0
      %p92 = por %p90, %p91
      %s93 = ssub.s32 %s24, %s36
      %p94 = scmp.eq.s32.totalorder %s93, 0
      %s96 = sadd.s32 %s95, 1
      %s97 = scalar_select %p94, %s95, %s96
      %p100 = pneg %p94
      %p101 = scmp.eq.s32.totalorder %s17, 1
      %p102 = por %p100, %p101
      %p103 = scmp.ne.s32.totalorder %s95, %s98
      %p104 = scmp.eq.s32.totalorder %s17, 0
      %p105 = por %p103, %p104
      %p106 = scmp.ne.s32.totalorder %s95, %s98
      %p107 = scmp.eq.s32.totalorder %s22, 1
      %p108 = por %p106, %p107
      %p109 = scmp.ne.s32.totalorder %s98, %s99
      %p110 = scmp.eq.s32.totalorder %s22, 0
      %p111 = por %p109, %p110
      %p112 = scmp.ne.s32.totalorder %s98, %s99
      %p113 = scmp.eq.s32.totalorder %s23, 1
      %p114 = por %p112, %p113
      %p116 = scmp.ne.s32.totalorder %s99, %s115
      %p117 = scmp.eq.s32.totalorder %s23, 0
      %p118 = por %p116, %p117
      %p119 = scmp.le.s32.totalorder 1, %s17
      %p120 = scmp.lt.s32.totalorder %s17, 3
      %p121 = pnand %p119, %p120
      %p122 = pneg %p121
      // Predicated region
      $region9: #{tpu_custom_call.1} parent=5 // pred_check
        _
      $region10: #{tpu_custom_call.1} parent=5 // pred_check_branch
        %124 = sbr.rel (%p121) target = $region12
      $region11: #{tpu_custom_call.1} parent=5 // pred_region
        %s125 = ssub.s32 %s17, 1
      $region12: #{tpu_custom_call.1} parent=5 // pred_fallthru
        _
      %p126 = scmp.lt.s32.totalorder %s17, 2
      // Predicated region
      $region13: #{tpu_custom_call.1} parent=5 // pred_check
        %p127 = pneg %p126
      $region14: #{tpu_custom_call.1} parent=5 // pred_check_branch
        %129 = sbr.rel (%p127) target = $region16
      $region15: #{tpu_custom_call.1} parent=5 // pred_region
        // Predicated region
        $region17: #{tpu_custom_call.1} parent=15 // pred_check
          %p130 = pneg %p51
        $region18: #{tpu_custom_call.1} parent=15 // pred_check_branch
          %132 = sbr.rel (%p130) target = $region20
        $region19: #{tpu_custom_call.1} parent=15 // pred_region
          %s133 = sand.u32 %s41, 1
          %s134 = scalar_lea.sflag [#allocation4], %s133
          %s135 = sand.u32 %s41, 1
          %s136 = smul.addr %s135, 544
          %s137 = scalar_lea.vmem [#allocation3], %s136
          %s138 = sadd.s32 %s24, %s25
          %s139 = smul.u32 68, %s138
          %s141 = ssub.s32 8704, 8704
          %142 = vsyncadd %s134, %s141
          %s143 = smul.addr %s139, 128
          %s144 = scalar_lea.hbm %s0, %s143
          %s145 = sshll.u32 %s137, 4
          %s146 = int_to_ptr.vmem [resolvable:$true] %s145
          %151 = dma.hbm_to_vmem [thread:$0]  %s144, 8704, %s146, %s134, 128, 128, 8
        $region20: #{tpu_custom_call.1} parent=15 // pred_fallthru
          _
        // Predicated region
        $region21: #{tpu_custom_call.1} parent=15 // pred_check
          %p152 = pneg %p79
        $region22: #{tpu_custom_call.1} parent=15 // pred_check_branch
          %154 = sbr.rel (%p152) target = $region24
        $region23: #{tpu_custom_call.1} parent=15 // pred_region
          %s155 = sand.u32 %s69, 1
          %s156 = scalar_lea.sflag [#allocation7], %s155
          %s157 = sand.u32 %s69, 1
          %s158 = smul.addr %s157, 544
          %s159 = scalar_lea.vmem [#allocation6], %s158
          %s160 = sadd.s32 %s24, %s25
          %s161 = smul.u32 68, %s160
          %s163 = ssub.s32 8704, 8704
          %164 = vsyncadd %s156, %s163
          %s165 = smul.addr %s161, 128
          %s166 = scalar_lea.hbm %s1, %s165
          %s167 = sshll.u32 %s159, 4
          %s168 = int_to_ptr.vmem [resolvable:$true] %s167
          %173 = dma.hbm_to_vmem [thread:$0]  %s166, 8704, %s168, %s156, 128, 128, 8
        $region24: #{tpu_custom_call.1} parent=15 // pred_fallthru
          _
      $region16: #{tpu_custom_call.1} parent=5 // pred_fallthru
        _
      %p174 = scmp.le.s32.totalorder 1, %s17
      %p175 = scmp.lt.s32.totalorder %s17, 3
      %p176 = pnand %p174, %p175
      %p177 = pneg %p176
      // Predicated region
      $region25: #{tpu_custom_call.1} parent=5 // pred_check
        _
      $region26: #{tpu_custom_call.1} parent=5 // pred_check_branch
        %179 = sbr.rel (%p176) target = $region28
      $region27: #{tpu_custom_call.1} parent=5 // pred_region
        %s180 = ssub.s32 %s17, 1
        %s181 = sand.u32 %s44, 1
        %s182 = scalar_lea.sflag [#allocation4], %s181
        %s183 = sand.u32 %s44, 1
        %s184 = smul.addr %s183, 544
        %s185 = scalar_lea.vmem [#allocation3], %s184
        // Predicated region
        $region29: #{tpu_custom_call.1} parent=27 // pred_check
          %p186 = pneg %p57
        $region30: #{tpu_custom_call.1} parent=27 // pred_check_branch
          %188 = sbr.rel (%p186) target = $region32
        $region31: #{tpu_custom_call.1} parent=27 // pred_region
          %189 = dma.done %s182, 8704
        $region32: #{tpu_custom_call.1} parent=27 // pred_fallthru
          _
        %s190 = sand.u32 %s72, 1
        %s191 = scalar_lea.sflag [#allocation7], %s190
        %s192 = sand.u32 %s72, 1
        %s193 = smul.addr %s192, 544
        %s194 = scalar_lea.vmem [#allocation6], %s193
        // Predicated region
        $region33: #{tpu_custom_call.1} parent=27 // pred_check
          %p195 = pneg %p85
        $region34: #{tpu_custom_call.1} parent=27 // pred_check_branch
          %197 = sbr.rel (%p195) target = $region36
        $region35: #{tpu_custom_call.1} parent=27 // pred_region
          %198 = dma.done %s191, 8704
        $region36: #{tpu_custom_call.1} parent=27 // pred_fallthru
          _
        %s199 = sand.u32 %s44, 1
        %s200 = scalar_lea.sflag [#allocation4], %s199
        %s201 = sand.u32 %s44, 1
        %s202 = smul.addr %s201, 544
        %s203 = scalar_lea.vmem [#allocation3], %s202
        %p204 = pneg %p57
        %p205 = pneg %p54
        %s206 = sand.u32 %s72, 1
        %s207 = scalar_lea.sflag [#allocation7], %s206
        %s208 = sand.u32 %s72, 1
        %s209 = smul.addr %s208, 544
        %s210 = scalar_lea.vmem [#allocation6], %s209
        %p211 = pneg %p85
        %p212 = pneg %p82
        %p213 = pneg %p111
        %p214 = pneg %p108
        %s215 = sand.u32 %s98, 1
        %s216 = scalar_lea.sflag [#allocation5], %s215
        %s217 = sand.u32 %s98, 1
        %s218 = smul.addr %s217, 8
        %s219 = scalar_lea.vmem [#allocation8], %s218
        %s220 = sadd.s32 %s26, %s27
        %s221 = smul.u32 68, %s220
        %s222 = sadd.s32 %s26, %s27
        %s223 = smul.u32 68, %s222
        %p224 = scmp.eq.s32.totalorder %s27, 0
        // Predicated region
        $region37: #{tpu_custom_call.1} parent=27 // pred_check
          %p225 = pneg %p224
        $region38: #{tpu_custom_call.1} parent=27 // pred_check_branch
          %227 = sbr.rel (%p225) target = $region40
        $region39: #{tpu_custom_call.1} parent=27 // pred_region
          %228 = vst [vmem:[#allocation2] sm:$0xff] 0.0
          %229 = vst [vmem:[#allocation2 + $0x8] sm:$0xff] 0.0
          %230 = vst [vmem:[#allocation2 + $0x10] sm:$0xff] 0.0
          %231 = vst [vmem:[#allocation2 + $0x18] sm:$0xff] 0.0
          %232 = vst [vmem:[#allocation2 + $0x20] sm:$0xff] 0.0
          %233 = vst [vmem:[#allocation2 + $0x28] sm:$0xff] 0.0
          %234 = vst [vmem:[#allocation2 + $0x30] sm:$0xff] 0.0
          %235 = vst [vmem:[#allocation2 + $0x38] sm:$0xff] 0.0
          %236 = vst [vmem:[#allocation2 + $0x40] sm:$0xff] 0.0
          %237 = vst [vmem:[#allocation2 + $0x48] sm:$0xff] 0.0
          %238 = vst [vmem:[#allocation2 + $0x50] sm:$0xff] 0.0
          %239 = vst [vmem:[#allocation2 + $0x58] sm:$0xff] 0.0
          %240 = vst [vmem:[#allocation2 + $0x60] sm:$0xff] 0.0
          %241 = vst [vmem:[#allocation2 + $0x68] sm:$0xff] 0.0
          %242 = vst [vmem:[#allocation2 + $0x70] sm:$0xff] 0.0
          %243 = vst [vmem:[#allocation2 + $0x78] sm:$0xff] 0.0
          %244 = vst [vmem:[#allocation2 + $0x80] sm:$0xff] 0.0
          %245 = vst [vmem:[#allocation2 + $0x88] sm:$0xff] 0.0
          %246 = vst [vmem:[#allocation2 + $0x90] sm:$0xff] 0.0
          %247 = vst [vmem:[#allocation2 + $0x98] sm:$0xff] 0.0
          %248 = vst [vmem:[#allocation2 + $0xa0] sm:$0xff] 0.0
          %249 = vst [vmem:[#allocation2 + $0xa8] sm:$0xff] 0.0
          %250 = vst [vmem:[#allocation2 + $0xb0] sm:$0xff] 0.0
          %251 = vst [vmem:[#allocation2 + $0xb8] sm:$0xff] 0.0
          %252 = vst [vmem:[#allocation2 + $0xc0] sm:$0xff] 0.0
          %253 = vst [vmem:[#allocation2 + $0xc8] sm:$0xff] 0.0
          %254 = vst [vmem:[#allocation2 + $0xd0] sm:$0xff] 0.0
          %255 = vst [vmem:[#allocation2 + $0xd8] sm:$0xff] 0.0
          %256 = vst [vmem:[#allocation2 + $0xe0] sm:$0xff] 0.0
          %257 = vst [vmem:[#allocation2 + $0xe8] sm:$0xff] 0.0
          %258 = vst [vmem:[#allocation2 + $0xf0] sm:$0xff] 0.0
          %259 = vst [vmem:[#allocation2 + $0xf8] sm:$0xff] 0.0
          %260 = vst [vmem:[#allocation2 + $0x100] sm:$0xff] 0.0
          %261 = vst [vmem:[#allocation2 + $0x108] sm:$0xff] 0.0
          %262 = vst [vmem:[#allocation2 + $0x110] sm:$0xff] 0.0
          %263 = vst [vmem:[#allocation2 + $0x118] sm:$0xff] 0.0
          %264 = vst [vmem:[#allocation2 + $0x120] sm:$0xff] 0.0
          %265 = vst [vmem:[#allocation2 + $0x128] sm:$0xff] 0.0
          %266 = vst [vmem:[#allocation2 + $0x130] sm:$0xff] 0.0
          %267 = vst [vmem:[#allocation2 + $0x138] sm:$0xff] 0.0
          %268 = vst [vmem:[#allocation2 + $0x140] sm:$0xff] 0.0
          %269 = vst [vmem:[#allocation2 + $0x148] sm:$0xff] 0.0
          %270 = vst [vmem:[#allocation2 + $0x150] sm:$0xff] 0.0
          %271 = vst [vmem:[#allocation2 + $0x158] sm:$0xff] 0.0
          %272 = vst [vmem:[#allocation2 + $0x160] sm:$0xff] 0.0
          %273 = vst [vmem:[#allocation2 + $0x168] sm:$0xff] 0.0
          %274 = vst [vmem:[#allocation2 + $0x170] sm:$0xff] 0.0
          %275 = vst [vmem:[#allocation2 + $0x178] sm:$0xff] 0.0
          %276 = vst [vmem:[#allocation2 + $0x180] sm:$0xff] 0.0
          %277 = vst [vmem:[#allocation2 + $0x188] sm:$0xff] 0.0
          %278 = vst [vmem:[#allocation2 + $0x190] sm:$0xff] 0.0
          %279 = vst [vmem:[#allocation2 + $0x198] sm:$0xff] 0.0
          %280 = vst [vmem:[#allocation2 + $0x1a0] sm:$0xff] 0.0
          %281 = vst [vmem:[#allocation2 + $0x1a8] sm:$0xff] 0.0
          %282 = vst [vmem:[#allocation2 + $0x1b0] sm:$0xff] 0.0
          %283 = vst [vmem:[#allocation2 + $0x1b8] sm:$0xff] 0.0
          %284 = vst [vmem:[#allocation2 + $0x1c0] sm:$0xff] 0.0
          %285 = vst [vmem:[#allocation2 + $0x1c8] sm:$0xff] 0.0
          %286 = vst [vmem:[#allocation2 + $0x1d0] sm:$0xff] 0.0
          %287 = vst [vmem:[#allocation2 + $0x1d8] sm:$0xff] 0.0
          %288 = vst [vmem:[#allocation2 + $0x1e0] sm:$0xff] 0.0
          %289 = vst [vmem:[#allocation2 + $0x1e8] sm:$0xff] 0.0
          %290 = vst [vmem:[#allocation2 + $0x1f0] sm:$0xff] 0.0
          %291 = vst [vmem:[#allocation2 + $0x1f8] sm:$0xff] 0.0
          %292 = vst [vmem:[#allocation2 + $0x200] sm:$0xff] 0.0
          %293 = vst [vmem:[#allocation2 + $0x208] sm:$0xff] 0.0
          %294 = vst [vmem:[#allocation2 + $0x210] sm:$0xff] 0.0
          %295 = vst [vmem:[#allocation2 + $0x218] sm:$0xff] 0.0
        $region40: #{tpu_custom_call.1} parent=27 // pred_fallthru
          _
        %v296 = vld [vmem:[%s185] sm:$0xff]
        %v297 = vld [vmem:[%s185 + $0x8] sm:$0xff]
        %v298 = vld [vmem:[%s185 + $0x10] sm:$0xff]
        %v299 = vld [vmem:[%s185 + $0x18] sm:$0xff]
        %v300 = vld [vmem:[%s185 + $0x20] sm:$0xff]
        %v301 = vld [vmem:[%s185 + $0x28] sm:$0xff]
        %v302 = vld [vmem:[%s185 + $0x30] sm:$0xff]
        %v303 = vld [vmem:[%s185 + $0x38] sm:$0xff]
        %v304 = vld [vmem:[%s185 + $0x40] sm:$0xff]
        %v305 = vld [vmem:[%s185 + $0x48] sm:$0xff]
        %v306 = vld [vmem:[%s185 + $0x50] sm:$0xff]
        %v307 = vld [vmem:[%s185 + $0x58] sm:$0xff]
        %v308 = vld [vmem:[%s185 + $0x60] sm:$0xff]
        %v309 = vld [vmem:[%s185 + $0x68] sm:$0xff]
        %v310 = vld [vmem:[%s185 + $0x70] sm:$0xff]
        %v311 = vld [vmem:[%s185 + $0x78] sm:$0xff]
        %v312 = vld [vmem:[%s185 + $0x80] sm:$0xff]
        %v313 = vld [vmem:[%s185 + $0x88] sm:$0xff]
        %v314 = vld [vmem:[%s185 + $0x90] sm:$0xff]
        %v315 = vld [vmem:[%s185 + $0x98] sm:$0xff]
        %v316 = vld [vmem:[%s185 + $0xa0] sm:$0xff]
        %v317 = vld [vmem:[%s185 + $0xa8] sm:$0xff]
        %v318 = vld [vmem:[%s185 + $0xb0] sm:$0xff]
        %v319 = vld [vmem:[%s185 + $0xb8] sm:$0xff]
        %v320 = vld [vmem:[%s185 + $0xc0] sm:$0xff]
        %v321 = vld [vmem:[%s185 + $0xc8] sm:$0xff]
        %v322 = vld [vmem:[%s185 + $0xd0] sm:$0xff]
        %v323 = vld [vmem:[%s185 + $0xd8] sm:$0xff]
        %v324 = vld [vmem:[%s185 + $0xe0] sm:$0xff]
        %v325 = vld [vmem:[%s185 + $0xe8] sm:$0xff]
        %v326 = vld [vmem:[%s185 + $0xf0] sm:$0xff]
        %v327 = vld [vmem:[%s185 + $0xf8] sm:$0xff]
        %v328 = vld [vmem:[%s185 + $0x100] sm:$0xff]
        %v329 = vld [vmem:[%s185 + $0x108] sm:$0xff]
        %v330 = vld [vmem:[%s185 + $0x110] sm:$0xff]
        %v331 = vld [vmem:[%s185 + $0x118] sm:$0xff]
        %v332 = vld [vmem:[%s185 + $0x120] sm:$0xff]
        %v333 = vld [vmem:[%s185 + $0x128] sm:$0xff]
        %v334 = vld [vmem:[%s185 + $0x130] sm:$0xff]
        %v335 = vld [vmem:[%s185 + $0x138] sm:$0xff]
        %v336 = vld [vmem:[%s185 + $0x140] sm:$0xff]
        %v337 = vld [vmem:[%s185 + $0x148] sm:$0xff]
        %v338 = vld [vmem:[%s185 + $0x150] sm:$0xff]
        %v339 = vld [vmem:[%s185 + $0x158] sm:$0xff]
        %v340 = vld [vmem:[%s185 + $0x160] sm:$0xff]
        %v341 = vld [vmem:[%s185 + $0x168] sm:$0xff]
        %v342 = vld [vmem:[%s185 + $0x170] sm:$0xff]
        %v343 = vld [vmem:[%s185 + $0x178] sm:$0xff]
        %v344 = vld [vmem:[%s185 + $0x180] sm:$0xff]
        %v345 = vld [vmem:[%s185 + $0x188] sm:$0xff]
        %v346 = vld [vmem:[%s185 + $0x190] sm:$0xff]
        %v347 = vld [vmem:[%s185 + $0x198] sm:$0xff]
        %v348 = vld [vmem:[%s185 + $0x1a0] sm:$0xff]
        %v349 = vld [vmem:[%s185 + $0x1a8] sm:$0xff]
        %v350 = vld [vmem:[%s185 + $0x1b0] sm:$0xff]
        %v351 = vld [vmem:[%s185 + $0x1b8] sm:$0xff]
        %v352 = vld [vmem:[%s185 + $0x1c0] sm:$0xff]
        %v353 = vld [vmem:[%s185 + $0x1c8] sm:$0xff]
        %v354 = vld [vmem:[%s185 + $0x1d0] sm:$0xff]
        %v355 = vld [vmem:[%s185 + $0x1d8] sm:$0xff]
        %v356 = vld [vmem:[%s185 + $0x1e0] sm:$0xff]
        %v357 = vld [vmem:[%s185 + $0x1e8] sm:$0xff]
        %v358 = vld [vmem:[%s185 + $0x1f0] sm:$0xff]
        %v359 = vld [vmem:[%s185 + $0x1f8] sm:$0xff]
        %v360 = vld [vmem:[%s185 + $0x200] sm:$0xff]
        %v361 = vld [vmem:[%s185 + $0x208] sm:$0xff]
        %v362 = vld [vmem:[%s185 + $0x210] sm:$0xff]
        %v363 = vld [vmem:[%s185 + $0x218] sm:$0xff]
        %v364 = vld [vmem:[%s194] sm:$0xff]
        %v365 = vld [vmem:[%s194 + $0x8] sm:$0xff]
        %v366 = vld [vmem:[%s194 + $0x10] sm:$0xff]
        %v367 = vld [vmem:[%s194 + $0x18] sm:$0xff]
        %v368 = vld [vmem:[%s194 + $0x20] sm:$0xff]
        %v369 = vld [vmem:[%s194 + $0x28] sm:$0xff]
        %v370 = vld [vmem:[%s194 + $0x30] sm:$0xff]
        %v371 = vld [vmem:[%s194 + $0x38] sm:$0xff]
        %v372 = vld [vmem:[%s194 + $0x40] sm:$0xff]
        %v373 = vld [vmem:[%s194 + $0x48] sm:$0xff]
        %v374 = vld [vmem:[%s194 + $0x50] sm:$0xff]
        %v375 = vld [vmem:[%s194 + $0x58] sm:$0xff]
        %v376 = vld [vmem:[%s194 + $0x60] sm:$0xff]
        %v377 = vld [vmem:[%s194 + $0x68] sm:$0xff]
        %v378 = vld [vmem:[%s194 + $0x70] sm:$0xff]
        %v379 = vld [vmem:[%s194 + $0x78] sm:$0xff]
        %v380 = vld [vmem:[%s194 + $0x80] sm:$0xff]
        %v381 = vld [vmem:[%s194 + $0x88] sm:$0xff]
        %v382 = vld [vmem:[%s194 + $0x90] sm:$0xff]
        %v383 = vld [vmem:[%s194 + $0x98] sm:$0xff]
        %v384 = vld [vmem:[%s194 + $0xa0] sm:$0xff]
        %v385 = vld [vmem:[%s194 + $0xa8] sm:$0xff]
        %v386 = vld [vmem:[%s194 + $0xb0] sm:$0xff]
        %v387 = vld [vmem:[%s194 + $0xb8] sm:$0xff]
        %v388 = vld [vmem:[%s194 + $0xc0] sm:$0xff]
        %v389 = vld [vmem:[%s194 + $0xc8] sm:$0xff]
        %v390 = vld [vmem:[%s194 + $0xd0] sm:$0xff]
        %v391 = vld [vmem:[%s194 + $0xd8] sm:$0xff]
        %v392 = vld [vmem:[%s194 + $0xe0] sm:$0xff]
        %v393 = vld [vmem:[%s194 + $0xe8] sm:$0xff]
        %v394 = vld [vmem:[%s194 + $0xf0] sm:$0xff]
        %v395 = vld [vmem:[%s194 + $0xf8] sm:$0xff]
        %v396 = vld [vmem:[%s194 + $0x100] sm:$0xff]
        %v397 = vld [vmem:[%s194 + $0x108] sm:$0xff]
        %v398 = vld [vmem:[%s194 + $0x110] sm:$0xff]
        %v399 = vld [vmem:[%s194 + $0x118] sm:$0xff]
        %v400 = vld [vmem:[%s194 + $0x120] sm:$0xff]
        %v401 = vld [vmem:[%s194 + $0x128] sm:$0xff]
        %v402 = vld [vmem:[%s194 + $0x130] sm:$0xff]
        %v403 = vld [vmem:[%s194 + $0x138] sm:$0xff]
        %v404 = vld [vmem:[%s194 + $0x140] sm:$0xff]
        %v405 = vld [vmem:[%s194 + $0x148] sm:$0xff]
        %v406 = vld [vmem:[%s194 + $0x150] sm:$0xff]
        %v407 = vld [vmem:[%s194 + $0x158] sm:$0xff]
        %v408 = vld [vmem:[%s194 + $0x160] sm:$0xff]
        %v409 = vld [vmem:[%s194 + $0x168] sm:$0xff]
        %v410 = vld [vmem:[%s194 + $0x170] sm:$0xff]
        %v411 = vld [vmem:[%s194 + $0x178] sm:$0xff]
        %v412 = vld [vmem:[%s194 + $0x180] sm:$0xff]
        %v413 = vld [vmem:[%s194 + $0x188] sm:$0xff]
        %v414 = vld [vmem:[%s194 + $0x190] sm:$0xff]
        %v415 = vld [vmem:[%s194 + $0x198] sm:$0xff]
        %v416 = vld [vmem:[%s194 + $0x1a0] sm:$0xff]
        %v417 = vld [vmem:[%s194 + $0x1a8] sm:$0xff]
        %v418 = vld [vmem:[%s194 + $0x1b0] sm:$0xff]
        %v419 = vld [vmem:[%s194 + $0x1b8] sm:$0xff]
        %v420 = vld [vmem:[%s194 + $0x1c0] sm:$0xff]
        %v421 = vld [vmem:[%s194 + $0x1c8] sm:$0xff]
        %v422 = vld [vmem:[%s194 + $0x1d0] sm:$0xff]
        %v423 = vld [vmem:[%s194 + $0x1d8] sm:$0xff]
        %v424 = vld [vmem:[%s194 + $0x1e0] sm:$0xff]
        %v425 = vld [vmem:[%s194 + $0x1e8] sm:$0xff]
        %v426 = vld [vmem:[%s194 + $0x1f0] sm:$0xff]
        %v427 = vld [vmem:[%s194 + $0x1f8] sm:$0xff]
        %v428 = vld [vmem:[%s194 + $0x200] sm:$0xff]
        %v429 = vld [vmem:[%s194 + $0x208] sm:$0xff]
        %v430 = vld [vmem:[%s194 + $0x210] sm:$0xff]
        %v431 = vld [vmem:[%s194 + $0x218] sm:$0xff]
        %v432 = vmax.f32 %v364, 0.0
        %v433 = vmax.f32 %v365, 0.0
        %v434 = vmax.f32 %v366, 0.0
        %v435 = vmax.f32 %v367, 0.0
        %v436 = vmax.f32 %v368, 0.0
        %v437 = vmax.f32 %v369, 0.0
        %v438 = vmax.f32 %v370, 0.0
        %v439 = vmax.f32 %v371, 0.0
        %v440 = vmax.f32 %v372, 0.0
        %v441 = vmax.f32 %v373, 0.0
        %v442 = vmax.f32 %v374, 0.0
        %v443 = vmax.f32 %v375, 0.0
        %v444 = vmax.f32 %v376, 0.0
        %v445 = vmax.f32 %v377, 0.0
        %v446 = vmax.f32 %v378, 0.0
        %v447 = vmax.f32 %v379, 0.0
        %v448 = vmax.f32 %v380, 0.0
        %v449 = vmax.f32 %v381, 0.0
        %v450 = vmax.f32 %v382, 0.0
        %v451 = vmax.f32 %v383, 0.0
        %v452 = vmax.f32 %v384, 0.0
        %v453 = vmax.f32 %v385, 0.0
        %v454 = vmax.f32 %v386, 0.0
        %v455 = vmax.f32 %v387, 0.0
        %v456 = vmax.f32 %v388, 0.0
        %v457 = vmax.f32 %v389, 0.0
        %v458 = vmax.f32 %v390, 0.0
        %v459 = vmax.f32 %v391, 0.0
        %v460 = vmax.f32 %v392, 0.0
        %v461 = vmax.f32 %v393, 0.0
        %v462 = vmax.f32 %v394, 0.0
        %v463 = vmax.f32 %v395, 0.0
        %v464 = vmax.f32 %v396, 0.0
        %v465 = vmax.f32 %v397, 0.0
        %v466 = vmax.f32 %v398, 0.0
        %v467 = vmax.f32 %v399, 0.0
        %v468 = vmax.f32 %v400, 0.0
        %v469 = vmax.f32 %v401, 0.0
        %v470 = vmax.f32 %v402, 0.0
        %v471 = vmax.f32 %v403, 0.0
        %v472 = vmax.f32 %v404, 0.0
        %v473 = vmax.f32 %v405, 0.0
        %v474 = vmax.f32 %v406, 0.0
        %v475 = vmax.f32 %v407, 0.0
        %v476 = vmax.f32 %v408, 0.0
        %v477 = vmax.f32 %v409, 0.0
        %v478 = vmax.f32 %v410, 0.0
        %v479 = vmax.f32 %v411, 0.0
        %v480 = vmax.f32 %v412, 0.0
        %v481 = vmax.f32 %v413, 0.0
        %v482 = vmax.f32 %v414, 0.0
        %v483 = vmax.f32 %v415, 0.0
        %v484 = vmax.f32 %v416, 0.0
        %v485 = vmax.f32 %v417, 0.0
        %v486 = vmax.f32 %v418, 0.0
        %v487 = vmax.f32 %v419, 0.0
        %v488 = vmax.f32 %v420, 0.0
        %v489 = vmax.f32 %v421, 0.0
        %v490 = vmax.f32 %v422, 0.0
        %v491 = vmax.f32 %v423, 0.0
        %v492 = vmax.f32 %v424, 0.0
        %v493 = vmax.f32 %v425, 0.0
        %v494 = vmax.f32 %v426, 0.0
        %v495 = vmax.f32 %v427, 0.0
        %v496 = vmax.f32 %v428, 0.0
        %v497 = vmax.f32 %v429, 0.0
        %v498 = vmax.f32 %v430, 0.0
        %v499 = vmax.f32 %v431, 0.0
        %v500 = vand.u32 2147483647, %v364
        %v501 = vand.u32 2147483647, %v365
        %v502 = vand.u32 2147483647, %v366
        %v503 = vand.u32 2147483647, %v367
        %v504 = vand.u32 2147483647, %v368
        %v505 = vand.u32 2147483647, %v369
        %v506 = vand.u32 2147483647, %v370
        %v507 = vand.u32 2147483647, %v371
        %v508 = vand.u32 2147483647, %v372
        %v509 = vand.u32 2147483647, %v373
        %v510 = vand.u32 2147483647, %v374
        %v511 = vand.u32 2147483647, %v375
        %v512 = vand.u32 2147483647, %v376
        %v513 = vand.u32 2147483647, %v377
        %v514 = vand.u32 2147483647, %v378
        %v515 = vand.u32 2147483647, %v379
        %v516 = vand.u32 2147483647, %v380
        %v517 = vand.u32 2147483647, %v381
        %v518 = vand.u32 2147483647, %v382
        %v519 = vand.u32 2147483647, %v383
        %v520 = vand.u32 2147483647, %v384
        %v521 = vand.u32 2147483647, %v385
        %v522 = vand.u32 2147483647, %v386
        %v523 = vand.u32 2147483647, %v387
        %v524 = vand.u32 2147483647, %v388
        %v525 = vand.u32 2147483647, %v389
        %v526 = vand.u32 2147483647, %v390
        %v527 = vand.u32 2147483647, %v391
        %v528 = vand.u32 2147483647, %v392
        %v529 = vand.u32 2147483647, %v393
        %v530 = vand.u32 2147483647, %v394
        %v531 = vand.u32 2147483647, %v395
        %v532 = vand.u32 2147483647, %v396
        %v533 = vand.u32 2147483647, %v397
        %v534 = vand.u32 2147483647, %v398
        %v535 = vand.u32 2147483647, %v399
        %v536 = vand.u32 2147483647, %v400
        %v537 = vand.u32 2147483647, %v401
        %v538 = vand.u32 2147483647, %v402
        %v539 = vand.u32 2147483647, %v403
        %v540 = vand.u32 2147483647, %v404
        %v541 = vand.u32 2147483647, %v405
        %v542 = vand.u32 2147483647, %v406
        %v543 = vand.u32 2147483647, %v407
        %v544 = vand.u32 2147483647, %v408
        %v545 = vand.u32 2147483647, %v409
        %v546 = vand.u32 2147483647, %v410
        %v547 = vand.u32 2147483647, %v411
        %v548 = vand.u32 2147483647, %v412
        %v549 = vand.u32 2147483647, %v413
        %v550 = vand.u32 2147483647, %v414
        %v551 = vand.u32 2147483647, %v415
        %v552 = vand.u32 2147483647, %v416
        %v553 = vand.u32 2147483647, %v417
        %v554 = vand.u32 2147483647, %v418
        %v555 = vand.u32 2147483647, %v419
        %v556 = vand.u32 2147483647, %v420
        %v557 = vand.u32 2147483647, %v421
        %v558 = vand.u32 2147483647, %v422
        %v559 = vand.u32 2147483647, %v423
        %v560 = vand.u32 2147483647, %v424
        %v561 = vand.u32 2147483647, %v425
        %v562 = vand.u32 2147483647, %v426
        %v563 = vand.u32 2147483647, %v427
        %v564 = vand.u32 2147483647, %v428
        %v565 = vand.u32 2147483647, %v429
        %v566 = vand.u32 2147483647, %v430
        %v567 = vand.u32 2147483647, %v431
        %v568 = vsub.f32 0.0, %v500
        %v569 = vsub.f32 0.0, %v501
        %v570 = vsub.f32 0.0, %v502
        %v571 = vsub.f32 0.0, %v503
        %v572 = vsub.f32 0.0, %v504
        %v573 = vsub.f32 0.0, %v505
        %v574 = vsub.f32 0.0, %v506
        %v575 = vsub.f32 0.0, %v507
        %v576 = vsub.f32 0.0, %v508
        %v577 = vsub.f32 0.0, %v509
        %v578 = vsub.f32 0.0, %v510
        %v579 = vsub.f32 0.0, %v511
        %v580 = vsub.f32 0.0, %v512
        %v581 = vsub.f32 0.0, %v513
        %v582 = vsub.f32 0.0, %v514
        %v583 = vsub.f32 0.0, %v515
        %v584 = vsub.f32 0.0, %v516
        %v585 = vsub.f32 0.0, %v517
        %v586 = vsub.f32 0.0, %v518
        %v587 = vsub.f32 0.0, %v519
        %v588 = vsub.f32 0.0, %v520
        %v589 = vsub.f32 0.0, %v521
        %v590 = vsub.f32 0.0, %v522
        %v591 = vsub.f32 0.0, %v523
        %v592 = vsub.f32 0.0, %v524
        %v593 = vsub.f32 0.0, %v525
        %v594 = vsub.f32 0.0, %v526
        %v595 = vsub.f32 0.0, %v527
        %v596 = vsub.f32 0.0, %v528
        %v597 = vsub.f32 0.0, %v529
        %v598 = vsub.f32 0.0, %v530
        %v599 = vsub.f32 0.0, %v531
        %v600 = vsub.f32 0.0, %v532
        %v601 = vsub.f32 0.0, %v533
        %v602 = vsub.f32 0.0, %v534
        %v603 = vsub.f32 0.0, %v535
        %v604 = vsub.f32 0.0, %v536
        %v605 = vsub.f32 0.0, %v537
        %v606 = vsub.f32 0.0, %v538
        %v607 = vsub.f32 0.0, %v539
        %v608 = vsub.f32 0.0, %v540
        %v609 = vsub.f32 0.0, %v541
        %v610 = vsub.f32 0.0, %v542
        %v611 = vsub.f32 0.0, %v543
        %v612 = vsub.f32 0.0, %v544
        %v613 = vsub.f32 0.0, %v545
        %v614 = vsub.f32 0.0, %v546
        %v615 = vsub.f32 0.0, %v547
        %v616 = vsub.f32 0.0, %v548
        %v617 = vsub.f32 0.0, %v549
        %v618 = vsub.f32 0.0, %v550
        %v619 = vsub.f32 0.0, %v551
        %v620 = vsub.f32 0.0, %v552
        %v621 = vsub.f32 0.0, %v553
        %v622 = vsub.f32 0.0, %v554
        %v623 = vsub.f32 0.0, %v555
        %v624 = vsub.f32 0.0, %v556
        %v625 = vsub.f32 0.0, %v557
        %v626 = vsub.f32 0.0, %v558
        %v627 = vsub.f32 0.0, %v559
        %v628 = vsub.f32 0.0, %v560
        %v629 = vsub.f32 0.0, %v561
        %v630 = vsub.f32 0.0, %v562
        %v631 = vsub.f32 0.0, %v563
        %v632 = vsub.f32 0.0, %v564
        %v633 = vsub.f32 0.0, %v565
        %v634 = vsub.f32 0.0, %v566
        %v635 = vsub.f32 0.0, %v567
        %v636 = vmul.f32 %v568, 1.442695
        %v637 = vpow.pop %v636
        %v638 = vmul.f32 %v569, 1.442695
        %v639 = vpow.pop %v638
        %v640 = vmul.f32 %v570, 1.442695
        %v641 = vpow.pop %v640
        %v642 = vmul.f32 %v571, 1.442695
        %v643 = vpow.pop %v642
        %v644 = vmul.f32 %v572, 1.442695
        %v645 = vpow.pop %v644
        %v646 = vmul.f32 %v573, 1.442695
        %v647 = vpow.pop %v646
        %v648 = vmul.f32 %v574, 1.442695
        %v649 = vpow.pop %v648
        %v650 = vmul.f32 %v575, 1.442695
        %v651 = vpow.pop %v650
        %v652 = vmul.f32 %v576, 1.442695
        %v653 = vpow.pop %v652
        %v654 = vmul.f32 %v577, 1.442695
        %v655 = vpow.pop %v654
        %v656 = vmul.f32 %v578, 1.442695
        %v657 = vpow.pop %v656
        %v658 = vmul.f32 %v579, 1.442695
        %v659 = vpow.pop %v658
        %v660 = vmul.f32 %v580, 1.442695
        %v661 = vpow.pop %v660
        %v662 = vmul.f32 %v581, 1.442695
        %v663 = vpow.pop %v662
        %v664 = vmul.f32 %v582, 1.442695
        %v665 = vpow.pop %v664
        %v666 = vmul.f32 %v583, 1.442695
        %v667 = vpow.pop %v666
        %v668 = vmul.f32 %v584, 1.442695
        %v669 = vpow.pop %v668
        %v670 = vmul.f32 %v585, 1.442695
        %v671 = vpow.pop %v670
        %v672 = vmul.f32 %v586, 1.442695
        %v673 = vpow.pop %v672
        %v674 = vmul.f32 %v587, 1.442695
        %v675 = vpow.pop %v674
        %v676 = vmul.f32 %v588, 1.442695
        %v677 = vpow.pop %v676
        %v678 = vmul.f32 %v589, 1.442695
        %v679 = vpow.pop %v678
        %v680 = vmul.f32 %v590, 1.442695
        %v681 = vpow.pop %v680
        %v682 = vmul.f32 %v591, 1.442695
        %v683 = vpow.pop %v682
        %v684 = vmul.f32 %v592, 1.442695
        %v685 = vpow.pop %v684
        %v686 = vmul.f32 %v593, 1.442695
        %v687 = vpow.pop %v686
        %v688 = vmul.f32 %v594, 1.442695
        %v689 = vpow.pop %v688
        %v690 = vmul.f32 %v595, 1.442695
        %v691 = vpow.pop %v690
        %v692 = vmul.f32 %v596, 1.442695
        %v693 = vpow.pop %v692
        %v694 = vmul.f32 %v597, 1.442695
        %v695 = vpow.pop %v694
        %v696 = vmul.f32 %v598, 1.442695
        %v697 = vpow.pop %v696
        %v698 = vmul.f32 %v599, 1.442695
        %v699 = vpow.pop %v698
        %v700 = vmul.f32 %v600, 1.442695
        %v701 = vpow.pop %v700
        %v702 = vmul.f32 %v601, 1.442695
        %v703 = vpow.pop %v702
        %v704 = vmul.f32 %v602, 1.442695
        %v705 = vpow.pop %v704
        %v706 = vmul.f32 %v603, 1.442695
        %v707 = vpow.pop %v706
        %v708 = vmul.f32 %v604, 1.442695
        %v709 = vpow.pop %v708
        %v710 = vmul.f32 %v605, 1.442695
        %v711 = vpow.pop %v710
        %v712 = vmul.f32 %v606, 1.442695
        %v713 = vpow.pop %v712
        %v714 = vmul.f32 %v607, 1.442695
        %v715 = vpow.pop %v714
        %v716 = vmul.f32 %v608, 1.442695
        %v717 = vpow.pop %v716
        %v718 = vmul.f32 %v609, 1.442695
        %v719 = vpow.pop %v718
        %v720 = vmul.f32 %v610, 1.442695
        %v721 = vpow.pop %v720
        %v722 = vmul.f32 %v611, 1.442695
        %v723 = vpow.pop %v722
        %v724 = vmul.f32 %v612, 1.442695
        %v725 = vpow.pop %v724
        %v726 = vmul.f32 %v613, 1.442695
        %v727 = vpow.pop %v726
        %v728 = vmul.f32 %v614, 1.442695
        %v729 = vpow.pop %v728
        %v730 = vmul.f32 %v615, 1.442695
        %v731 = vpow.pop %v730
        %v732 = vmul.f32 %v616, 1.442695
        %v733 = vpow.pop %v732
        %v734 = vmul.f32 %v617, 1.442695
        %v735 = vpow.pop %v734
        %v736 = vmul.f32 %v618, 1.442695
        %v737 = vpow.pop %v736
        %v738 = vmul.f32 %v619, 1.442695
        %v739 = vpow.pop %v738
        %v740 = vmul.f32 %v620, 1.442695
        %v741 = vpow.pop %v740
        %v742 = vmul.f32 %v621, 1.442695
        %v743 = vpow.pop %v742
        %v744 = vmul.f32 %v622, 1.442695
        %v745 = vpow.pop %v744
        %v746 = vmul.f32 %v623, 1.442695
        %v747 = vpow.pop %v746
        %v748 = vmul.f32 %v624, 1.442695
        %v749 = vpow.pop %v748
        %v750 = vmul.f32 %v625, 1.442695
        %v751 = vpow.pop %v750
        %v752 = vmul.f32 %v626, 1.442695
        %v753 = vpow.pop %v752
        %v754 = vmul.f32 %v627, 1.442695
        %v755 = vpow.pop %v754
        %v756 = vmul.f32 %v628, 1.442695
        %v757 = vpow.pop %v756
        %v758 = vmul.f32 %v629, 1.442695
        %v759 = vpow.pop %v758
        %v760 = vmul.f32 %v630, 1.442695
        %v761 = vpow.pop %v760
        %v762 = vmul.f32 %v631, 1.442695
        %v763 = vpow.pop %v762
        %v764 = vmul.f32 %v632, 1.442695
        %v765 = vpow.pop %v764
        %v766 = vmul.f32 %v633, 1.442695
        %v767 = vpow.pop %v766
        %v768 = vmul.f32 %v634, 1.442695
        %v769 = vpow.pop %v768
        %v770 = vmul.f32 %v635, 1.442695
        %v771 = vpow.pop %v770
        %v772 = vadd.f32 %v637, 1.0
        %v773 = vlog2.pop %v772
        %v774 = vmul.f32 %v773, 0.6931472
        %v775 = vmul.f32 -0.5, %v637
        %v776 = vadd.f32 %v775, 1.0
        %v777 = vmul.f32 %v776, %v637
        %v778 = vand.u32 2147483647, %v637
        %vm779 = vcmp.lt.f32.partialorder %v778, 0.0004427343
        %v780 = vsel %vm779, %v777, %v774
        %v781 = vadd.f32 %v639, 1.0
        %v782 = vlog2.pop %v781
        %v783 = vmul.f32 %v782, 0.6931472
        %v784 = vmul.f32 -0.5, %v639
        %v785 = vadd.f32 %v784, 1.0
        %v786 = vmul.f32 %v785, %v639
        %v787 = vand.u32 2147483647, %v639
        %vm788 = vcmp.lt.f32.partialorder %v787, 0.0004427343
        %v789 = vsel %vm788, %v786, %v783
        %v790 = vadd.f32 %v641, 1.0
        %v791 = vlog2.pop %v790
        %v792 = vmul.f32 %v791, 0.6931472
        %v793 = vmul.f32 -0.5, %v641
        %v794 = vadd.f32 %v793, 1.0
        %v795 = vmul.f32 %v794, %v641
        %v796 = vand.u32 2147483647, %v641
        %vm797 = vcmp.lt.f32.partialorder %v796, 0.0004427343
        %v798 = vsel %vm797, %v795, %v792
        %v799 = vadd.f32 %v643, 1.0
        %v800 = vlog2.pop %v799
        %v801 = vmul.f32 %v800, 0.6931472
        %v802 = vmul.f32 -0.5, %v643
        %v803 = vadd.f32 %v802, 1.0
        %v804 = vmul.f32 %v803, %v643
        %v805 = vand.u32 2147483647, %v643
        %vm806 = vcmp.lt.f32.partialorder %v805, 0.0004427343
        %v807 = vsel %vm806, %v804, %v801
        %v808 = vadd.f32 %v645, 1.0
        %v809 = vlog2.pop %v808
        %v810 = vmul.f32 %v809, 0.6931472
        %v811 = vmul.f32 -0.5, %v645
        %v812 = vadd.f32 %v811, 1.0
        %v813 = vmul.f32 %v812, %v645
        %v814 = vand.u32 2147483647, %v645
        %vm815 = vcmp.lt.f32.partialorder %v814, 0.0004427343
        %v816 = vsel %vm815, %v813, %v810
        %v817 = vadd.f32 %v647, 1.0
        %v818 = vlog2.pop %v817
        %v819 = vmul.f32 %v818, 0.6931472
        %v820 = vmul.f32 -0.5, %v647
        %v821 = vadd.f32 %v820, 1.0
        %v822 = vmul.f32 %v821, %v647
        %v823 = vand.u32 2147483647, %v647
        %vm824 = vcmp.lt.f32.partialorder %v823, 0.0004427343
        %v825 = vsel %vm824, %v822, %v819
        %v826 = vadd.f32 %v649, 1.0
        %v827 = vlog2.pop %v826
        %v828 = vmul.f32 %v827, 0.6931472
        %v829 = vmul.f32 -0.5, %v649
        %v830 = vadd.f32 %v829, 1.0
        %v831 = vmul.f32 %v830, %v649
        %v832 = vand.u32 2147483647, %v649
        %vm833 = vcmp.lt.f32.partialorder %v832, 0.0004427343
        %v834 = vsel %vm833, %v831, %v828
        %v835 = vadd.f32 %v651, 1.0
        %v836 = vlog2.pop %v835
        %v837 = vmul.f32 %v836, 0.6931472
        %v838 = vmul.f32 -0.5, %v651
        %v839 = vadd.f32 %v838, 1.0
        %v840 = vmul.f32 %v839, %v651
        %v841 = vand.u32 2147483647, %v651
        %vm842 = vcmp.lt.f32.partialorder %v841, 0.0004427343
        %v843 = vsel %vm842, %v840, %v837
        %v844 = vadd.f32 %v653, 1.0
        %v845 = vlog2.pop %v844
        %v846 = vmul.f32 %v845, 0.6931472
        %v847 = vmul.f32 -0.5, %v653
        %v848 = vadd.f32 %v847, 1.0
        %v849 = vmul.f32 %v848, %v653
        %v850 = vand.u32 2147483647, %v653
        %vm851 = vcmp.lt.f32.partialorder %v850, 0.0004427343
        %v852 = vsel %vm851, %v849, %v846
        %v853 = vadd.f32 %v655, 1.0
        %v854 = vlog2.pop %v853
        %v855 = vmul.f32 %v854, 0.6931472
        %v856 = vmul.f32 -0.5, %v655
        %v857 = vadd.f32 %v856, 1.0
        %v858 = vmul.f32 %v857, %v655
        %v859 = vand.u32 2147483647, %v655
        %vm860 = vcmp.lt.f32.partialorder %v859, 0.0004427343
        %v861 = vsel %vm860, %v858, %v855
        %v862 = vadd.f32 %v657, 1.0
        %v863 = vlog2.pop %v862
        %v864 = vmul.f32 %v863, 0.6931472
        %v865 = vmul.f32 -0.5, %v657
        %v866 = vadd.f32 %v865, 1.0
        %v867 = vmul.f32 %v866, %v657
        %v868 = vand.u32 2147483647, %v657
        %vm869 = vcmp.lt.f32.partialorder %v868, 0.0004427343
        %v870 = vsel %vm869, %v867, %v864
        %v871 = vadd.f32 %v659, 1.0
        %v872 = vlog2.pop %v871
        %v873 = vmul.f32 %v872, 0.6931472
        %v874 = vmul.f32 -0.5, %v659
        %v875 = vadd.f32 %v874, 1.0
        %v876 = vmul.f32 %v875, %v659
        %v877 = vand.u32 2147483647, %v659
        %vm878 = vcmp.lt.f32.partialorder %v877, 0.0004427343
        %v879 = vsel %vm878, %v876, %v873
        %v880 = vadd.f32 %v661, 1.0
        %v881 = vlog2.pop %v880
        %v882 = vmul.f32 %v881, 0.6931472
        %v883 = vmul.f32 -0.5, %v661
        %v884 = vadd.f32 %v883, 1.0
        %v885 = vmul.f32 %v884, %v661
        %v886 = vand.u32 2147483647, %v661
        %vm887 = vcmp.lt.f32.partialorder %v886, 0.0004427343
        %v888 = vsel %vm887, %v885, %v882
        %v889 = vadd.f32 %v663, 1.0
        %v890 = vlog2.pop %v889
        %v891 = vmul.f32 %v890, 0.6931472
        %v892 = vmul.f32 -0.5, %v663
        %v893 = vadd.f32 %v892, 1.0
        %v894 = vmul.f32 %v893, %v663
        %v895 = vand.u32 2147483647, %v663
        %vm896 = vcmp.lt.f32.partialorder %v895, 0.0004427343
        %v897 = vsel %vm896, %v894, %v891
        %v898 = vadd.f32 %v665, 1.0
        %v899 = vlog2.pop %v898
        %v900 = vmul.f32 %v899, 0.6931472
        %v901 = vmul.f32 -0.5, %v665
        %v902 = vadd.f32 %v901, 1.0
        %v903 = vmul.f32 %v902, %v665
        %v904 = vand.u32 2147483647, %v665
        %vm905 = vcmp.lt.f32.partialorder %v904, 0.0004427343
        %v906 = vsel %vm905, %v903, %v900
        %v907 = vadd.f32 %v667, 1.0
        %v908 = vlog2.pop %v907
        %v909 = vmul.f32 %v908, 0.6931472
        %v910 = vmul.f32 -0.5, %v667
        %v911 = vadd.f32 %v910, 1.0
        %v912 = vmul.f32 %v911, %v667
        %v913 = vand.u32 2147483647, %v667
        %vm914 = vcmp.lt.f32.partialorder %v913, 0.0004427343
        %v915 = vsel %vm914, %v912, %v909
        %v916 = vadd.f32 %v669, 1.0
        %v917 = vlog2.pop %v916
        %v918 = vmul.f32 %v917, 0.6931472
        %v919 = vmul.f32 -0.5, %v669
        %v920 = vadd.f32 %v919, 1.0
        %v921 = vmul.f32 %v920, %v669
        %v922 = vand.u32 2147483647, %v669
        %vm923 = vcmp.lt.f32.partialorder %v922, 0.0004427343
        %v924 = vsel %vm923, %v921, %v918
        %v925 = vadd.f32 %v671, 1.0
        %v926 = vlog2.pop %v925
        %v927 = vmul.f32 %v926, 0.6931472
        %v928 = vmul.f32 -0.5, %v671
        %v929 = vadd.f32 %v928, 1.0
        %v930 = vmul.f32 %v929, %v671
        %v931 = vand.u32 2147483647, %v671
        %vm932 = vcmp.lt.f32.partialorder %v931, 0.0004427343
        %v933 = vsel %vm932, %v930, %v927
        %v934 = vadd.f32 %v673, 1.0
        %v935 = vlog2.pop %v934
        %v936 = vmul.f32 %v935, 0.6931472
        %v937 = vmul.f32 -0.5, %v673
        %v938 = vadd.f32 %v937, 1.0
        %v939 = vmul.f32 %v938, %v673
        %v940 = vand.u32 2147483647, %v673
        %vm941 = vcmp.lt.f32.partialorder %v940, 0.0004427343
        %v942 = vsel %vm941, %v939, %v936
        %v943 = vadd.f32 %v675, 1.0
        %v944 = vlog2.pop %v943
        %v945 = vmul.f32 %v944, 0.6931472
        %v946 = vmul.f32 -0.5, %v675
        %v947 = vadd.f32 %v946, 1.0
        %v948 = vmul.f32 %v947, %v675
        %v949 = vand.u32 2147483647, %v675
        %vm950 = vcmp.lt.f32.partialorder %v949, 0.0004427343
        %v951 = vsel %vm950, %v948, %v945
        %v952 = vadd.f32 %v677, 1.0
        %v953 = vlog2.pop %v952
        %v954 = vmul.f32 %v953, 0.6931472
        %v955 = vmul.f32 -0.5, %v677
        %v956 = vadd.f32 %v955, 1.0
        %v957 = vmul.f32 %v956, %v677
        %v958 = vand.u32 2147483647, %v677
        %vm959 = vcmp.lt.f32.partialorder %v958, 0.0004427343
        %v960 = vsel %vm959, %v957, %v954
        %v961 = vadd.f32 %v679, 1.0
        %v962 = vlog2.pop %v961
        %v963 = vmul.f32 %v962, 0.6931472
        %v964 = vmul.f32 -0.5, %v679
        %v965 = vadd.f32 %v964, 1.0
        %v966 = vmul.f32 %v965, %v679
        %v967 = vand.u32 2147483647, %v679
        %vm968 = vcmp.lt.f32.partialorder %v967, 0.0004427343
        %v969 = vsel %vm968, %v966, %v963
        %v970 = vadd.f32 %v681, 1.0
        %v971 = vlog2.pop %v970
        %v972 = vmul.f32 %v971, 0.6931472
        %v973 = vmul.f32 -0.5, %v681
        %v974 = vadd.f32 %v973, 1.0
        %v975 = vmul.f32 %v974, %v681
        %v976 = vand.u32 2147483647, %v681
        %vm977 = vcmp.lt.f32.partialorder %v976, 0.0004427343
        %v978 = vsel %vm977, %v975, %v972
        %v979 = vadd.f32 %v683, 1.0
        %v980 = vlog2.pop %v979
        %v981 = vmul.f32 %v980, 0.6931472
        %v982 = vmul.f32 -0.5, %v683
        %v983 = vadd.f32 %v982, 1.0
        %v984 = vmul.f32 %v983, %v683
        %v985 = vand.u32 2147483647, %v683
        %vm986 = vcmp.lt.f32.partialorder %v985, 0.0004427343
        %v987 = vsel %vm986, %v984, %v981
        %v988 = vadd.f32 %v685, 1.0
        %v989 = vlog2.pop %v988
        %v990 = vmul.f32 %v989, 0.6931472
        %v991 = vmul.f32 -0.5, %v685
        %v992 = vadd.f32 %v991, 1.0
        %v993 = vmul.f32 %v992, %v685
        %v994 = vand.u32 2147483647, %v685
        %vm995 = vcmp.lt.f32.partialorder %v994, 0.0004427343
        %v996 = vsel %vm995, %v993, %v990
        %v997 = vadd.f32 %v687, 1.0
        %v998 = vlog2.pop %v997
        %v999 = vmul.f32 %v998, 0.6931472
        %v1000 = vmul.f32 -0.5, %v687
        %v1001 = vadd.f32 %v1000, 1.0
        %v1002 = vmul.f32 %v1001, %v687
        %v1003 = vand.u32 2147483647, %v687
        %vm1004 = vcmp.lt.f32.partialorder %v1003, 0.0004427343
        %v1005 = vsel %vm1004, %v1002, %v999
        %v1006 = vadd.f32 %v689, 1.0
        %v1007 = vlog2.pop %v1006
        %v1008 = vmul.f32 %v1007, 0.6931472
        %v1009 = vmul.f32 -0.5, %v689
        %v1010 = vadd.f32 %v1009, 1.0
        %v1011 = vmul.f32 %v1010, %v689
        %v1012 = vand.u32 2147483647, %v689
        %vm1013 = vcmp.lt.f32.partialorder %v1012, 0.0004427343
        %v1014 = vsel %vm1013, %v1011, %v1008
        %v1015 = vadd.f32 %v691, 1.0
        %v1016 = vlog2.pop %v1015
        %v1017 = vmul.f32 %v1016, 0.6931472
        %v1018 = vmul.f32 -0.5, %v691
        %v1019 = vadd.f32 %v1018, 1.0
        %v1020 = vmul.f32 %v1019, %v691
        %v1021 = vand.u32 2147483647, %v691
        %vm1022 = vcmp.lt.f32.partialorder %v1021, 0.0004427343
        %v1023 = vsel %vm1022, %v1020, %v1017
        %v1024 = vadd.f32 %v693, 1.0
        %v1025 = vlog2.pop %v1024
        %v1026 = vmul.f32 %v1025, 0.6931472
        %v1027 = vmul.f32 -0.5, %v693
        %v1028 = vadd.f32 %v1027, 1.0
        %v1029 = vmul.f32 %v1028, %v693
        %v1030 = vand.u32 2147483647, %v693
        %vm1031 = vcmp.lt.f32.partialorder %v1030, 0.0004427343
        %v1032 = vsel %vm1031, %v1029, %v1026
        %v1033 = vadd.f32 %v695, 1.0
        %v1034 = vlog2.pop %v1033
        %v1035 = vmul.f32 %v1034, 0.6931472
        %v1036 = vmul.f32 -0.5, %v695
        %v1037 = vadd.f32 %v1036, 1.0
        %v1038 = vmul.f32 %v1037, %v695
        %v1039 = vand.u32 2147483647, %v695
        %vm1040 = vcmp.lt.f32.partialorder %v1039, 0.0004427343
        %v1041 = vsel %vm1040, %v1038, %v1035
        %v1042 = vadd.f32 %v697, 1.0
        %v1043 = vlog2.pop %v1042
        %v1044 = vmul.f32 %v1043, 0.6931472
        %v1045 = vmul.f32 -0.5, %v697
        %v1046 = vadd.f32 %v1045, 1.0
        %v1047 = vmul.f32 %v1046, %v697
        %v1048 = vand.u32 2147483647, %v697
        %vm1049 = vcmp.lt.f32.partialorder %v1048, 0.0004427343
        %v1050 = vsel %vm1049, %v1047, %v1044
        %v1051 = vadd.f32 %v699, 1.0
        %v1052 = vlog2.pop %v1051
        %v1053 = vmul.f32 %v1052, 0.6931472
        %v1054 = vmul.f32 -0.5, %v699
        %v1055 = vadd.f32 %v1054, 1.0
        %v1056 = vmul.f32 %v1055, %v699
        %v1057 = vand.u32 2147483647, %v699
        %vm1058 = vcmp.lt.f32.partialorder %v1057, 0.0004427343
        %v1059 = vsel %vm1058, %v1056, %v1053
        %v1060 = vadd.f32 %v701, 1.0
        %v1061 = vlog2.pop %v1060
        %v1062 = vmul.f32 %v1061, 0.6931472
        %v1063 = vmul.f32 -0.5, %v701
        %v1064 = vadd.f32 %v1063, 1.0
        %v1065 = vmul.f32 %v1064, %v701
        %v1066 = vand.u32 2147483647, %v701
        %vm1067 = vcmp.lt.f32.partialorder %v1066, 0.0004427343
        %v1068 = vsel %vm1067, %v1065, %v1062
        %v1069 = vadd.f32 %v703, 1.0
        %v1070 = vlog2.pop %v1069
        %v1071 = vmul.f32 %v1070, 0.6931472
        %v1072 = vmul.f32 -0.5, %v703
        %v1073 = vadd.f32 %v1072, 1.0
        %v1074 = vmul.f32 %v1073, %v703
        %v1075 = vand.u32 2147483647, %v703
        %vm1076 = vcmp.lt.f32.partialorder %v1075, 0.0004427343
        %v1077 = vsel %vm1076, %v1074, %v1071
        %v1078 = vadd.f32 %v705, 1.0
        %v1079 = vlog2.pop %v1078
        %v1080 = vmul.f32 %v1079, 0.6931472
        %v1081 = vmul.f32 -0.5, %v705
        %v1082 = vadd.f32 %v1081, 1.0
        %v1083 = vmul.f32 %v1082, %v705
        %v1084 = vand.u32 2147483647, %v705
        %vm1085 = vcmp.lt.f32.partialorder %v1084, 0.0004427343
        %v1086 = vsel %vm1085, %v1083, %v1080
        %v1087 = vadd.f32 %v707, 1.0
        %v1088 = vlog2.pop %v1087
        %v1089 = vmul.f32 %v1088, 0.6931472
        %v1090 = vmul.f32 -0.5, %v707
        %v1091 = vadd.f32 %v1090, 1.0
        %v1092 = vmul.f32 %v1091, %v707
        %v1093 = vand.u32 2147483647, %v707
        %vm1094 = vcmp.lt.f32.partialorder %v1093, 0.0004427343
        %v1095 = vsel %vm1094, %v1092, %v1089
        %v1096 = vadd.f32 %v709, 1.0
        %v1097 = vlog2.pop %v1096
        %v1098 = vmul.f32 %v1097, 0.6931472
        %v1099 = vmul.f32 -0.5, %v709
        %v1100 = vadd.f32 %v1099, 1.0
        %v1101 = vmul.f32 %v1100, %v709
        %v1102 = vand.u32 2147483647, %v709
        %vm1103 = vcmp.lt.f32.partialorder %v1102, 0.0004427343
        %v1104 = vsel %vm1103, %v1101, %v1098
        %v1105 = vadd.f32 %v711, 1.0
        %v1106 = vlog2.pop %v1105
        %v1107 = vmul.f32 %v1106, 0.6931472
        %v1108 = vmul.f32 -0.5, %v711
        %v1109 = vadd.f32 %v1108, 1.0
        %v1110 = vmul.f32 %v1109, %v711
        %v1111 = vand.u32 2147483647, %v711
        %vm1112 = vcmp.lt.f32.partialorder %v1111, 0.0004427343
        %v1113 = vsel %vm1112, %v1110, %v1107
        %v1114 = vadd.f32 %v713, 1.0
        %v1115 = vlog2.pop %v1114
        %v1116 = vmul.f32 %v1115, 0.6931472
        %v1117 = vmul.f32 -0.5, %v713
        %v1118 = vadd.f32 %v1117, 1.0
        %v1119 = vmul.f32 %v1118, %v713
        %v1120 = vand.u32 2147483647, %v713
        %vm1121 = vcmp.lt.f32.partialorder %v1120, 0.0004427343
        %v1122 = vsel %vm1121, %v1119, %v1116
        %v1123 = vadd.f32 %v715, 1.0
        %v1124 = vlog2.pop %v1123
        %v1125 = vmul.f32 %v1124, 0.6931472
        %v1126 = vmul.f32 -0.5, %v715
        %v1127 = vadd.f32 %v1126, 1.0
        %v1128 = vmul.f32 %v1127, %v715
        %v1129 = vand.u32 2147483647, %v715
        %vm1130 = vcmp.lt.f32.partialorder %v1129, 0.0004427343
        %v1131 = vsel %vm1130, %v1128, %v1125
        %v1132 = vadd.f32 %v717, 1.0
        %v1133 = vlog2.pop %v1132
        %v1134 = vmul.f32 %v1133, 0.6931472
        %v1135 = vmul.f32 -0.5, %v717
        %v1136 = vadd.f32 %v1135, 1.0
        %v1137 = vmul.f32 %v1136, %v717
        %v1138 = vand.u32 2147483647, %v717
        %vm1139 = vcmp.lt.f32.partialorder %v1138, 0.0004427343
        %v1140 = vsel %vm1139, %v1137, %v1134
        %v1141 = vadd.f32 %v719, 1.0
        %v1142 = vlog2.pop %v1141
        %v1143 = vmul.f32 %v1142, 0.6931472
        %v1144 = vmul.f32 -0.5, %v719
        %v1145 = vadd.f32 %v1144, 1.0
        %v1146 = vmul.f32 %v1145, %v719
        %v1147 = vand.u32 2147483647, %v719
        %vm1148 = vcmp.lt.f32.partialorder %v1147, 0.0004427343
        %v1149 = vsel %vm1148, %v1146, %v1143
        %v1150 = vadd.f32 %v721, 1.0
        %v1151 = vlog2.pop %v1150
        %v1152 = vmul.f32 %v1151, 0.6931472
        %v1153 = vmul.f32 -0.5, %v721
        %v1154 = vadd.f32 %v1153, 1.0
        %v1155 = vmul.f32 %v1154, %v721
        %v1156 = vand.u32 2147483647, %v721
        %vm1157 = vcmp.lt.f32.partialorder %v1156, 0.0004427343
        %v1158 = vsel %vm1157, %v1155, %v1152
        %v1159 = vadd.f32 %v723, 1.0
        %v1160 = vlog2.pop %v1159
        %v1161 = vmul.f32 %v1160, 0.6931472
        %v1162 = vmul.f32 -0.5, %v723
        %v1163 = vadd.f32 %v1162, 1.0
        %v1164 = vmul.f32 %v1163, %v723
        %v1165 = vand.u32 2147483647, %v723
        %vm1166 = vcmp.lt.f32.partialorder %v1165, 0.0004427343
        %v1167 = vsel %vm1166, %v1164, %v1161
        %v1168 = vadd.f32 %v725, 1.0
        %v1169 = vlog2.pop %v1168
        %v1170 = vmul.f32 %v1169, 0.6931472
        %v1171 = vmul.f32 -0.5, %v725
        %v1172 = vadd.f32 %v1171, 1.0
        %v1173 = vmul.f32 %v1172, %v725
        %v1174 = vand.u32 2147483647, %v725
        %vm1175 = vcmp.lt.f32.partialorder %v1174, 0.0004427343
        %v1176 = vsel %vm1175, %v1173, %v1170
        %v1177 = vadd.f32 %v727, 1.0
        %v1178 = vlog2.pop %v1177
        %v1179 = vmul.f32 %v1178, 0.6931472
        %v1180 = vmul.f32 -0.5, %v727
        %v1181 = vadd.f32 %v1180, 1.0
        %v1182 = vmul.f32 %v1181, %v727
        %v1183 = vand.u32 2147483647, %v727
        %vm1184 = vcmp.lt.f32.partialorder %v1183, 0.0004427343
        %v1185 = vsel %vm1184, %v1182, %v1179
        %v1186 = vadd.f32 %v729, 1.0
        %v1187 = vlog2.pop %v1186
        %v1188 = vmul.f32 %v1187, 0.6931472
        %v1189 = vmul.f32 -0.5, %v729
        %v1190 = vadd.f32 %v1189, 1.0
        %v1191 = vmul.f32 %v1190, %v729
        %v1192 = vand.u32 2147483647, %v729
        %vm1193 = vcmp.lt.f32.partialorder %v1192, 0.0004427343
        %v1194 = vsel %vm1193, %v1191, %v1188
        %v1195 = vadd.f32 %v731, 1.0
        %v1196 = vlog2.pop %v1195
        %v1197 = vmul.f32 %v1196, 0.6931472
        %v1198 = vmul.f32 -0.5, %v731
        %v1199 = vadd.f32 %v1198, 1.0
        %v1200 = vmul.f32 %v1199, %v731
        %v1201 = vand.u32 2147483647, %v731
        %vm1202 = vcmp.lt.f32.partialorder %v1201, 0.0004427343
        %v1203 = vsel %vm1202, %v1200, %v1197
        %v1204 = vadd.f32 %v733, 1.0
        %v1205 = vlog2.pop %v1204
        %v1206 = vmul.f32 %v1205, 0.6931472
        %v1207 = vmul.f32 -0.5, %v733
        %v1208 = vadd.f32 %v1207, 1.0
        %v1209 = vmul.f32 %v1208, %v733
        %v1210 = vand.u32 2147483647, %v733
        %vm1211 = vcmp.lt.f32.partialorder %v1210, 0.0004427343
        %v1212 = vsel %vm1211, %v1209, %v1206
        %v1213 = vadd.f32 %v735, 1.0
        %v1214 = vlog2.pop %v1213
        %v1215 = vmul.f32 %v1214, 0.6931472
        %v1216 = vmul.f32 -0.5, %v735
        %v1217 = vadd.f32 %v1216, 1.0
        %v1218 = vmul.f32 %v1217, %v735
        %v1219 = vand.u32 2147483647, %v735
        %vm1220 = vcmp.lt.f32.partialorder %v1219, 0.0004427343
        %v1221 = vsel %vm1220, %v1218, %v1215
        %v1222 = vadd.f32 %v737, 1.0
        %v1223 = vlog2.pop %v1222
        %v1224 = vmul.f32 %v1223, 0.6931472
        %v1225 = vmul.f32 -0.5, %v737
        %v1226 = vadd.f32 %v1225, 1.0
        %v1227 = vmul.f32 %v1226, %v737
        %v1228 = vand.u32 2147483647, %v737
        %vm1229 = vcmp.lt.f32.partialorder %v1228, 0.0004427343
        %v1230 = vsel %vm1229, %v1227, %v1224
        %v1231 = vadd.f32 %v739, 1.0
        %v1232 = vlog2.pop %v1231
        %v1233 = vmul.f32 %v1232, 0.6931472
        %v1234 = vmul.f32 -0.5, %v739
        %v1235 = vadd.f32 %v1234, 1.0
        %v1236 = vmul.f32 %v1235, %v739
        %v1237 = vand.u32 2147483647, %v739
        %vm1238 = vcmp.lt.f32.partialorder %v1237, 0.0004427343
        %v1239 = vsel %vm1238, %v1236, %v1233
        %v1240 = vadd.f32 %v741, 1.0
        %v1241 = vlog2.pop %v1240
        %v1242 = vmul.f32 %v1241, 0.6931472
        %v1243 = vmul.f32 -0.5, %v741
        %v1244 = vadd.f32 %v1243, 1.0
        %v1245 = vmul.f32 %v1244, %v741
        %v1246 = vand.u32 2147483647, %v741
        %vm1247 = vcmp.lt.f32.partialorder %v1246, 0.0004427343
        %v1248 = vsel %vm1247, %v1245, %v1242
        %v1249 = vadd.f32 %v743, 1.0
        %v1250 = vlog2.pop %v1249
        %v1251 = vmul.f32 %v1250, 0.6931472
        %v1252 = vmul.f32 -0.5, %v743
        %v1253 = vadd.f32 %v1252, 1.0
        %v1254 = vmul.f32 %v1253, %v743
        %v1255 = vand.u32 2147483647, %v743
        %vm1256 = vcmp.lt.f32.partialorder %v1255, 0.0004427343
        %v1257 = vsel %vm1256, %v1254, %v1251
        %v1258 = vadd.f32 %v745, 1.0
        %v1259 = vlog2.pop %v1258
        %v1260 = vmul.f32 %v1259, 0.6931472
        %v1261 = vmul.f32 -0.5, %v745
        %v1262 = vadd.f32 %v1261, 1.0
        %v1263 = vmul.f32 %v1262, %v745
        %v1264 = vand.u32 2147483647, %v745
        %vm1265 = vcmp.lt.f32.partialorder %v1264, 0.0004427343
        %v1266 = vsel %vm1265, %v1263, %v1260
        %v1267 = vadd.f32 %v747, 1.0
        %v1268 = vlog2.pop %v1267
        %v1269 = vmul.f32 %v1268, 0.6931472
        %v1270 = vmul.f32 -0.5, %v747
        %v1271 = vadd.f32 %v1270, 1.0
        %v1272 = vmul.f32 %v1271, %v747
        %v1273 = vand.u32 2147483647, %v747
        %vm1274 = vcmp.lt.f32.partialorder %v1273, 0.0004427343
        %v1275 = vsel %vm1274, %v1272, %v1269
        %v1276 = vadd.f32 %v749, 1.0
        %v1277 = vlog2.pop %v1276
        %v1278 = vmul.f32 %v1277, 0.6931472
        %v1279 = vmul.f32 -0.5, %v749
        %v1280 = vadd.f32 %v1279, 1.0
        %v1281 = vmul.f32 %v1280, %v749
        %v1282 = vand.u32 2147483647, %v749
        %vm1283 = vcmp.lt.f32.partialorder %v1282, 0.0004427343
        %v1284 = vsel %vm1283, %v1281, %v1278
        %v1285 = vadd.f32 %v751, 1.0
        %v1286 = vlog2.pop %v1285
        %v1287 = vmul.f32 %v1286, 0.6931472
        %v1288 = vmul.f32 -0.5, %v751
        %v1289 = vadd.f32 %v1288, 1.0
        %v1290 = vmul.f32 %v1289, %v751
        %v1291 = vand.u32 2147483647, %v751
        %vm1292 = vcmp.lt.f32.partialorder %v1291, 0.0004427343
        %v1293 = vsel %vm1292, %v1290, %v1287
        %v1294 = vadd.f32 %v753, 1.0
        %v1295 = vlog2.pop %v1294
        %v1296 = vmul.f32 %v1295, 0.6931472
        %v1297 = vmul.f32 -0.5, %v753
        %v1298 = vadd.f32 %v1297, 1.0
        %v1299 = vmul.f32 %v1298, %v753
        %v1300 = vand.u32 2147483647, %v753
        %vm1301 = vcmp.lt.f32.partialorder %v1300, 0.0004427343
        %v1302 = vsel %vm1301, %v1299, %v1296
        %v1303 = vadd.f32 %v755, 1.0
        %v1304 = vlog2.pop %v1303
        %v1305 = vmul.f32 %v1304, 0.6931472
        %v1306 = vmul.f32 -0.5, %v755
        %v1307 = vadd.f32 %v1306, 1.0
        %v1308 = vmul.f32 %v1307, %v755
        %v1309 = vand.u32 2147483647, %v755
        %vm1310 = vcmp.lt.f32.partialorder %v1309, 0.0004427343
        %v1311 = vsel %vm1310, %v1308, %v1305
        %v1312 = vadd.f32 %v757, 1.0
        %v1313 = vlog2.pop %v1312
        %v1314 = vmul.f32 %v1313, 0.6931472
        %v1315 = vmul.f32 -0.5, %v757
        %v1316 = vadd.f32 %v1315, 1.0
        %v1317 = vmul.f32 %v1316, %v757
        %v1318 = vand.u32 2147483647, %v757
        %vm1319 = vcmp.lt.f32.partialorder %v1318, 0.0004427343
        %v1320 = vsel %vm1319, %v1317, %v1314
        %v1321 = vadd.f32 %v759, 1.0
        %v1322 = vlog2.pop %v1321
        %v1323 = vmul.f32 %v1322, 0.6931472
        %v1324 = vmul.f32 -0.5, %v759
        %v1325 = vadd.f32 %v1324, 1.0
        %v1326 = vmul.f32 %v1325, %v759
        %v1327 = vand.u32 2147483647, %v759
        %vm1328 = vcmp.lt.f32.partialorder %v1327, 0.0004427343
        %v1329 = vsel %vm1328, %v1326, %v1323
        %v1330 = vadd.f32 %v761, 1.0
        %v1331 = vlog2.pop %v1330
        %v1332 = vmul.f32 %v1331, 0.6931472
        %v1333 = vmul.f32 -0.5, %v761
        %v1334 = vadd.f32 %v1333, 1.0
        %v1335 = vmul.f32 %v1334, %v761
        %v1336 = vand.u32 2147483647, %v761
        %vm1337 = vcmp.lt.f32.partialorder %v1336, 0.0004427343
        %v1338 = vsel %vm1337, %v1335, %v1332
        %v1339 = vadd.f32 %v763, 1.0
        %v1340 = vlog2.pop %v1339
        %v1341 = vmul.f32 %v1340, 0.6931472
        %v1342 = vmul.f32 -0.5, %v763
        %v1343 = vadd.f32 %v1342, 1.0
        %v1344 = vmul.f32 %v1343, %v763
        %v1345 = vand.u32 2147483647, %v763
        %vm1346 = vcmp.lt.f32.partialorder %v1345, 0.0004427343
        %v1347 = vsel %vm1346, %v1344, %v1341
        %v1348 = vadd.f32 %v765, 1.0
        %v1349 = vlog2.pop %v1348
        %v1350 = vmul.f32 %v1349, 0.6931472
        %v1351 = vmul.f32 -0.5, %v765
        %v1352 = vadd.f32 %v1351, 1.0
        %v1353 = vmul.f32 %v1352, %v765
        %v1354 = vand.u32 2147483647, %v765
        %vm1355 = vcmp.lt.f32.partialorder %v1354, 0.0004427343
        %v1356 = vsel %vm1355, %v1353, %v1350
        %v1357 = vadd.f32 %v767, 1.0
        %v1358 = vlog2.pop %v1357
        %v1359 = vmul.f32 %v1358, 0.6931472
        %v1360 = vmul.f32 -0.5, %v767
        %v1361 = vadd.f32 %v1360, 1.0
        %v1362 = vmul.f32 %v1361, %v767
        %v1363 = vand.u32 2147483647, %v767
        %vm1364 = vcmp.lt.f32.partialorder %v1363, 0.0004427343
        %v1365 = vsel %vm1364, %v1362, %v1359
        %v1366 = vadd.f32 %v769, 1.0
        %v1367 = vlog2.pop %v1366
        %v1368 = vmul.f32 %v1367, 0.6931472
        %v1369 = vmul.f32 -0.5, %v769
        %v1370 = vadd.f32 %v1369, 1.0
        %v1371 = vmul.f32 %v1370, %v769
        %v1372 = vand.u32 2147483647, %v769
        %vm1373 = vcmp.lt.f32.partialorder %v1372, 0.0004427343
        %v1374 = vsel %vm1373, %v1371, %v1368
        %v1375 = vadd.f32 %v771, 1.0
        %v1376 = vlog2.pop %v1375
        %v1377 = vmul.f32 %v1376, 0.6931472
        %v1378 = vmul.f32 -0.5, %v771
        %v1379 = vadd.f32 %v1378, 1.0
        %v1380 = vmul.f32 %v1379, %v771
        %v1381 = vand.u32 2147483647, %v771
        %vm1382 = vcmp.lt.f32.partialorder %v1381, 0.0004427343
        %v1383 = vsel %vm1382, %v1380, %v1377
        %v1384 = vadd.f32 %v432, %v780
        %v1385 = vadd.f32 %v433, %v789
        %v1386 = vadd.f32 %v434, %v798
        %v1387 = vadd.f32 %v435, %v807
        %v1388 = vadd.f32 %v436, %v816
        %v1389 = vadd.f32 %v437, %v825
        %v1390 = vadd.f32 %v438, %v834
        %v1391 = vadd.f32 %v439, %v843
        %v1392 = vadd.f32 %v440, %v852
        %v1393 = vadd.f32 %v441, %v861
        %v1394 = vadd.f32 %v442, %v870
        %v1395 = vadd.f32 %v443, %v879
        %v1396 = vadd.f32 %v444, %v888
        %v1397 = vadd.f32 %v445, %v897
        %v1398 = vadd.f32 %v446, %v906
        %v1399 = vadd.f32 %v447, %v915
        %v1400 = vadd.f32 %v448, %v924
        %v1401 = vadd.f32 %v449, %v933
        %v1402 = vadd.f32 %v450, %v942
        %v1403 = vadd.f32 %v451, %v951
        %v1404 = vadd.f32 %v452, %v960
        %v1405 = vadd.f32 %v453, %v969
        %v1406 = vadd.f32 %v454, %v978
        %v1407 = vadd.f32 %v455, %v987
        %v1408 = vadd.f32 %v456, %v996
        %v1409 = vadd.f32 %v457, %v1005
        %v1410 = vadd.f32 %v458, %v1014
        %v1411 = vadd.f32 %v459, %v1023
        %v1412 = vadd.f32 %v460, %v1032
        %v1413 = vadd.f32 %v461, %v1041
        %v1414 = vadd.f32 %v462, %v1050
        %v1415 = vadd.f32 %v463, %v1059
        %v1416 = vadd.f32 %v464, %v1068
        %v1417 = vadd.f32 %v465, %v1077
        %v1418 = vadd.f32 %v466, %v1086
        %v1419 = vadd.f32 %v467, %v1095
        %v1420 = vadd.f32 %v468, %v1104
        %v1421 = vadd.f32 %v469, %v1113
        %v1422 = vadd.f32 %v470, %v1122
        %v1423 = vadd.f32 %v471, %v1131
        %v1424 = vadd.f32 %v472, %v1140
        %v1425 = vadd.f32 %v473, %v1149
        %v1426 = vadd.f32 %v474, %v1158
        %v1427 = vadd.f32 %v475, %v1167
        %v1428 = vadd.f32 %v476, %v1176
        %v1429 = vadd.f32 %v477, %v1185
        %v1430 = vadd.f32 %v478, %v1194
        %v1431 = vadd.f32 %v479, %v1203
        %v1432 = vadd.f32 %v480, %v1212
        %v1433 = vadd.f32 %v481, %v1221
        %v1434 = vadd.f32 %v482, %v1230
        %v1435 = vadd.f32 %v483, %v1239
        %v1436 = vadd.f32 %v484, %v1248
        %v1437 = vadd.f32 %v485, %v1257
        %v1438 = vadd.f32 %v486, %v1266
        %v1439 = vadd.f32 %v487, %v1275
        %v1440 = vadd.f32 %v488, %v1284
        %v1441 = vadd.f32 %v489, %v1293
        %v1442 = vadd.f32 %v490, %v1302
        %v1443 = vadd.f32 %v491, %v1311
        %v1444 = vadd.f32 %v492, %v1320
        %v1445 = vadd.f32 %v493, %v1329
        %v1446 = vadd.f32 %v494, %v1338
        %v1447 = vadd.f32 %v495, %v1347
        %v1448 = vadd.f32 %v496, %v1356
        %v1449 = vadd.f32 %v497, %v1365
        %v1450 = vadd.f32 %v498, %v1374
        %v1451 = vadd.f32 %v499, %v1383
        %v1452 = vmul.f32 %v1384, %v1384
        %v1453 = vmul.f32 %v1385, %v1385
        %v1454 = vmul.f32 %v1386, %v1386
        %v1455 = vmul.f32 %v1387, %v1387
        %v1456 = vmul.f32 %v1388, %v1388
        %v1457 = vmul.f32 %v1389, %v1389
        %v1458 = vmul.f32 %v1390, %v1390
        %v1459 = vmul.f32 %v1391, %v1391
        %v1460 = vmul.f32 %v1392, %v1392
        %v1461 = vmul.f32 %v1393, %v1393
        %v1462 = vmul.f32 %v1394, %v1394
        %v1463 = vmul.f32 %v1395, %v1395
        %v1464 = vmul.f32 %v1396, %v1396
        %v1465 = vmul.f32 %v1397, %v1397
        %v1466 = vmul.f32 %v1398, %v1398
        %v1467 = vmul.f32 %v1399, %v1399
        %v1468 = vmul.f32 %v1400, %v1400
        %v1469 = vmul.f32 %v1401, %v1401
        %v1470 = vmul.f32 %v1402, %v1402
        %v1471 = vmul.f32 %v1403, %v1403
        %v1472 = vmul.f32 %v1404, %v1404
        %v1473 = vmul.f32 %v1405, %v1405
        %v1474 = vmul.f32 %v1406, %v1406
        %v1475 = vmul.f32 %v1407, %v1407
        %v1476 = vmul.f32 %v1408, %v1408
        %v1477 = vmul.f32 %v1409, %v1409
        %v1478 = vmul.f32 %v1410, %v1410
        %v1479 = vmul.f32 %v1411, %v1411
        %v1480 = vmul.f32 %v1412, %v1412
        %v1481 = vmul.f32 %v1413, %v1413
        %v1482 = vmul.f32 %v1414, %v1414
        %v1483 = vmul.f32 %v1415, %v1415
        %v1484 = vmul.f32 %v1416, %v1416
        %v1485 = vmul.f32 %v1417, %v1417
        %v1486 = vmul.f32 %v1418, %v1418
        %v1487 = vmul.f32 %v1419, %v1419
        %v1488 = vmul.f32 %v1420, %v1420
        %v1489 = vmul.f32 %v1421, %v1421
        %v1490 = vmul.f32 %v1422, %v1422
        %v1491 = vmul.f32 %v1423, %v1423
        %v1492 = vmul.f32 %v1424, %v1424
        %v1493 = vmul.f32 %v1425, %v1425
        %v1494 = vmul.f32 %v1426, %v1426
        %v1495 = vmul.f32 %v1427, %v1427
        %v1496 = vmul.f32 %v1428, %v1428
        %v1497 = vmul.f32 %v1429, %v1429
        %v1498 = vmul.f32 %v1430, %v1430
        %v1499 = vmul.f32 %v1431, %v1431
        %v1500 = vmul.f32 %v1432, %v1432
        %v1501 = vmul.f32 %v1433, %v1433
        %v1502 = vmul.f32 %v1434, %v1434
        %v1503 = vmul.f32 %v1435, %v1435
        %v1504 = vmul.f32 %v1436, %v1436
        %v1505 = vmul.f32 %v1437, %v1437
        %v1506 = vmul.f32 %v1438, %v1438
        %v1507 = vmul.f32 %v1439, %v1439
        %v1508 = vmul.f32 %v1440, %v1440
        %v1509 = vmul.f32 %v1441, %v1441
        %v1510 = vmul.f32 %v1442, %v1442
        %v1511 = vmul.f32 %v1443, %v1443
        %v1512 = vmul.f32 %v1444, %v1444
        %v1513 = vmul.f32 %v1445, %v1445
        %v1514 = vmul.f32 %v1446, %v1446
        %v1515 = vmul.f32 %v1447, %v1447
        %v1516 = vmul.f32 %v1448, %v1448
        %v1517 = vmul.f32 %v1449, %v1449
        %v1518 = vmul.f32 %v1450, %v1450
        %v1519 = vmul.f32 %v1451, %v1451
        %v1520 = vmul.f32 %v296, %v296
        %v1521 = vmul.f32 %v297, %v297
        %v1522 = vmul.f32 %v298, %v298
        %v1523 = vmul.f32 %v299, %v299
        %v1524 = vmul.f32 %v300, %v300
        %v1525 = vmul.f32 %v301, %v301
        %v1526 = vmul.f32 %v302, %v302
        %v1527 = vmul.f32 %v303, %v303
        %v1528 = vmul.f32 %v304, %v304
        %v1529 = vmul.f32 %v305, %v305
        %v1530 = vmul.f32 %v306, %v306
        %v1531 = vmul.f32 %v307, %v307
        %v1532 = vmul.f32 %v308, %v308
        %v1533 = vmul.f32 %v309, %v309
        %v1534 = vmul.f32 %v310, %v310
        %v1535 = vmul.f32 %v311, %v311
        %v1536 = vmul.f32 %v312, %v312
        %v1537 = vmul.f32 %v313, %v313
        %v1538 = vmul.f32 %v314, %v314
        %v1539 = vmul.f32 %v315, %v315
        %v1540 = vmul.f32 %v316, %v316
        %v1541 = vmul.f32 %v317, %v317
        %v1542 = vmul.f32 %v318, %v318
        %v1543 = vmul.f32 %v319, %v319
        %v1544 = vmul.f32 %v320, %v320
        %v1545 = vmul.f32 %v321, %v321
        %v1546 = vmul.f32 %v322, %v322
        %v1547 = vmul.f32 %v323, %v323
        %v1548 = vmul.f32 %v324, %v324
        %v1549 = vmul.f32 %v325, %v325
        %v1550 = vmul.f32 %v326, %v326
        %v1551 = vmul.f32 %v327, %v327
        %v1552 = vmul.f32 %v328, %v328
        %v1553 = vmul.f32 %v329, %v329
        %v1554 = vmul.f32 %v330, %v330
        %v1555 = vmul.f32 %v331, %v331
        %v1556 = vmul.f32 %v332, %v332
        %v1557 = vmul.f32 %v333, %v333
        %v1558 = vmul.f32 %v334, %v334
        %v1559 = vmul.f32 %v335, %v335
        %v1560 = vmul.f32 %v336, %v336
        %v1561 = vmul.f32 %v337, %v337
        %v1562 = vmul.f32 %v338, %v338
        %v1563 = vmul.f32 %v339, %v339
        %v1564 = vmul.f32 %v340, %v340
        %v1565 = vmul.f32 %v341, %v341
        %v1566 = vmul.f32 %v342, %v342
        %v1567 = vmul.f32 %v343, %v343
        %v1568 = vmul.f32 %v344, %v344
        %v1569 = vmul.f32 %v345, %v345
        %v1570 = vmul.f32 %v346, %v346
        %v1571 = vmul.f32 %v347, %v347
        %v1572 = vmul.f32 %v348, %v348
        %v1573 = vmul.f32 %v349, %v349
        %v1574 = vmul.f32 %v350, %v350
        %v1575 = vmul.f32 %v351, %v351
        %v1576 = vmul.f32 %v352, %v352
        %v1577 = vmul.f32 %v353, %v353
        %v1578 = vmul.f32 %v354, %v354
        %v1579 = vmul.f32 %v355, %v355
        %v1580 = vmul.f32 %v356, %v356
        %v1581 = vmul.f32 %v357, %v357
        %v1582 = vmul.f32 %v358, %v358
        %v1583 = vmul.f32 %v359, %v359
        %v1584 = vmul.f32 %v360, %v360
        %v1585 = vmul.f32 %v361, %v361
        %v1586 = vmul.f32 %v362, %v362
        %v1587 = vmul.f32 %v363, %v363
        %v1588 = vadd.f32 %v1452, %v1520
        %v1589 = vadd.f32 %v1453, %v1521
        %v1590 = vadd.f32 %v1454, %v1522
        %v1591 = vadd.f32 %v1455, %v1523
        %v1592 = vadd.f32 %v1456, %v1524
        %v1593 = vadd.f32 %v1457, %v1525
        %v1594 = vadd.f32 %v1458, %v1526
        %v1595 = vadd.f32 %v1459, %v1527
        %v1596 = vadd.f32 %v1460, %v1528
        %v1597 = vadd.f32 %v1461, %v1529
        %v1598 = vadd.f32 %v1462, %v1530
        %v1599 = vadd.f32 %v1463, %v1531
        %v1600 = vadd.f32 %v1464, %v1532
        %v1601 = vadd.f32 %v1465, %v1533
        %v1602 = vadd.f32 %v1466, %v1534
        %v1603 = vadd.f32 %v1467, %v1535
        %v1604 = vadd.f32 %v1468, %v1536
        %v1605 = vadd.f32 %v1469, %v1537
        %v1606 = vadd.f32 %v1470, %v1538
        %v1607 = vadd.f32 %v1471, %v1539
        %v1608 = vadd.f32 %v1472, %v1540
        %v1609 = vadd.f32 %v1473, %v1541
        %v1610 = vadd.f32 %v1474, %v1542
        %v1611 = vadd.f32 %v1475, %v1543
        %v1612 = vadd.f32 %v1476, %v1544
        %v1613 = vadd.f32 %v1477, %v1545
        %v1614 = vadd.f32 %v1478, %v1546
        %v1615 = vadd.f32 %v1479, %v1547
        %v1616 = vadd.f32 %v1480, %v1548
        %v1617 = vadd.f32 %v1481, %v1549
        %v1618 = vadd.f32 %v1482, %v1550
        %v1619 = vadd.f32 %v1483, %v1551
        %v1620 = vadd.f32 %v1484, %v1552
        %v1621 = vadd.f32 %v1485, %v1553
        %v1622 = vadd.f32 %v1486, %v1554
        %v1623 = vadd.f32 %v1487, %v1555
        %v1624 = vadd.f32 %v1488, %v1556
        %v1625 = vadd.f32 %v1489, %v1557
        %v1626 = vadd.f32 %v1490, %v1558
        %v1627 = vadd.f32 %v1491, %v1559
        %v1628 = vadd.f32 %v1492, %v1560
        %v1629 = vadd.f32 %v1493, %v1561
        %v1630 = vadd.f32 %v1494, %v1562
        %v1631 = vadd.f32 %v1495, %v1563
        %v1632 = vadd.f32 %v1496, %v1564
        %v1633 = vadd.f32 %v1497, %v1565
        %v1634 = vadd.f32 %v1498, %v1566
        %v1635 = vadd.f32 %v1499, %v1567
        %v1636 = vadd.f32 %v1500, %v1568
        %v1637 = vadd.f32 %v1501, %v1569
        %v1638 = vadd.f32 %v1502, %v1570
        %v1639 = vadd.f32 %v1503, %v1571
        %v1640 = vadd.f32 %v1504, %v1572
        %v1641 = vadd.f32 %v1505, %v1573
        %v1642 = vadd.f32 %v1506, %v1574
        %v1643 = vadd.f32 %v1507, %v1575
        %v1644 = vadd.f32 %v1508, %v1576
        %v1645 = vadd.f32 %v1509, %v1577
        %v1646 = vadd.f32 %v1510, %v1578
        %v1647 = vadd.f32 %v1511, %v1579
        %v1648 = vadd.f32 %v1512, %v1580
        %v1649 = vadd.f32 %v1513, %v1581
        %v1650 = vadd.f32 %v1514, %v1582
        %v1651 = vadd.f32 %v1515, %v1583
        %v1652 = vadd.f32 %v1516, %v1584
        %v1653 = vadd.f32 %v1517, %v1585
        %v1654 = vadd.f32 %v1518, %v1586
        %v1655 = vadd.f32 %v1519, %v1587
        %v1656 = vmul.f32 %v1588, 0.5
        %v1657 = vmul.f32 %v1589, 0.5
        %v1658 = vmul.f32 %v1590, 0.5
        %v1659 = vmul.f32 %v1591, 0.5
        %v1660 = vmul.f32 %v1592, 0.5
        %v1661 = vmul.f32 %v1593, 0.5
        %v1662 = vmul.f32 %v1594, 0.5
        %v1663 = vmul.f32 %v1595, 0.5
        %v1664 = vmul.f32 %v1596, 0.5
        %v1665 = vmul.f32 %v1597, 0.5
        %v1666 = vmul.f32 %v1598, 0.5
        %v1667 = vmul.f32 %v1599, 0.5
        %v1668 = vmul.f32 %v1600, 0.5
        %v1669 = vmul.f32 %v1601, 0.5
        %v1670 = vmul.f32 %v1602, 0.5
        %v1671 = vmul.f32 %v1603, 0.5
        %v1672 = vmul.f32 %v1604, 0.5
        %v1673 = vmul.f32 %v1605, 0.5
        %v1674 = vmul.f32 %v1606, 0.5
        %v1675 = vmul.f32 %v1607, 0.5
        %v1676 = vmul.f32 %v1608, 0.5
        %v1677 = vmul.f32 %v1609, 0.5
        %v1678 = vmul.f32 %v1610, 0.5
        %v1679 = vmul.f32 %v1611, 0.5
        %v1680 = vmul.f32 %v1612, 0.5
        %v1681 = vmul.f32 %v1613, 0.5
        %v1682 = vmul.f32 %v1614, 0.5
        %v1683 = vmul.f32 %v1615, 0.5
        %v1684 = vmul.f32 %v1616, 0.5
        %v1685 = vmul.f32 %v1617, 0.5
        %v1686 = vmul.f32 %v1618, 0.5
        %v1687 = vmul.f32 %v1619, 0.5
        %v1688 = vmul.f32 %v1620, 0.5
        %v1689 = vmul.f32 %v1621, 0.5
        %v1690 = vmul.f32 %v1622, 0.5
        %v1691 = vmul.f32 %v1623, 0.5
        %v1692 = vmul.f32 %v1624, 0.5
        %v1693 = vmul.f32 %v1625, 0.5
        %v1694 = vmul.f32 %v1626, 0.5
        %v1695 = vmul.f32 %v1627, 0.5
        %v1696 = vmul.f32 %v1628, 0.5
        %v1697 = vmul.f32 %v1629, 0.5
        %v1698 = vmul.f32 %v1630, 0.5
        %v1699 = vmul.f32 %v1631, 0.5
        %v1700 = vmul.f32 %v1632, 0.5
        %v1701 = vmul.f32 %v1633, 0.5
        %v1702 = vmul.f32 %v1634, 0.5
        %v1703 = vmul.f32 %v1635, 0.5
        %v1704 = vmul.f32 %v1636, 0.5
        %v1705 = vmul.f32 %v1637, 0.5
        %v1706 = vmul.f32 %v1638, 0.5
        %v1707 = vmul.f32 %v1639, 0.5
        %v1708 = vmul.f32 %v1640, 0.5
        %v1709 = vmul.f32 %v1641, 0.5
        %v1710 = vmul.f32 %v1642, 0.5
        %v1711 = vmul.f32 %v1643, 0.5
        %v1712 = vmul.f32 %v1644, 0.5
        %v1713 = vmul.f32 %v1645, 0.5
        %v1714 = vmul.f32 %v1646, 0.5
        %v1715 = vmul.f32 %v1647, 0.5
        %v1716 = vmul.f32 %v1648, 0.5
        %v1717 = vmul.f32 %v1649, 0.5
        %v1718 = vmul.f32 %v1650, 0.5
        %v1719 = vmul.f32 %v1651, 0.5
        %v1720 = vmul.f32 %v1652, 0.5
        %v1721 = vmul.f32 %v1653, 0.5
        %v1722 = vmul.f32 %v1654, 0.5
        %v1723 = vmul.f32 %v1655, 0.5
        %v1724 = vlog2.pop %v1384
        %v1725 = vmul.f32 %v1724, 0.6931472
        %v1726 = vlog2.pop %v1385
        %v1727 = vmul.f32 %v1726, 0.6931472
        %v1728 = vlog2.pop %v1386
        %v1729 = vmul.f32 %v1728, 0.6931472
        %v1730 = vlog2.pop %v1387
        %v1731 = vmul.f32 %v1730, 0.6931472
        %v1732 = vlog2.pop %v1388
        %v1733 = vmul.f32 %v1732, 0.6931472
        %v1734 = vlog2.pop %v1389
        %v1735 = vmul.f32 %v1734, 0.6931472
        %v1736 = vlog2.pop %v1390
        %v1737 = vmul.f32 %v1736, 0.6931472
        %v1738 = vlog2.pop %v1391
        %v1739 = vmul.f32 %v1738, 0.6931472
        %v1740 = vlog2.pop %v1392
        %v1741 = vmul.f32 %v1740, 0.6931472
        %v1742 = vlog2.pop %v1393
        %v1743 = vmul.f32 %v1742, 0.6931472
        %v1744 = vlog2.pop %v1394
        %v1745 = vmul.f32 %v1744, 0.6931472
        %v1746 = vlog2.pop %v1395
        %v1747 = vmul.f32 %v1746, 0.6931472
        %v1748 = vlog2.pop %v1396
        %v1749 = vmul.f32 %v1748, 0.6931472
        %v1750 = vlog2.pop %v1397
        %v1751 = vmul.f32 %v1750, 0.6931472
        %v1752 = vlog2.pop %v1398
        %v1753 = vmul.f32 %v1752, 0.6931472
        %v1754 = vlog2.pop %v1399
        %v1755 = vmul.f32 %v1754, 0.6931472
        %v1756 = vlog2.pop %v1400
        %v1757 = vmul.f32 %v1756, 0.6931472
        %v1758 = vlog2.pop %v1401
        %v1759 = vmul.f32 %v1758, 0.6931472
        %v1760 = vlog2.pop %v1402
        %v1761 = vmul.f32 %v1760, 0.6931472
        %v1762 = vlog2.pop %v1403
        %v1763 = vmul.f32 %v1762, 0.6931472
        %v1764 = vlog2.pop %v1404
        %v1765 = vmul.f32 %v1764, 0.6931472
        %v1766 = vlog2.pop %v1405
        %v1767 = vmul.f32 %v1766, 0.6931472
        %v1768 = vlog2.pop %v1406
        %v1769 = vmul.f32 %v1768, 0.6931472
        %v1770 = vlog2.pop %v1407
        %v1771 = vmul.f32 %v1770, 0.6931472
        %v1772 = vlog2.pop %v1408
        %v1773 = vmul.f32 %v1772, 0.6931472
        %v1774 = vlog2.pop %v1409
        %v1775 = vmul.f32 %v1774, 0.6931472
        %v1776 = vlog2.pop %v1410
        %v1777 = vmul.f32 %v1776, 0.6931472
        %v1778 = vlog2.pop %v1411
        %v1779 = vmul.f32 %v1778, 0.6931472
        %v1780 = vlog2.pop %v1412
        %v1781 = vmul.f32 %v1780, 0.6931472
        %v1782 = vlog2.pop %v1413
        %v1783 = vmul.f32 %v1782, 0.6931472
        %v1784 = vlog2.pop %v1414
        %v1785 = vmul.f32 %v1784, 0.6931472
        %v1786 = vlog2.pop %v1415
        %v1787 = vmul.f32 %v1786, 0.6931472
        %v1788 = vlog2.pop %v1416
        %v1789 = vmul.f32 %v1788, 0.6931472
        %v1790 = vlog2.pop %v1417
        %v1791 = vmul.f32 %v1790, 0.6931472
        %v1792 = vlog2.pop %v1418
        %v1793 = vmul.f32 %v1792, 0.6931472
        %v1794 = vlog2.pop %v1419
        %v1795 = vmul.f32 %v1794, 0.6931472
        %v1796 = vlog2.pop %v1420
        %v1797 = vmul.f32 %v1796, 0.6931472
        %v1798 = vlog2.pop %v1421
        %v1799 = vmul.f32 %v1798, 0.6931472
        %v1800 = vlog2.pop %v1422
        %v1801 = vmul.f32 %v1800, 0.6931472
        %v1802 = vlog2.pop %v1423
        %v1803 = vmul.f32 %v1802, 0.6931472
        %v1804 = vlog2.pop %v1424
        %v1805 = vmul.f32 %v1804, 0.6931472
        %v1806 = vlog2.pop %v1425
        %v1807 = vmul.f32 %v1806, 0.6931472
        %v1808 = vlog2.pop %v1426
        %v1809 = vmul.f32 %v1808, 0.6931472
        %v1810 = vlog2.pop %v1427
        %v1811 = vmul.f32 %v1810, 0.6931472
        %v1812 = vlog2.pop %v1428
        %v1813 = vmul.f32 %v1812, 0.6931472
        %v1814 = vlog2.pop %v1429
        %v1815 = vmul.f32 %v1814, 0.6931472
        %v1816 = vlog2.pop %v1430
        %v1817 = vmul.f32 %v1816, 0.6931472
        %v1818 = vlog2.pop %v1431
        %v1819 = vmul.f32 %v1818, 0.6931472
        %v1820 = vlog2.pop %v1432
        %v1821 = vmul.f32 %v1820, 0.6931472
        %v1822 = vlog2.pop %v1433
        %v1823 = vmul.f32 %v1822, 0.6931472
        %v1824 = vlog2.pop %v1434
        %v1825 = vmul.f32 %v1824, 0.6931472
        %v1826 = vlog2.pop %v1435
        %v1827 = vmul.f32 %v1826, 0.6931472
        %v1828 = vlog2.pop %v1436
        %v1829 = vmul.f32 %v1828, 0.6931472
        %v1830 = vlog2.pop %v1437
        %v1831 = vmul.f32 %v1830, 0.6931472
        %v1832 = vlog2.pop %v1438
        %v1833 = vmul.f32 %v1832, 0.6931472
        %v1834 = vlog2.pop %v1439
        %v1835 = vmul.f32 %v1834, 0.6931472
        %v1836 = vlog2.pop %v1440
        %v1837 = vmul.f32 %v1836, 0.6931472
        %v1838 = vlog2.pop %v1441
        %v1839 = vmul.f32 %v1838, 0.6931472
        %v1840 = vlog2.pop %v1442
        %v1841 = vmul.f32 %v1840, 0.6931472
        %v1842 = vlog2.pop %v1443
        %v1843 = vmul.f32 %v1842, 0.6931472
        %v1844 = vlog2.pop %v1444
        %v1845 = vmul.f32 %v1844, 0.6931472
        %v1846 = vlog2.pop %v1445
        %v1847 = vmul.f32 %v1846, 0.6931472
        %v1848 = vlog2.pop %v1446
        %v1849 = vmul.f32 %v1848, 0.6931472
        %v1850 = vlog2.pop %v1447
        %v1851 = vmul.f32 %v1850, 0.6931472
        %v1852 = vlog2.pop %v1448
        %v1853 = vmul.f32 %v1852, 0.6931472
        %v1854 = vlog2.pop %v1449
        %v1855 = vmul.f32 %v1854, 0.6931472
        %v1856 = vlog2.pop %v1450
        %v1857 = vmul.f32 %v1856, 0.6931472
        %v1858 = vlog2.pop %v1451
        %v1859 = vmul.f32 %v1858, 0.6931472
        %v1860 = vsub.f32 %v1656, %v1725
        %v1861 = vsub.f32 %v1657, %v1727
        %v1862 = vsub.f32 %v1658, %v1729
        %v1863 = vsub.f32 %v1659, %v1731
        %v1864 = vsub.f32 %v1660, %v1733
        %v1865 = vsub.f32 %v1661, %v1735
        %v1866 = vsub.f32 %v1662, %v1737
        %v1867 = vsub.f32 %v1663, %v1739
        %v1868 = vsub.f32 %v1664, %v1741
        %v1869 = vsub.f32 %v1665, %v1743
        %v1870 = vsub.f32 %v1666, %v1745
        %v1871 = vsub.f32 %v1667, %v1747
        %v1872 = vsub.f32 %v1668, %v1749
        %v1873 = vsub.f32 %v1669, %v1751
        %v1874 = vsub.f32 %v1670, %v1753
        %v1875 = vsub.f32 %v1671, %v1755
        %v1876 = vsub.f32 %v1672, %v1757
        %v1877 = vsub.f32 %v1673, %v1759
        %v1878 = vsub.f32 %v1674, %v1761
        %v1879 = vsub.f32 %v1675, %v1763
        %v1880 = vsub.f32 %v1676, %v1765
        %v1881 = vsub.f32 %v1677, %v1767
        %v1882 = vsub.f32 %v1678, %v1769
        %v1883 = vsub.f32 %v1679, %v1771
        %v1884 = vsub.f32 %v1680, %v1773
        %v1885 = vsub.f32 %v1681, %v1775
        %v1886 = vsub.f32 %v1682, %v1777
        %v1887 = vsub.f32 %v1683, %v1779
        %v1888 = vsub.f32 %v1684, %v1781
        %v1889 = vsub.f32 %v1685, %v1783
        %v1890 = vsub.f32 %v1686, %v1785
        %v1891 = vsub.f32 %v1687, %v1787
        %v1892 = vsub.f32 %v1688, %v1789
        %v1893 = vsub.f32 %v1689, %v1791
        %v1894 = vsub.f32 %v1690, %v1793
        %v1895 = vsub.f32 %v1691, %v1795
        %v1896 = vsub.f32 %v1692, %v1797
        %v1897 = vsub.f32 %v1693, %v1799
        %v1898 = vsub.f32 %v1694, %v1801
        %v1899 = vsub.f32 %v1695, %v1803
        %v1900 = vsub.f32 %v1696, %v1805
        %v1901 = vsub.f32 %v1697, %v1807
        %v1902 = vsub.f32 %v1698, %v1809
        %v1903 = vsub.f32 %v1699, %v1811
        %v1904 = vsub.f32 %v1700, %v1813
        %v1905 = vsub.f32 %v1701, %v1815
        %v1906 = vsub.f32 %v1702, %v1817
        %v1907 = vsub.f32 %v1703, %v1819
        %v1908 = vsub.f32 %v1704, %v1821
        %v1909 = vsub.f32 %v1705, %v1823
        %v1910 = vsub.f32 %v1706, %v1825
        %v1911 = vsub.f32 %v1707, %v1827
        %v1912 = vsub.f32 %v1708, %v1829
        %v1913 = vsub.f32 %v1709, %v1831
        %v1914 = vsub.f32 %v1710, %v1833
        %v1915 = vsub.f32 %v1711, %v1835
        %v1916 = vsub.f32 %v1712, %v1837
        %v1917 = vsub.f32 %v1713, %v1839
        %v1918 = vsub.f32 %v1714, %v1841
        %v1919 = vsub.f32 %v1715, %v1843
        %v1920 = vsub.f32 %v1716, %v1845
        %v1921 = vsub.f32 %v1717, %v1847
        %v1922 = vsub.f32 %v1718, %v1849
        %v1923 = vsub.f32 %v1719, %v1851
        %v1924 = vsub.f32 %v1720, %v1853
        %v1925 = vsub.f32 %v1721, %v1855
        %v1926 = vsub.f32 %v1722, %v1857
        %v1927 = vsub.f32 %v1723, %v1859
        %v1928 = vsub.f32 %v1860, 0.5
        %v1929 = vsub.f32 %v1861, 0.5
        %v1930 = vsub.f32 %v1862, 0.5
        %v1931 = vsub.f32 %v1863, 0.5
        %v1932 = vsub.f32 %v1864, 0.5
        %v1933 = vsub.f32 %v1865, 0.5
        %v1934 = vsub.f32 %v1866, 0.5
        %v1935 = vsub.f32 %v1867, 0.5
        %v1936 = vsub.f32 %v1868, 0.5
        %v1937 = vsub.f32 %v1869, 0.5
        %v1938 = vsub.f32 %v1870, 0.5
        %v1939 = vsub.f32 %v1871, 0.5
        %v1940 = vsub.f32 %v1872, 0.5
        %v1941 = vsub.f32 %v1873, 0.5
        %v1942 = vsub.f32 %v1874, 0.5
        %v1943 = vsub.f32 %v1875, 0.5
        %v1944 = vsub.f32 %v1876, 0.5
        %v1945 = vsub.f32 %v1877, 0.5
        %v1946 = vsub.f32 %v1878, 0.5
        %v1947 = vsub.f32 %v1879, 0.5
        %v1948 = vsub.f32 %v1880, 0.5
        %v1949 = vsub.f32 %v1881, 0.5
        %v1950 = vsub.f32 %v1882, 0.5
        %v1951 = vsub.f32 %v1883, 0.5
        %v1952 = vsub.f32 %v1884, 0.5
        %v1953 = vsub.f32 %v1885, 0.5
        %v1954 = vsub.f32 %v1886, 0.5
        %v1955 = vsub.f32 %v1887, 0.5
        %v1956 = vsub.f32 %v1888, 0.5
        %v1957 = vsub.f32 %v1889, 0.5
        %v1958 = vsub.f32 %v1890, 0.5
        %v1959 = vsub.f32 %v1891, 0.5
        %v1960 = vsub.f32 %v1892, 0.5
        %v1961 = vsub.f32 %v1893, 0.5
        %v1962 = vsub.f32 %v1894, 0.5
        %v1963 = vsub.f32 %v1895, 0.5
        %v1964 = vsub.f32 %v1896, 0.5
        %v1965 = vsub.f32 %v1897, 0.5
        %v1966 = vsub.f32 %v1898, 0.5
        %v1967 = vsub.f32 %v1899, 0.5
        %v1968 = vsub.f32 %v1900, 0.5
        %v1969 = vsub.f32 %v1901, 0.5
        %v1970 = vsub.f32 %v1902, 0.5
        %v1971 = vsub.f32 %v1903, 0.5
        %v1972 = vsub.f32 %v1904, 0.5
        %v1973 = vsub.f32 %v1905, 0.5
        %v1974 = vsub.f32 %v1906, 0.5
        %v1975 = vsub.f32 %v1907, 0.5
        %v1976 = vsub.f32 %v1908, 0.5
        %v1977 = vsub.f32 %v1909, 0.5
        %v1978 = vsub.f32 %v1910, 0.5
        %v1979 = vsub.f32 %v1911, 0.5
        %v1980 = vsub.f32 %v1912, 0.5
        %v1981 = vsub.f32 %v1913, 0.5
        %v1982 = vsub.f32 %v1914, 0.5
        %v1983 = vsub.f32 %v1915, 0.5
        %v1984 = vsub.f32 %v1916, 0.5
        %v1985 = vsub.f32 %v1917, 0.5
        %v1986 = vsub.f32 %v1918, 0.5
        %v1987 = vsub.f32 %v1919, 0.5
        %v1988 = vsub.f32 %v1920, 0.5
        %v1989 = vsub.f32 %v1921, 0.5
        %v1990 = vsub.f32 %v1922, 0.5
        %v1991 = vsub.f32 %v1923, 0.5
        %v1992 = vsub.f32 %v1924, 0.5
        %v1993 = vsub.f32 %v1925, 0.5
        %v1994 = vsub.f32 %v1926, 0.5
        %v1995 = vsub.f32 %v1927, 0.5
        %s1996 = sadd.s32 %s26, %s27
        %s1997 = smul.u32 %s1996, 69632
        %s1998 = sadd.s32 %s1997, 69632
        %p1999 = scmp.gt.s32.totalorder %s1998, 131584
        %p2000 = scmp.le.s32.totalorder %s1998, 131584
        // Predicated region
        $region41: #{tpu_custom_call.1} parent=27 // pred_check
          %p2001 = pneg %p2000
        $region42: #{tpu_custom_call.1} parent=27 // pred_check_branch
          %2003 = sbr.rel (%p2001) target = $region44
        $region43: #{tpu_custom_call.1} parent=27 // pred_region
          %v2004 = vld [vmem:[#allocation2] sm:$0xff]
          %v2005 = vld [vmem:[#allocation2 + $0x8] sm:$0xff]
          %v2006 = vld [vmem:[#allocation2 + $0x10] sm:$0xff]
          %v2007 = vld [vmem:[#allocation2 + $0x18] sm:$0xff]
          %v2008 = vld [vmem:[#allocation2 + $0x20] sm:$0xff]
          %v2009 = vld [vmem:[#allocation2 + $0x28] sm:$0xff]
          %v2010 = vld [vmem:[#allocation2 + $0x30] sm:$0xff]
          %v2011 = vld [vmem:[#allocation2 + $0x38] sm:$0xff]
          %v2012 = vld [vmem:[#allocation2 + $0x40] sm:$0xff]
          %v2013 = vld [vmem:[#allocation2 + $0x48] sm:$0xff]
          %v2014 = vld [vmem:[#allocation2 + $0x50] sm:$0xff]
          %v2015 = vld [vmem:[#allocation2 + $0x58] sm:$0xff]
          %v2016 = vld [vmem:[#allocation2 + $0x60] sm:$0xff]
          %v2017 = vld [vmem:[#allocation2 + $0x68] sm:$0xff]
          %v2018 = vld [vmem:[#allocation2 + $0x70] sm:$0xff]
          %v2019 = vld [vmem:[#allocation2 + $0x78] sm:$0xff]
          %v2020 = vld [vmem:[#allocation2 + $0x80] sm:$0xff]
          %v2021 = vld [vmem:[#allocation2 + $0x88] sm:$0xff]
          %v2022 = vld [vmem:[#allocation2 + $0x90] sm:$0xff]
          %v2023 = vld [vmem:[#allocation2 + $0x98] sm:$0xff]
          %v2024 = vld [vmem:[#allocation2 + $0xa0] sm:$0xff]
          %v2025 = vld [vmem:[#allocation2 + $0xa8] sm:$0xff]
          %v2026 = vld [vmem:[#allocation2 + $0xb0] sm:$0xff]
          %v2027 = vld [vmem:[#allocation2 + $0xb8] sm:$0xff]
          %v2028 = vld [vmem:[#allocation2 + $0xc0] sm:$0xff]
          %v2029 = vld [vmem:[#allocation2 + $0xc8] sm:$0xff]
          %v2030 = vld [vmem:[#allocation2 + $0xd0] sm:$0xff]
          %v2031 = vld [vmem:[#allocation2 + $0xd8] sm:$0xff]
          %v2032 = vld [vmem:[#allocation2 + $0xe0] sm:$0xff]
          %v2033 = vld [vmem:[#allocation2 + $0xe8] sm:$0xff]
          %v2034 = vld [vmem:[#allocation2 + $0xf0] sm:$0xff]
          %v2035 = vld [vmem:[#allocation2 + $0xf8] sm:$0xff]
          %v2036 = vld [vmem:[#allocation2 + $0x100] sm:$0xff]
          %v2037 = vld [vmem:[#allocation2 + $0x108] sm:$0xff]
          %v2038 = vld [vmem:[#allocation2 + $0x110] sm:$0xff]
          %v2039 = vld [vmem:[#allocation2 + $0x118] sm:$0xff]
          %v2040 = vld [vmem:[#allocation2 + $0x120] sm:$0xff]
          %v2041 = vld [vmem:[#allocation2 + $0x128] sm:$0xff]
          %v2042 = vld [vmem:[#allocation2 + $0x130] sm:$0xff]
          %v2043 = vld [vmem:[#allocation2 + $0x138] sm:$0xff]
          %v2044 = vld [vmem:[#allocation2 + $0x140] sm:$0xff]
          %v2045 = vld [vmem:[#allocation2 + $0x148] sm:$0xff]
          %v2046 = vld [vmem:[#allocation2 + $0x150] sm:$0xff]
          %v2047 = vld [vmem:[#allocation2 + $0x158] sm:$0xff]
          %v2048 = vld [vmem:[#allocation2 + $0x160] sm:$0xff]
          %v2049 = vld [vmem:[#allocation2 + $0x168] sm:$0xff]
          %v2050 = vld [vmem:[#allocation2 + $0x170] sm:$0xff]
          %v2051 = vld [vmem:[#allocation2 + $0x178] sm:$0xff]
          %v2052 = vld [vmem:[#allocation2 + $0x180] sm:$0xff]
          %v2053 = vld [vmem:[#allocation2 + $0x188] sm:$0xff]
          %v2054 = vld [vmem:[#allocation2 + $0x190] sm:$0xff]
          %v2055 = vld [vmem:[#allocation2 + $0x198] sm:$0xff]
          %v2056 = vld [vmem:[#allocation2 + $0x1a0] sm:$0xff]
          %v2057 = vld [vmem:[#allocation2 + $0x1a8] sm:$0xff]
          %v2058 = vld [vmem:[#allocation2 + $0x1b0] sm:$0xff]
          %v2059 = vld [vmem:[#allocation2 + $0x1b8] sm:$0xff]
          %v2060 = vld [vmem:[#allocation2 + $0x1c0] sm:$0xff]
          %v2061 = vld [vmem:[#allocation2 + $0x1c8] sm:$0xff]
          %v2062 = vld [vmem:[#allocation2 + $0x1d0] sm:$0xff]
          %v2063 = vld [vmem:[#allocation2 + $0x1d8] sm:$0xff]
          %v2064 = vld [vmem:[#allocation2 + $0x1e0] sm:$0xff]
          %v2065 = vld [vmem:[#allocation2 + $0x1e8] sm:$0xff]
          %v2066 = vld [vmem:[#allocation2 + $0x1f0] sm:$0xff]
          %v2067 = vld [vmem:[#allocation2 + $0x1f8] sm:$0xff]
          %v2068 = vld [vmem:[#allocation2 + $0x200] sm:$0xff]
          %v2069 = vld [vmem:[#allocation2 + $0x208] sm:$0xff]
          %v2070 = vld [vmem:[#allocation2 + $0x210] sm:$0xff]
          %v2071 = vld [vmem:[#allocation2 + $0x218] sm:$0xff]
          %v2072 = vadd.f32 %v2004, %v1928
          %v2073 = vadd.f32 %v2005, %v1929
          %v2074 = vadd.f32 %v2006, %v1930
          %v2075 = vadd.f32 %v2007, %v1931
          %v2076 = vadd.f32 %v2008, %v1932
          %v2077 = vadd.f32 %v2009, %v1933
          %v2078 = vadd.f32 %v2010, %v1934
          %v2079 = vadd.f32 %v2011, %v1935
          %v2080 = vadd.f32 %v2012, %v1936
          %v2081 = vadd.f32 %v2013, %v1937
          %v2082 = vadd.f32 %v2014, %v1938
          %v2083 = vadd.f32 %v2015, %v1939
          %v2084 = vadd.f32 %v2016, %v1940
          %v2085 = vadd.f32 %v2017, %v1941
          %v2086 = vadd.f32 %v2018, %v1942
          %v2087 = vadd.f32 %v2019, %v1943
          %v2088 = vadd.f32 %v2020, %v1944
          %v2089 = vadd.f32 %v2021, %v1945
          %v2090 = vadd.f32 %v2022, %v1946
          %v2091 = vadd.f32 %v2023, %v1947
          %v2092 = vadd.f32 %v2024, %v1948
          %v2093 = vadd.f32 %v2025, %v1949
          %v2094 = vadd.f32 %v2026, %v1950
          %v2095 = vadd.f32 %v2027, %v1951
          %v2096 = vadd.f32 %v2028, %v1952
          %v2097 = vadd.f32 %v2029, %v1953
          %v2098 = vadd.f32 %v2030, %v1954
          %v2099 = vadd.f32 %v2031, %v1955
          %v2100 = vadd.f32 %v2032, %v1956
          %v2101 = vadd.f32 %v2033, %v1957
          %v2102 = vadd.f32 %v2034, %v1958
          %v2103 = vadd.f32 %v2035, %v1959
          %v2104 = vadd.f32 %v2036, %v1960
          %v2105 = vadd.f32 %v2037, %v1961
          %v2106 = vadd.f32 %v2038, %v1962
          %v2107 = vadd.f32 %v2039, %v1963
          %v2108 = vadd.f32 %v2040, %v1964
          %v2109 = vadd.f32 %v2041, %v1965
          %v2110 = vadd.f32 %v2042, %v1966
          %v2111 = vadd.f32 %v2043, %v1967
          %v2112 = vadd.f32 %v2044, %v1968
          %v2113 = vadd.f32 %v2045, %v1969
          %v2114 = vadd.f32 %v2046, %v1970
          %v2115 = vadd.f32 %v2047, %v1971
          %v2116 = vadd.f32 %v2048, %v1972
          %v2117 = vadd.f32 %v2049, %v1973
          %v2118 = vadd.f32 %v2050, %v1974
          %v2119 = vadd.f32 %v2051, %v1975
          %v2120 = vadd.f32 %v2052, %v1976
          %v2121 = vadd.f32 %v2053, %v1977
          %v2122 = vadd.f32 %v2054, %v1978
          %v2123 = vadd.f32 %v2055, %v1979
          %v2124 = vadd.f32 %v2056, %v1980
          %v2125 = vadd.f32 %v2057, %v1981
          %v2126 = vadd.f32 %v2058, %v1982
          %v2127 = vadd.f32 %v2059, %v1983
          %v2128 = vadd.f32 %v2060, %v1984
          %v2129 = vadd.f32 %v2061, %v1985
          %v2130 = vadd.f32 %v2062, %v1986
          %v2131 = vadd.f32 %v2063, %v1987
          %v2132 = vadd.f32 %v2064, %v1988
          %v2133 = vadd.f32 %v2065, %v1989
          %v2134 = vadd.f32 %v2066, %v1990
          %v2135 = vadd.f32 %v2067, %v1991
          %v2136 = vadd.f32 %v2068, %v1992
          %v2137 = vadd.f32 %v2069, %v1993
          %v2138 = vadd.f32 %v2070, %v1994
          %v2139 = vadd.f32 %v2071, %v1995
          %2140 = vst [vmem:[#allocation2] sm:$0xff] %v2072
          %2141 = vst [vmem:[#allocation2 + $0x8] sm:$0xff] %v2073
          %2142 = vst [vmem:[#allocation2 + $0x10] sm:$0xff] %v2074
          %2143 = vst [vmem:[#allocation2 + $0x18] sm:$0xff] %v2075
          %2144 = vst [vmem:[#allocation2 + $0x20] sm:$0xff] %v2076
          %2145 = vst [vmem:[#allocation2 + $0x28] sm:$0xff] %v2077
          %2146 = vst [vmem:[#allocation2 + $0x30] sm:$0xff] %v2078
          %2147 = vst [vmem:[#allocation2 + $0x38] sm:$0xff] %v2079
          %2148 = vst [vmem:[#allocation2 + $0x40] sm:$0xff] %v2080
          %2149 = vst [vmem:[#allocation2 + $0x48] sm:$0xff] %v2081
          %2150 = vst [vmem:[#allocation2 + $0x50] sm:$0xff] %v2082
          %2151 = vst [vmem:[#allocation2 + $0x58] sm:$0xff] %v2083
          %2152 = vst [vmem:[#allocation2 + $0x60] sm:$0xff] %v2084
          %2153 = vst [vmem:[#allocation2 + $0x68] sm:$0xff] %v2085
          %2154 = vst [vmem:[#allocation2 + $0x70] sm:$0xff] %v2086
          %2155 = vst [vmem:[#allocation2 + $0x78] sm:$0xff] %v2087
          %2156 = vst [vmem:[#allocation2 + $0x80] sm:$0xff] %v2088
          %2157 = vst [vmem:[#allocation2 + $0x88] sm:$0xff] %v2089
          %2158 = vst [vmem:[#allocation2 + $0x90] sm:$0xff] %v2090
          %2159 = vst [vmem:[#allocation2 + $0x98] sm:$0xff] %v2091
          %2160 = vst [vmem:[#allocation2 + $0xa0] sm:$0xff] %v2092
          %2161 = vst [vmem:[#allocation2 + $0xa8] sm:$0xff] %v2093
          %2162 = vst [vmem:[#allocation2 + $0xb0] sm:$0xff] %v2094
          %2163 = vst [vmem:[#allocation2 + $0xb8] sm:$0xff] %v2095
          %2164 = vst [vmem:[#allocation2 + $0xc0] sm:$0xff] %v2096
          %2165 = vst [vmem:[#allocation2 + $0xc8] sm:$0xff] %v2097
          %2166 = vst [vmem:[#allocation2 + $0xd0] sm:$0xff] %v2098
          %2167 = vst [vmem:[#allocation2 + $0xd8] sm:$0xff] %v2099
          %2168 = vst [vmem:[#allocation2 + $0xe0] sm:$0xff] %v2100
          %2169 = vst [vmem:[#allocation2 + $0xe8] sm:$0xff] %v2101
          %2170 = vst [vmem:[#allocation2 + $0xf0] sm:$0xff] %v2102
          %2171 = vst [vmem:[#allocation2 + $0xf8] sm:$0xff] %v2103
          %2172 = vst [vmem:[#allocation2 + $0x100] sm:$0xff] %v2104
          %2173 = vst [vmem:[#allocation2 + $0x108] sm:$0xff] %v2105
          %2174 = vst [vmem:[#allocation2 + $0x110] sm:$0xff] %v2106
          %2175 = vst [vmem:[#allocation2 + $0x118] sm:$0xff] %v2107
          %2176 = vst [vmem:[#allocation2 + $0x120] sm:$0xff] %v2108
          %2177 = vst [vmem:[#allocation2 + $0x128] sm:$0xff] %v2109
          %2178 = vst [vmem:[#allocation2 + $0x130] sm:$0xff] %v2110
          %2179 = vst [vmem:[#allocation2 + $0x138] sm:$0xff] %v2111
          %2180 = vst [vmem:[#allocation2 + $0x140] sm:$0xff] %v2112
          %2181 = vst [vmem:[#allocation2 + $0x148] sm:$0xff] %v2113
          %2182 = vst [vmem:[#allocation2 + $0x150] sm:$0xff] %v2114
          %2183 = vst [vmem:[#allocation2 + $0x158] sm:$0xff] %v2115
          %2184 = vst [vmem:[#allocation2 + $0x160] sm:$0xff] %v2116
          %2185 = vst [vmem:[#allocation2 + $0x168] sm:$0xff] %v2117
          %2186 = vst [vmem:[#allocation2 + $0x170] sm:$0xff] %v2118
          %2187 = vst [vmem:[#allocation2 + $0x178] sm:$0xff] %v2119
          %2188 = vst [vmem:[#allocation2 + $0x180] sm:$0xff] %v2120
          %2189 = vst [vmem:[#allocation2 + $0x188] sm:$0xff] %v2121
          %2190 = vst [vmem:[#allocation2 + $0x190] sm:$0xff] %v2122
          %2191 = vst [vmem:[#allocation2 + $0x198] sm:$0xff] %v2123
          %2192 = vst [vmem:[#allocation2 + $0x1a0] sm:$0xff] %v2124
          %2193 = vst [vmem:[#allocation2 + $0x1a8] sm:$0xff] %v2125
          %2194 = vst [vmem:[#allocation2 + $0x1b0] sm:$0xff] %v2126
          %2195 = vst [vmem:[#allocation2 + $0x1b8] sm:$0xff] %v2127
          %2196 = vst [vmem:[#allocation2 + $0x1c0] sm:$0xff] %v2128
          %2197 = vst [vmem:[#allocation2 + $0x1c8] sm:$0xff] %v2129
          %2198 = vst [vmem:[#allocation2 + $0x1d0] sm:$0xff] %v2130
          %2199 = vst [vmem:[#allocation2 + $0x1d8] sm:$0xff] %v2131
          %2200 = vst [vmem:[#allocation2 + $0x1e0] sm:$0xff] %v2132
          %2201 = vst [vmem:[#allocation2 + $0x1e8] sm:$0xff] %v2133
          %2202 = vst [vmem:[#allocation2 + $0x1f0] sm:$0xff] %v2134
          %2203 = vst [vmem:[#allocation2 + $0x1f8] sm:$0xff] %v2135
          %2204 = vst [vmem:[#allocation2 + $0x200] sm:$0xff] %v2136
          %2205 = vst [vmem:[#allocation2 + $0x208] sm:$0xff] %v2137
          %2206 = vst [vmem:[#allocation2 + $0x210] sm:$0xff] %v2138
          %2207 = vst [vmem:[#allocation2 + $0x218] sm:$0xff] %v2139
        $region44: #{tpu_custom_call.1} parent=27 // pred_fallthru
          _
        // Predicated region
        $region45: #{tpu_custom_call.1} parent=27 // pred_check
          %p2208 = pneg %p1999
        $region46: #{tpu_custom_call.1} parent=27 // pred_check_branch
          %2210 = sbr.rel (%p2208) target = $region48
        $region47: #{tpu_custom_call.1} parent=27 // pred_region
          %v2211 = vlaneseq
          %v2212 = vshrl.u32 %v2211, 7
          %v2213 = vadd.s32 %v2212, 8
          %v2214 = vadd.s32 %v2212, 16
          %v2215 = vadd.s32 %v2212, 24
          %v2216 = vadd.s32 %v2212, 32
          %v2217 = vadd.s32 %v2212, 40
          %v2218 = vadd.s32 %v2212, 48
          %v2219 = vadd.s32 %v2212, 56
          %v2220 = vadd.s32 %v2212, 64
          %v2221 = vadd.s32 %v2212, 72
          %v2222 = vadd.s32 %v2212, 80
          %v2223 = vadd.s32 %v2212, 88
          %v2224 = vadd.s32 %v2212, 96
          %v2225 = vadd.s32 %v2212, 104
          %v2226 = vadd.s32 %v2212, 112
          %v2227 = vadd.s32 %v2212, 120
          %v2228 = vadd.s32 %v2212, 128
          %v2229 = vadd.s32 %v2212, 136
          %v2230 = vadd.s32 %v2212, 144
          %v2231 = vadd.s32 %v2212, 152
          %v2232 = vadd.s32 %v2212, 160
          %v2233 = vadd.s32 %v2212, 168
          %v2234 = vadd.s32 %v2212, 176
          %v2235 = vadd.s32 %v2212, 184
          %v2236 = vadd.s32 %v2212, 192
          %v2237 = vadd.s32 %v2212, 200
          %v2238 = vadd.s32 %v2212, 208
          %v2239 = vadd.s32 %v2212, 216
          %v2240 = vadd.s32 %v2212, 224
          %v2241 = vadd.s32 %v2212, 232
          %v2242 = vadd.s32 %v2212, 240
          %v2243 = vadd.s32 %v2212, 248
          %v2244 = vadd.s32 %v2212, 256
          %v2245 = vadd.s32 %v2212, 264
          %v2246 = vadd.s32 %v2212, 272
          %v2247 = vadd.s32 %v2212, 280
          %v2248 = vadd.s32 %v2212, 288
          %v2249 = vadd.s32 %v2212, 296
          %v2250 = vadd.s32 %v2212, 304
          %v2251 = vadd.s32 %v2212, 312
          %v2252 = vadd.s32 %v2212, 320
          %v2253 = vadd.s32 %v2212, 328
          %v2254 = vadd.s32 %v2212, 336
          %v2255 = vadd.s32 %v2212, 344
          %v2256 = vadd.s32 %v2212, 352
          %v2257 = vadd.s32 %v2212, 360
          %v2258 = vadd.s32 %v2212, 368
          %v2259 = vadd.s32 %v2212, 376
          %v2260 = vadd.s32 %v2212, 384
          %v2261 = vadd.s32 %v2212, 392
          %v2262 = vadd.s32 %v2212, 400
          %v2263 = vadd.s32 %v2212, 408
          %v2264 = vadd.s32 %v2212, 416
          %v2265 = vadd.s32 %v2212, 424
          %v2266 = vadd.s32 %v2212, 432
          %v2267 = vadd.s32 %v2212, 440
          %v2268 = vadd.s32 %v2212, 448
          %v2269 = vadd.s32 %v2212, 456
          %v2270 = vadd.s32 %v2212, 464
          %v2271 = vadd.s32 %v2212, 472
          %v2272 = vadd.s32 %v2212, 480
          %v2273 = vadd.s32 %v2212, 488
          %v2274 = vadd.s32 %v2212, 496
          %v2275 = vadd.s32 %v2212, 504
          %v2276 = vadd.s32 %v2212, 512
          %v2277 = vadd.s32 %v2212, 520
          %v2278 = vadd.s32 %v2212, 528
          %v2279 = vadd.s32 %v2212, 536
          %v2280 = vlaneseq
          %v2281 = vand.u32 %v2280, 127
          %v2282 = vmul.u32 %v2212, 128
          %v2283 = vmul.u32 %v2213, 128
          %v2284 = vmul.u32 %v2214, 128
          %v2285 = vmul.u32 %v2215, 128
          %v2286 = vmul.u32 %v2216, 128
          %v2287 = vmul.u32 %v2217, 128
          %v2288 = vmul.u32 %v2218, 128
          %v2289 = vmul.u32 %v2219, 128
          %v2290 = vmul.u32 %v2220, 128
          %v2291 = vmul.u32 %v2221, 128
          %v2292 = vmul.u32 %v2222, 128
          %v2293 = vmul.u32 %v2223, 128
          %v2294 = vmul.u32 %v2224, 128
          %v2295 = vmul.u32 %v2225, 128
          %v2296 = vmul.u32 %v2226, 128
          %v2297 = vmul.u32 %v2227, 128
          %v2298 = vmul.u32 %v2228, 128
          %v2299 = vmul.u32 %v2229, 128
          %v2300 = vmul.u32 %v2230, 128
          %v2301 = vmul.u32 %v2231, 128
          %v2302 = vmul.u32 %v2232, 128
          %v2303 = vmul.u32 %v2233, 128
          %v2304 = vmul.u32 %v2234, 128
          %v2305 = vmul.u32 %v2235, 128
          %v2306 = vmul.u32 %v2236, 128
          %v2307 = vmul.u32 %v2237, 128
          %v2308 = vmul.u32 %v2238, 128
          %v2309 = vmul.u32 %v2239, 128
          %v2310 = vmul.u32 %v2240, 128
          %v2311 = vmul.u32 %v2241, 128
          %v2312 = vmul.u32 %v2242, 128
          %v2313 = vmul.u32 %v2243, 128
          %v2314 = vmul.u32 %v2244, 128
          %v2315 = vmul.u32 %v2245, 128
          %v2316 = vmul.u32 %v2246, 128
          %v2317 = vmul.u32 %v2247, 128
          %v2318 = vmul.u32 %v2248, 128
          %v2319 = vmul.u32 %v2249, 128
          %v2320 = vmul.u32 %v2250, 128
          %v2321 = vmul.u32 %v2251, 128
          %v2322 = vmul.u32 %v2252, 128
          %v2323 = vmul.u32 %v2253, 128
          %v2324 = vmul.u32 %v2254, 128
          %v2325 = vmul.u32 %v2255, 128
          %v2326 = vmul.u32 %v2256, 128
          %v2327 = vmul.u32 %v2257, 128
          %v2328 = vmul.u32 %v2258, 128
          %v2329 = vmul.u32 %v2259, 128
          %v2330 = vmul.u32 %v2260, 128
          %v2331 = vmul.u32 %v2261, 128
          %v2332 = vmul.u32 %v2262, 128
          %v2333 = vmul.u32 %v2263, 128
          %v2334 = vmul.u32 %v2264, 128
          %v2335 = vmul.u32 %v2265, 128
          %v2336 = vmul.u32 %v2266, 128
          %v2337 = vmul.u32 %v2267, 128
          %v2338 = vmul.u32 %v2268, 128
          %v2339 = vmul.u32 %v2269, 128
          %v2340 = vmul.u32 %v2270, 128
          %v2341 = vmul.u32 %v2271, 128
          %v2342 = vmul.u32 %v2272, 128
          %v2343 = vmul.u32 %v2273, 128
          %v2344 = vmul.u32 %v2274, 128
          %v2345 = vmul.u32 %v2275, 128
          %v2346 = vmul.u32 %v2276, 128
          %v2347 = vmul.u32 %v2277, 128
          %v2348 = vmul.u32 %v2278, 128
          %v2349 = vmul.u32 %v2279, 128
          %v2350 = vstv %s1997
          %v2351 = vadd.s32 %v2350, %v2282
          %v2352 = vadd.s32 %v2350, %v2283
          %v2353 = vadd.s32 %v2350, %v2284
          %v2354 = vadd.s32 %v2350, %v2285
          %v2355 = vadd.s32 %v2350, %v2286
          %v2356 = vadd.s32 %v2350, %v2287
          %v2357 = vadd.s32 %v2350, %v2288
          %v2358 = vadd.s32 %v2350, %v2289
          %v2359 = vadd.s32 %v2350, %v2290
          %v2360 = vadd.s32 %v2350, %v2291
          %v2361 = vadd.s32 %v2350, %v2292
          %v2362 = vadd.s32 %v2350, %v2293
          %v2363 = vadd.s32 %v2350, %v2294
          %v2364 = vadd.s32 %v2350, %v2295
          %v2365 = vadd.s32 %v2350, %v2296
          %v2366 = vadd.s32 %v2350, %v2297
          %v2367 = vadd.s32 %v2350, %v2298
          %v2368 = vadd.s32 %v2350, %v2299
          %v2369 = vadd.s32 %v2350, %v2300
          %v2370 = vadd.s32 %v2350, %v2301
          %v2371 = vadd.s32 %v2350, %v2302
          %v2372 = vadd.s32 %v2350, %v2303
          %v2373 = vadd.s32 %v2350, %v2304
          %v2374 = vadd.s32 %v2350, %v2305
          %v2375 = vadd.s32 %v2350, %v2306
          %v2376 = vadd.s32 %v2350, %v2307
          %v2377 = vadd.s32 %v2350, %v2308
          %v2378 = vadd.s32 %v2350, %v2309
          %v2379 = vadd.s32 %v2350, %v2310
          %v2380 = vadd.s32 %v2350, %v2311
          %v2381 = vadd.s32 %v2350, %v2312
          %v2382 = vadd.s32 %v2350, %v2313
          %v2383 = vadd.s32 %v2350, %v2314
          %v2384 = vadd.s32 %v2350, %v2315
          %v2385 = vadd.s32 %v2350, %v2316
          %v2386 = vadd.s32 %v2350, %v2317
          %v2387 = vadd.s32 %v2350, %v2318
          %v2388 = vadd.s32 %v2350, %v2319
          %v2389 = vadd.s32 %v2350, %v2320
          %v2390 = vadd.s32 %v2350, %v2321
          %v2391 = vadd.s32 %v2350, %v2322
          %v2392 = vadd.s32 %v2350, %v2323
          %v2393 = vadd.s32 %v2350, %v2324
          %v2394 = vadd.s32 %v2350, %v2325
          %v2395 = vadd.s32 %v2350, %v2326
          %v2396 = vadd.s32 %v2350, %v2327
          %v2397 = vadd.s32 %v2350, %v2328
          %v2398 = vadd.s32 %v2350, %v2329
          %v2399 = vadd.s32 %v2350, %v2330
          %v2400 = vadd.s32 %v2350, %v2331
          %v2401 = vadd.s32 %v2350, %v2332
          %v2402 = vadd.s32 %v2350, %v2333
          %v2403 = vadd.s32 %v2350, %v2334
          %v2404 = vadd.s32 %v2350, %v2335
          %v2405 = vadd.s32 %v2350, %v2336
          %v2406 = vadd.s32 %v2350, %v2337
          %v2407 = vadd.s32 %v2350, %v2338
          %v2408 = vadd.s32 %v2350, %v2339
          %v2409 = vadd.s32 %v2350, %v2340
          %v2410 = vadd.s32 %v2350, %v2341
          %v2411 = vadd.s32 %v2350, %v2342
          %v2412 = vadd.s32 %v2350, %v2343
          %v2413 = vadd.s32 %v2350, %v2344
          %v2414 = vadd.s32 %v2350, %v2345
          %v2415 = vadd.s32 %v2350, %v2346
          %v2416 = vadd.s32 %v2350, %v2347
          %v2417 = vadd.s32 %v2350, %v2348
          %v2418 = vadd.s32 %v2350, %v2349
          %v2419 = vadd.s32 %v2351, %v2281
          %v2420 = vadd.s32 %v2352, %v2281
          %v2421 = vadd.s32 %v2353, %v2281
          %v2422 = vadd.s32 %v2354, %v2281
          %v2423 = vadd.s32 %v2355, %v2281
          %v2424 = vadd.s32 %v2356, %v2281
          %v2425 = vadd.s32 %v2357, %v2281
          %v2426 = vadd.s32 %v2358, %v2281
          %v2427 = vadd.s32 %v2359, %v2281
          %v2428 = vadd.s32 %v2360, %v2281
          %v2429 = vadd.s32 %v2361, %v2281
          %v2430 = vadd.s32 %v2362, %v2281
          %v2431 = vadd.s32 %v2363, %v2281
          %v2432 = vadd.s32 %v2364, %v2281
          %v2433 = vadd.s32 %v2365, %v2281
          %v2434 = vadd.s32 %v2366, %v2281
          %v2435 = vadd.s32 %v2367, %v2281
          %v2436 = vadd.s32 %v2368, %v2281
          %v2437 = vadd.s32 %v2369, %v2281
          %v2438 = vadd.s32 %v2370, %v2281
          %v2439 = vadd.s32 %v2371, %v2281
          %v2440 = vadd.s32 %v2372, %v2281
          %v2441 = vadd.s32 %v2373, %v2281
          %v2442 = vadd.s32 %v2374, %v2281
          %v2443 = vadd.s32 %v2375, %v2281
          %v2444 = vadd.s32 %v2376, %v2281
          %v2445 = vadd.s32 %v2377, %v2281
          %v2446 = vadd.s32 %v2378, %v2281
          %v2447 = vadd.s32 %v2379, %v2281
          %v2448 = vadd.s32 %v2380, %v2281
          %v2449 = vadd.s32 %v2381, %v2281
          %v2450 = vadd.s32 %v2382, %v2281
          %v2451 = vadd.s32 %v2383, %v2281
          %v2452 = vadd.s32 %v2384, %v2281
          %v2453 = vadd.s32 %v2385, %v2281
          %v2454 = vadd.s32 %v2386, %v2281
          %v2455 = vadd.s32 %v2387, %v2281
          %v2456 = vadd.s32 %v2388, %v2281
          %v2457 = vadd.s32 %v2389, %v2281
          %v2458 = vadd.s32 %v2390, %v2281
          %v2459 = vadd.s32 %v2391, %v2281
          %v2460 = vadd.s32 %v2392, %v2281
          %v2461 = vadd.s32 %v2393, %v2281
          %v2462 = vadd.s32 %v2394, %v2281
          %v2463 = vadd.s32 %v2395, %v2281
          %v2464 = vadd.s32 %v2396, %v2281
          %v2465 = vadd.s32 %v2397, %v2281
          %v2466 = vadd.s32 %v2398, %v2281
          %v2467 = vadd.s32 %v2399, %v2281
          %v2468 = vadd.s32 %v2400, %v2281
          %v2469 = vadd.s32 %v2401, %v2281
          %v2470 = vadd.s32 %v2402, %v2281
          %v2471 = vadd.s32 %v2403, %v2281
          %v2472 = vadd.s32 %v2404, %v2281
          %v2473 = vadd.s32 %v2405, %v2281
          %v2474 = vadd.s32 %v2406, %v2281
          %v2475 = vadd.s32 %v2407, %v2281
          %v2476 = vadd.s32 %v2408, %v2281
          %v2477 = vadd.s32 %v2409, %v2281
          %v2478 = vadd.s32 %v2410, %v2281
          %v2479 = vadd.s32 %v2411, %v2281
          %v2480 = vadd.s32 %v2412, %v2281
          %v2481 = vadd.s32 %v2413, %v2281
          %v2482 = vadd.s32 %v2414, %v2281
          %v2483 = vadd.s32 %v2415, %v2281
          %v2484 = vadd.s32 %v2416, %v2281
          %v2485 = vadd.s32 %v2417, %v2281
          %v2486 = vadd.s32 %v2418, %v2281
          %v2487 = vld [vmem:[#allocation2] sm:$0xff]
          %v2488 = vld [vmem:[#allocation2 + $0x8] sm:$0xff]
          %v2489 = vld [vmem:[#allocation2 + $0x10] sm:$0xff]
          %v2490 = vld [vmem:[#allocation2 + $0x18] sm:$0xff]
          %v2491 = vld [vmem:[#allocation2 + $0x20] sm:$0xff]
          %v2492 = vld [vmem:[#allocation2 + $0x28] sm:$0xff]
          %v2493 = vld [vmem:[#allocation2 + $0x30] sm:$0xff]
          %v2494 = vld [vmem:[#allocation2 + $0x38] sm:$0xff]
          %v2495 = vld [vmem:[#allocation2 + $0x40] sm:$0xff]
          %v2496 = vld [vmem:[#allocation2 + $0x48] sm:$0xff]
          %v2497 = vld [vmem:[#allocation2 + $0x50] sm:$0xff]
          %v2498 = vld [vmem:[#allocation2 + $0x58] sm:$0xff]
          %v2499 = vld [vmem:[#allocation2 + $0x60] sm:$0xff]
          %v2500 = vld [vmem:[#allocation2 + $0x68] sm:$0xff]
          %v2501 = vld [vmem:[#allocation2 + $0x70] sm:$0xff]
          %v2502 = vld [vmem:[#allocation2 + $0x78] sm:$0xff]
          %v2503 = vld [vmem:[#allocation2 + $0x80] sm:$0xff]
          %v2504 = vld [vmem:[#allocation2 + $0x88] sm:$0xff]
          %v2505 = vld [vmem:[#allocation2 + $0x90] sm:$0xff]
          %v2506 = vld [vmem:[#allocation2 + $0x98] sm:$0xff]
          %v2507 = vld [vmem:[#allocation2 + $0xa0] sm:$0xff]
          %v2508 = vld [vmem:[#allocation2 + $0xa8] sm:$0xff]
          %v2509 = vld [vmem:[#allocation2 + $0xb0] sm:$0xff]
          %v2510 = vld [vmem:[#allocation2 + $0xb8] sm:$0xff]
          %v2511 = vld [vmem:[#allocation2 + $0xc0] sm:$0xff]
          %v2512 = vld [vmem:[#allocation2 + $0xc8] sm:$0xff]
          %v2513 = vld [vmem:[#allocation2 + $0xd0] sm:$0xff]
          %v2514 = vld [vmem:[#allocation2 + $0xd8] sm:$0xff]
          %v2515 = vld [vmem:[#allocation2 + $0xe0] sm:$0xff]
          %v2516 = vld [vmem:[#allocation2 + $0xe8] sm:$0xff]
          %v2517 = vld [vmem:[#allocation2 + $0xf0] sm:$0xff]
          %v2518 = vld [vmem:[#allocation2 + $0xf8] sm:$0xff]
          %v2519 = vld [vmem:[#allocation2 + $0x100] sm:$0xff]
          %v2520 = vld [vmem:[#allocation2 + $0x108] sm:$0xff]
          %v2521 = vld [vmem:[#allocation2 + $0x110] sm:$0xff]
          %v2522 = vld [vmem:[#allocation2 + $0x118] sm:$0xff]
          %v2523 = vld [vmem:[#allocation2 + $0x120] sm:$0xff]
          %v2524 = vld [vmem:[#allocation2 + $0x128] sm:$0xff]
          %v2525 = vld [vmem:[#allocation2 + $0x130] sm:$0xff]
          %v2526 = vld [vmem:[#allocation2 + $0x138] sm:$0xff]
          %v2527 = vld [vmem:[#allocation2 + $0x140] sm:$0xff]
          %v2528 = vld [vmem:[#allocation2 + $0x148] sm:$0xff]
          %v2529 = vld [vmem:[#allocation2 + $0x150] sm:$0xff]
          %v2530 = vld [vmem:[#allocation2 + $0x158] sm:$0xff]
          %v2531 = vld [vmem:[#allocation2 + $0x160] sm:$0xff]
          %v2532 = vld [vmem:[#allocation2 + $0x168] sm:$0xff]
          %v2533 = vld [vmem:[#allocation2 + $0x170] sm:$0xff]
          %v2534 = vld [vmem:[#allocation2 + $0x178] sm:$0xff]
          %v2535 = vld [vmem:[#allocation2 + $0x180] sm:$0xff]
          %v2536 = vld [vmem:[#allocation2 + $0x188] sm:$0xff]
          %v2537 = vld [vmem:[#allocation2 + $0x190] sm:$0xff]
          %v2538 = vld [vmem:[#allocation2 + $0x198] sm:$0xff]
          %v2539 = vld [vmem:[#allocation2 + $0x1a0] sm:$0xff]
          %v2540 = vld [vmem:[#allocation2 + $0x1a8] sm:$0xff]
          %v2541 = vld [vmem:[#allocation2 + $0x1b0] sm:$0xff]
          %v2542 = vld [vmem:[#allocation2 + $0x1b8] sm:$0xff]
          %v2543 = vld [vmem:[#allocation2 + $0x1c0] sm:$0xff]
          %v2544 = vld [vmem:[#allocation2 + $0x1c8] sm:$0xff]
          %v2545 = vld [vmem:[#allocation2 + $0x1d0] sm:$0xff]
          %v2546 = vld [vmem:[#allocation2 + $0x1d8] sm:$0xff]
          %v2547 = vld [vmem:[#allocation2 + $0x1e0] sm:$0xff]
          %v2548 = vld [vmem:[#allocation2 + $0x1e8] sm:$0xff]
          %v2549 = vld [vmem:[#allocation2 + $0x1f0] sm:$0xff]
          %v2550 = vld [vmem:[#allocation2 + $0x1f8] sm:$0xff]
          %v2551 = vld [vmem:[#allocation2 + $0x200] sm:$0xff]
          %v2552 = vld [vmem:[#allocation2 + $0x208] sm:$0xff]
          %v2553 = vld [vmem:[#allocation2 + $0x210] sm:$0xff]
          %v2554 = vld [vmem:[#allocation2 + $0x218] sm:$0xff]
          %vm2555 = vcmp.lt.s32.totalorder %v2419, 131584
          %vm2556 = vcmp.lt.s32.totalorder %v2420, 131584
          %vm2557 = vcmp.lt.s32.totalorder %v2421, 131584
          %vm2558 = vcmp.lt.s32.totalorder %v2422, 131584
          %vm2559 = vcmp.lt.s32.totalorder %v2423, 131584
          %vm2560 = vcmp.lt.s32.totalorder %v2424, 131584
          %vm2561 = vcmp.lt.s32.totalorder %v2425, 131584
          %vm2562 = vcmp.lt.s32.totalorder %v2426, 131584
          %vm2563 = vcmp.lt.s32.totalorder %v2427, 131584
          %vm2564 = vcmp.lt.s32.totalorder %v2428, 131584
          %vm2565 = vcmp.lt.s32.totalorder %v2429, 131584
          %vm2566 = vcmp.lt.s32.totalorder %v2430, 131584
          %vm2567 = vcmp.lt.s32.totalorder %v2431, 131584
          %vm2568 = vcmp.lt.s32.totalorder %v2432, 131584
          %vm2569 = vcmp.lt.s32.totalorder %v2433, 131584
          %vm2570 = vcmp.lt.s32.totalorder %v2434, 131584
          %vm2571 = vcmp.lt.s32.totalorder %v2435, 131584
          %vm2572 = vcmp.lt.s32.totalorder %v2436, 131584
          %vm2573 = vcmp.lt.s32.totalorder %v2437, 131584
          %vm2574 = vcmp.lt.s32.totalorder %v2438, 131584
          %vm2575 = vcmp.lt.s32.totalorder %v2439, 131584
          %vm2576 = vcmp.lt.s32.totalorder %v2440, 131584
          %vm2577 = vcmp.lt.s32.totalorder %v2441, 131584
          %vm2578 = vcmp.lt.s32.totalorder %v2442, 131584
          %vm2579 = vcmp.lt.s32.totalorder %v2443, 131584
          %vm2580 = vcmp.lt.s32.totalorder %v2444, 131584
          %vm2581 = vcmp.lt.s32.totalorder %v2445, 131584
          %vm2582 = vcmp.lt.s32.totalorder %v2446, 131584
          %vm2583 = vcmp.lt.s32.totalorder %v2447, 131584
          %vm2584 = vcmp.lt.s32.totalorder %v2448, 131584
          %vm2585 = vcmp.lt.s32.totalorder %v2449, 131584
          %vm2586 = vcmp.lt.s32.totalorder %v2450, 131584
          %vm2587 = vcmp.lt.s32.totalorder %v2451, 131584
          %vm2588 = vcmp.lt.s32.totalorder %v2452, 131584
          %vm2589 = vcmp.lt.s32.totalorder %v2453, 131584
          %vm2590 = vcmp.lt.s32.totalorder %v2454, 131584
          %vm2591 = vcmp.lt.s32.totalorder %v2455, 131584
          %vm2592 = vcmp.lt.s32.totalorder %v2456, 131584
          %vm2593 = vcmp.lt.s32.totalorder %v2457, 131584
          %vm2594 = vcmp.lt.s32.totalorder %v2458, 131584
          %vm2595 = vcmp.lt.s32.totalorder %v2459, 131584
          %vm2596 = vcmp.lt.s32.totalorder %v2460, 131584
          %vm2597 = vcmp.lt.s32.totalorder %v2461, 131584
          %vm2598 = vcmp.lt.s32.totalorder %v2462, 131584
          %vm2599 = vcmp.lt.s32.totalorder %v2463, 131584
          %vm2600 = vcmp.lt.s32.totalorder %v2464, 131584
          %vm2601 = vcmp.lt.s32.totalorder %v2465, 131584
          %vm2602 = vcmp.lt.s32.totalorder %v2466, 131584
          %vm2603 = vcmp.lt.s32.totalorder %v2467, 131584
          %vm2604 = vcmp.lt.s32.totalorder %v2468, 131584
          %vm2605 = vcmp.lt.s32.totalorder %v2469, 131584
          %vm2606 = vcmp.lt.s32.totalorder %v2470, 131584
          %vm2607 = vcmp.lt.s32.totalorder %v2471, 131584
          %vm2608 = vcmp.lt.s32.totalorder %v2472, 131584
          %vm2609 = vcmp.lt.s32.totalorder %v2473, 131584
          %vm2610 = vcmp.lt.s32.totalorder %v2474, 131584
          %vm2611 = vcmp.lt.s32.totalorder %v2475, 131584
          %vm2612 = vcmp.lt.s32.totalorder %v2476, 131584
          %vm2613 = vcmp.lt.s32.totalorder %v2477, 131584
          %vm2614 = vcmp.lt.s32.totalorder %v2478, 131584
          %vm2615 = vcmp.lt.s32.totalorder %v2479, 131584
          %vm2616 = vcmp.lt.s32.totalorder %v2480, 131584
          %vm2617 = vcmp.lt.s32.totalorder %v2481, 131584
          %vm2618 = vcmp.lt.s32.totalorder %v2482, 131584
          %vm2619 = vcmp.lt.s32.totalorder %v2483, 131584
          %vm2620 = vcmp.lt.s32.totalorder %v2484, 131584
          %vm2621 = vcmp.lt.s32.totalorder %v2485, 131584
          %vm2622 = vcmp.lt.s32.totalorder %v2486, 131584
          %v2623 = vsel %vm2555, %v1928, 0.0
          %v2624 = vsel %vm2556, %v1929, 0.0
          %v2625 = vsel %vm2557, %v1930, 0.0
          %v2626 = vsel %vm2558, %v1931, 0.0
          %v2627 = vsel %vm2559, %v1932, 0.0
          %v2628 = vsel %vm2560, %v1933, 0.0
          %v2629 = vsel %vm2561, %v1934, 0.0
          %v2630 = vsel %vm2562, %v1935, 0.0
          %v2631 = vsel %vm2563, %v1936, 0.0
          %v2632 = vsel %vm2564, %v1937, 0.0
          %v2633 = vsel %vm2565, %v1938, 0.0
          %v2634 = vsel %vm2566, %v1939, 0.0
          %v2635 = vsel %vm2567, %v1940, 0.0
          %v2636 = vsel %vm2568, %v1941, 0.0
          %v2637 = vsel %vm2569, %v1942, 0.0
          %v2638 = vsel %vm2570, %v1943, 0.0
          %v2639 = vsel %vm2571, %v1944, 0.0
          %v2640 = vsel %vm2572, %v1945, 0.0
          %v2641 = vsel %vm2573, %v1946, 0.0
          %v2642 = vsel %vm2574, %v1947, 0.0
          %v2643 = vsel %vm2575, %v1948, 0.0
          %v2644 = vsel %vm2576, %v1949, 0.0
          %v2645 = vsel %vm2577, %v1950, 0.0
          %v2646 = vsel %vm2578, %v1951, 0.0
          %v2647 = vsel %vm2579, %v1952, 0.0
          %v2648 = vsel %vm2580, %v1953, 0.0
          %v2649 = vsel %vm2581, %v1954, 0.0
          %v2650 = vsel %vm2582, %v1955, 0.0
          %v2651 = vsel %vm2583, %v1956, 0.0
          %v2652 = vsel %vm2584, %v1957, 0.0
          %v2653 = vsel %vm2585, %v1958, 0.0
          %v2654 = vsel %vm2586, %v1959, 0.0
          %v2655 = vsel %vm2587, %v1960, 0.0
          %v2656 = vsel %vm2588, %v1961, 0.0
          %v2657 = vsel %vm2589, %v1962, 0.0
          %v2658 = vsel %vm2590, %v1963, 0.0
          %v2659 = vsel %vm2591, %v1964, 0.0
          %v2660 = vsel %vm2592, %v1965, 0.0
          %v2661 = vsel %vm2593, %v1966, 0.0
          %v2662 = vsel %vm2594, %v1967, 0.0
          %v2663 = vsel %vm2595, %v1968, 0.0
          %v2664 = vsel %vm2596, %v1969, 0.0
          %v2665 = vsel %vm2597, %v1970, 0.0
          %v2666 = vsel %vm2598, %v1971, 0.0
          %v2667 = vsel %vm2599, %v1972, 0.0
          %v2668 = vsel %vm2600, %v1973, 0.0
          %v2669 = vsel %vm2601, %v1974, 0.0
          %v2670 = vsel %vm2602, %v1975, 0.0
          %v2671 = vsel %vm2603, %v1976, 0.0
          %v2672 = vsel %vm2604, %v1977, 0.0
          %v2673 = vsel %vm2605, %v1978, 0.0
          %v2674 = vsel %vm2606, %v1979, 0.0
          %v2675 = vsel %vm2607, %v1980, 0.0
          %v2676 = vsel %vm2608, %v1981, 0.0
          %v2677 = vsel %vm2609, %v1982, 0.0
          %v2678 = vsel %vm2610, %v1983, 0.0
          %v2679 = vsel %vm2611, %v1984, 0.0
          %v2680 = vsel %vm2612, %v1985, 0.0
          %v2681 = vsel %vm2613, %v1986, 0.0
          %v2682 = vsel %vm2614, %v1987, 0.0
          %v2683 = vsel %vm2615, %v1988, 0.0
          %v2684 = vsel %vm2616, %v1989, 0.0
          %v2685 = vsel %vm2617, %v1990, 0.0
          %v2686 = vsel %vm2618, %v1991, 0.0
          %v2687 = vsel %vm2619, %v1992, 0.0
          %v2688 = vsel %vm2620, %v1993, 0.0
          %v2689 = vsel %vm2621, %v1994, 0.0
          %v2690 = vsel %vm2622, %v1995, 0.0
          %v2691 = vadd.f32 %v2487, %v2623
          %v2692 = vadd.f32 %v2488, %v2624
          %v2693 = vadd.f32 %v2489, %v2625
          %v2694 = vadd.f32 %v2490, %v2626
          %v2695 = vadd.f32 %v2491, %v2627
          %v2696 = vadd.f32 %v2492, %v2628
          %v2697 = vadd.f32 %v2493, %v2629
          %v2698 = vadd.f32 %v2494, %v2630
          %v2699 = vadd.f32 %v2495, %v2631
          %v2700 = vadd.f32 %v2496, %v2632
          %v2701 = vadd.f32 %v2497, %v2633
          %v2702 = vadd.f32 %v2498, %v2634
          %v2703 = vadd.f32 %v2499, %v2635
          %v2704 = vadd.f32 %v2500, %v2636
          %v2705 = vadd.f32 %v2501, %v2637
          %v2706 = vadd.f32 %v2502, %v2638
          %v2707 = vadd.f32 %v2503, %v2639
          %v2708 = vadd.f32 %v2504, %v2640
          %v2709 = vadd.f32 %v2505, %v2641
          %v2710 = vadd.f32 %v2506, %v2642
          %v2711 = vadd.f32 %v2507, %v2643
          %v2712 = vadd.f32 %v2508, %v2644
          %v2713 = vadd.f32 %v2509, %v2645
          %v2714 = vadd.f32 %v2510, %v2646
          %v2715 = vadd.f32 %v2511, %v2647
          %v2716 = vadd.f32 %v2512, %v2648
          %v2717 = vadd.f32 %v2513, %v2649
          %v2718 = vadd.f32 %v2514, %v2650
          %v2719 = vadd.f32 %v2515, %v2651
          %v2720 = vadd.f32 %v2516, %v2652
          %v2721 = vadd.f32 %v2517, %v2653
          %v2722 = vadd.f32 %v2518, %v2654
          %v2723 = vadd.f32 %v2519, %v2655
          %v2724 = vadd.f32 %v2520, %v2656
          %v2725 = vadd.f32 %v2521, %v2657
          %v2726 = vadd.f32 %v2522, %v2658
          %v2727 = vadd.f32 %v2523, %v2659
          %v2728 = vadd.f32 %v2524, %v2660
          %v2729 = vadd.f32 %v2525, %v2661
          %v2730 = vadd.f32 %v2526, %v2662
          %v2731 = vadd.f32 %v2527, %v2663
          %v2732 = vadd.f32 %v2528, %v2664
          %v2733 = vadd.f32 %v2529, %v2665
          %v2734 = vadd.f32 %v2530, %v2666
          %v2735 = vadd.f32 %v2531, %v2667
          %v2736 = vadd.f32 %v2532, %v2668
          %v2737 = vadd.f32 %v2533, %v2669
          %v2738 = vadd.f32 %v2534, %v2670
          %v2739 = vadd.f32 %v2535, %v2671
          %v2740 = vadd.f32 %v2536, %v2672
          %v2741 = vadd.f32 %v2537, %v2673
          %v2742 = vadd.f32 %v2538, %v2674
          %v2743 = vadd.f32 %v2539, %v2675
          %v2744 = vadd.f32 %v2540, %v2676
          %v2745 = vadd.f32 %v2541, %v2677
          %v2746 = vadd.f32 %v2542, %v2678
          %v2747 = vadd.f32 %v2543, %v2679
          %v2748 = vadd.f32 %v2544, %v2680
          %v2749 = vadd.f32 %v2545, %v2681
          %v2750 = vadd.f32 %v2546, %v2682
          %v2751 = vadd.f32 %v2547, %v2683
          %v2752 = vadd.f32 %v2548, %v2684
          %v2753 = vadd.f32 %v2549, %v2685
          %v2754 = vadd.f32 %v2550, %v2686
          %v2755 = vadd.f32 %v2551, %v2687
          %v2756 = vadd.f32 %v2552, %v2688
          %v2757 = vadd.f32 %v2553, %v2689
          %v2758 = vadd.f32 %v2554, %v2690
          %2759 = vst [vmem:[#allocation2] sm:$0xff] %v2691
          %2760 = vst [vmem:[#allocation2 + $0x8] sm:$0xff] %v2692
          %2761 = vst [vmem:[#allocation2 + $0x10] sm:$0xff] %v2693
          %2762 = vst [vmem:[#allocation2 + $0x18] sm:$0xff] %v2694
          %2763 = vst [vmem:[#allocation2 + $0x20] sm:$0xff] %v2695
          %2764 = vst [vmem:[#allocation2 + $0x28] sm:$0xff] %v2696
          %2765 = vst [vmem:[#allocation2 + $0x30] sm:$0xff] %v2697
          %2766 = vst [vmem:[#allocation2 + $0x38] sm:$0xff] %v2698
          %2767 = vst [vmem:[#allocation2 + $0x40] sm:$0xff] %v2699
          %2768 = vst [vmem:[#allocation2 + $0x48] sm:$0xff] %v2700
          %2769 = vst [vmem:[#allocation2 + $0x50] sm:$0xff] %v2701
          %2770 = vst [vmem:[#allocation2 + $0x58] sm:$0xff] %v2702
          %2771 = vst [vmem:[#allocation2 + $0x60] sm:$0xff] %v2703
          %2772 = vst [vmem:[#allocation2 + $0x68] sm:$0xff] %v2704
          %2773 = vst [vmem:[#allocation2 + $0x70] sm:$0xff] %v2705
          %2774 = vst [vmem:[#allocation2 + $0x78] sm:$0xff] %v2706
          %2775 = vst [vmem:[#allocation2 + $0x80] sm:$0xff] %v2707
          %2776 = vst [vmem:[#allocation2 + $0x88] sm:$0xff] %v2708
          %2777 = vst [vmem:[#allocation2 + $0x90] sm:$0xff] %v2709
          %2778 = vst [vmem:[#allocation2 + $0x98] sm:$0xff] %v2710
          %2779 = vst [vmem:[#allocation2 + $0xa0] sm:$0xff] %v2711
          %2780 = vst [vmem:[#allocation2 + $0xa8] sm:$0xff] %v2712
          %2781 = vst [vmem:[#allocation2 + $0xb0] sm:$0xff] %v2713
          %2782 = vst [vmem:[#allocation2 + $0xb8] sm:$0xff] %v2714
          %2783 = vst [vmem:[#allocation2 + $0xc0] sm:$0xff] %v2715
          %2784 = vst [vmem:[#allocation2 + $0xc8] sm:$0xff] %v2716
          %2785 = vst [vmem:[#allocation2 + $0xd0] sm:$0xff] %v2717
          %2786 = vst [vmem:[#allocation2 + $0xd8] sm:$0xff] %v2718
          %2787 = vst [vmem:[#allocation2 + $0xe0] sm:$0xff] %v2719
          %2788 = vst [vmem:[#allocation2 + $0xe8] sm:$0xff] %v2720
          %2789 = vst [vmem:[#allocation2 + $0xf0] sm:$0xff] %v2721
          %2790 = vst [vmem:[#allocation2 + $0xf8] sm:$0xff] %v2722
          %2791 = vst [vmem:[#allocation2 + $0x100] sm:$0xff] %v2723
          %2792 = vst [vmem:[#allocation2 + $0x108] sm:$0xff] %v2724
          %2793 = vst [vmem:[#allocation2 + $0x110] sm:$0xff] %v2725
          %2794 = vst [vmem:[#allocation2 + $0x118] sm:$0xff] %v2726
          %2795 = vst [vmem:[#allocation2 + $0x120] sm:$0xff] %v2727
          %2796 = vst [vmem:[#allocation2 + $0x128] sm:$0xff] %v2728
          %2797 = vst [vmem:[#allocation2 + $0x130] sm:$0xff] %v2729
          %2798 = vst [vmem:[#allocation2 + $0x138] sm:$0xff] %v2730
          %2799 = vst [vmem:[#allocation2 + $0x140] sm:$0xff] %v2731
          %2800 = vst [vmem:[#allocation2 + $0x148] sm:$0xff] %v2732
          %2801 = vst [vmem:[#allocation2 + $0x150] sm:$0xff] %v2733
          %2802 = vst [vmem:[#allocation2 + $0x158] sm:$0xff] %v2734
          %2803 = vst [vmem:[#allocation2 + $0x160] sm:$0xff] %v2735
          %2804 = vst [vmem:[#allocation2 + $0x168] sm:$0xff] %v2736
          %2805 = vst [vmem:[#allocation2 + $0x170] sm:$0xff] %v2737
          %2806 = vst [vmem:[#allocation2 + $0x178] sm:$0xff] %v2738
          %2807 = vst [vmem:[#allocation2 + $0x180] sm:$0xff] %v2739
          %2808 = vst [vmem:[#allocation2 + $0x188] sm:$0xff] %v2740
          %2809 = vst [vmem:[#allocation2 + $0x190] sm:$0xff] %v2741
          %2810 = vst [vmem:[#allocation2 + $0x198] sm:$0xff] %v2742
          %2811 = vst [vmem:[#allocation2 + $0x1a0] sm:$0xff] %v2743
          %2812 = vst [vmem:[#allocation2 + $0x1a8] sm:$0xff] %v2744
          %2813 = vst [vmem:[#allocation2 + $0x1b0] sm:$0xff] %v2745
          %2814 = vst [vmem:[#allocation2 + $0x1b8] sm:$0xff] %v2746
          %2815 = vst [vmem:[#allocation2 + $0x1c0] sm:$0xff] %v2747
          %2816 = vst [vmem:[#allocation2 + $0x1c8] sm:$0xff] %v2748
          %2817 = vst [vmem:[#allocation2 + $0x1d0] sm:$0xff] %v2749
          %2818 = vst [vmem:[#allocation2 + $0x1d8] sm:$0xff] %v2750
          %2819 = vst [vmem:[#allocation2 + $0x1e0] sm:$0xff] %v2751
          %2820 = vst [vmem:[#allocation2 + $0x1e8] sm:$0xff] %v2752
          %2821 = vst [vmem:[#allocation2 + $0x1f0] sm:$0xff] %v2753
          %2822 = vst [vmem:[#allocation2 + $0x1f8] sm:$0xff] %v2754
          %2823 = vst [vmem:[#allocation2 + $0x200] sm:$0xff] %v2755
          %2824 = vst [vmem:[#allocation2 + $0x208] sm:$0xff] %v2756
          %2825 = vst [vmem:[#allocation2 + $0x210] sm:$0xff] %v2757
          %2826 = vst [vmem:[#allocation2 + $0x218] sm:$0xff] %v2758
        $region48: #{tpu_custom_call.1} parent=27 // pred_fallthru
          _
        // Predicated region
        $region49: #{tpu_custom_call.1} parent=27 // pred_check
          %p2827 = pneg %p224
        $region50: #{tpu_custom_call.1} parent=27 // pred_check_branch
          %2829 = sbr.rel (%p2827) target = $region52
        $region51: #{tpu_custom_call.1} parent=27 // pred_region
          %v2830 = vld [vmem:[#allocation2] sm:$0xff]
          %v2831 = vld [vmem:[#allocation2 + $0x8] sm:$0xff]
          %v2832 = vld [vmem:[#allocation2 + $0x10] sm:$0xff]
          %v2833 = vld [vmem:[#allocation2 + $0x18] sm:$0xff]
          %v2834 = vld [vmem:[#allocation2 + $0x20] sm:$0xff]
          %v2835 = vld [vmem:[#allocation2 + $0x28] sm:$0xff]
          %v2836 = vld [vmem:[#allocation2 + $0x30] sm:$0xff]
          %v2837 = vld [vmem:[#allocation2 + $0x38] sm:$0xff]
          %v2838 = vld [vmem:[#allocation2 + $0x40] sm:$0xff]
          %v2839 = vld [vmem:[#allocation2 + $0x48] sm:$0xff]
          %v2840 = vld [vmem:[#allocation2 + $0x50] sm:$0xff]
          %v2841 = vld [vmem:[#allocation2 + $0x58] sm:$0xff]
          %v2842 = vld [vmem:[#allocation2 + $0x60] sm:$0xff]
          %v2843 = vld [vmem:[#allocation2 + $0x68] sm:$0xff]
          %v2844 = vld [vmem:[#allocation2 + $0x70] sm:$0xff]
          %v2845 = vld [vmem:[#allocation2 + $0x78] sm:$0xff]
          %v2846 = vld [vmem:[#allocation2 + $0x80] sm:$0xff]
          %v2847 = vld [vmem:[#allocation2 + $0x88] sm:$0xff]
          %v2848 = vld [vmem:[#allocation2 + $0x90] sm:$0xff]
          %v2849 = vld [vmem:[#allocation2 + $0x98] sm:$0xff]
          %v2850 = vld [vmem:[#allocation2 + $0xa0] sm:$0xff]
          %v2851 = vld [vmem:[#allocation2 + $0xa8] sm:$0xff]
          %v2852 = vld [vmem:[#allocation2 + $0xb0] sm:$0xff]
          %v2853 = vld [vmem:[#allocation2 + $0xb8] sm:$0xff]
          %v2854 = vld [vmem:[#allocation2 + $0xc0] sm:$0xff]
          %v2855 = vld [vmem:[#allocation2 + $0xc8] sm:$0xff]
          %v2856 = vld [vmem:[#allocation2 + $0xd0] sm:$0xff]
          %v2857 = vld [vmem:[#allocation2 + $0xd8] sm:$0xff]
          %v2858 = vld [vmem:[#allocation2 + $0xe0] sm:$0xff]
          %v2859 = vld [vmem:[#allocation2 + $0xe8] sm:$0xff]
          %v2860 = vld [vmem:[#allocation2 + $0xf0] sm:$0xff]
          %v2861 = vld [vmem:[#allocation2 + $0xf8] sm:$0xff]
          %v2862 = vld [vmem:[#allocation2 + $0x100] sm:$0xff]
          %v2863 = vld [vmem:[#allocation2 + $0x108] sm:$0xff]
          %v2864 = vld [vmem:[#allocation2 + $0x110] sm:$0xff]
          %v2865 = vld [vmem:[#allocation2 + $0x118] sm:$0xff]
          %v2866 = vld [vmem:[#allocation2 + $0x120] sm:$0xff]
          %v2867 = vld [vmem:[#allocation2 + $0x128] sm:$0xff]
          %v2868 = vld [vmem:[#allocation2 + $0x130] sm:$0xff]
          %v2869 = vld [vmem:[#allocation2 + $0x138] sm:$0xff]
          %v2870 = vld [vmem:[#allocation2 + $0x140] sm:$0xff]
          %v2871 = vld [vmem:[#allocation2 + $0x148] sm:$0xff]
          %v2872 = vld [vmem:[#allocation2 + $0x150] sm:$0xff]
          %v2873 = vld [vmem:[#allocation2 + $0x158] sm:$0xff]
          %v2874 = vld [vmem:[#allocation2 + $0x160] sm:$0xff]
          %v2875 = vld [vmem:[#allocation2 + $0x168] sm:$0xff]
          %v2876 = vld [vmem:[#allocation2 + $0x170] sm:$0xff]
          %v2877 = vld [vmem:[#allocation2 + $0x178] sm:$0xff]
          %v2878 = vld [vmem:[#allocation2 + $0x180] sm:$0xff]
          %v2879 = vld [vmem:[#allocation2 + $0x188] sm:$0xff]
          %v2880 = vld [vmem:[#allocation2 + $0x190] sm:$0xff]
          %v2881 = vld [vmem:[#allocation2 + $0x198] sm:$0xff]
          %v2882 = vld [vmem:[#allocation2 + $0x1a0] sm:$0xff]
          %v2883 = vld [vmem:[#allocation2 + $0x1a8] sm:$0xff]
          %v2884 = vld [vmem:[#allocation2 + $0x1b0] sm:$0xff]
          %v2885 = vld [vmem:[#allocation2 + $0x1b8] sm:$0xff]
          %v2886 = vld [vmem:[#allocation2 + $0x1c0] sm:$0xff]
          %v2887 = vld [vmem:[#allocation2 + $0x1c8] sm:$0xff]
          %v2888 = vld [vmem:[#allocation2 + $0x1d0] sm:$0xff]
          %v2889 = vld [vmem:[#allocation2 + $0x1d8] sm:$0xff]
          %v2890 = vld [vmem:[#allocation2 + $0x1e0] sm:$0xff]
          %v2891 = vld [vmem:[#allocation2 + $0x1e8] sm:$0xff]
          %v2892 = vld [vmem:[#allocation2 + $0x1f0] sm:$0xff]
          %v2893 = vld [vmem:[#allocation2 + $0x1f8] sm:$0xff]
          %v2894 = vld [vmem:[#allocation2 + $0x200] sm:$0xff]
          %v2895 = vld [vmem:[#allocation2 + $0x208] sm:$0xff]
          %v2896 = vld [vmem:[#allocation2 + $0x210] sm:$0xff]
          %v2897 = vld [vmem:[#allocation2 + $0x218] sm:$0xff]
          %v2898 = vadd.f32 %v2830, %v2831
          %v2899 = vadd.f32 %v2898, %v2832
          %v2900 = vadd.f32 %v2899, %v2833
          %v2901 = vadd.f32 %v2900, %v2834
          %v2902 = vadd.f32 %v2901, %v2835
          %v2903 = vadd.f32 %v2902, %v2836
          %v2904 = vadd.f32 %v2903, %v2837
          %v2905 = vadd.f32 %v2904, %v2838
          %v2906 = vadd.f32 %v2905, %v2839
          %v2907 = vadd.f32 %v2906, %v2840
          %v2908 = vadd.f32 %v2907, %v2841
          %v2909 = vadd.f32 %v2908, %v2842
          %v2910 = vadd.f32 %v2909, %v2843
          %v2911 = vadd.f32 %v2910, %v2844
          %v2912 = vadd.f32 %v2911, %v2845
          %v2913 = vadd.f32 %v2912, %v2846
          %v2914 = vadd.f32 %v2913, %v2847
          %v2915 = vadd.f32 %v2914, %v2848
          %v2916 = vadd.f32 %v2915, %v2849
          %v2917 = vadd.f32 %v2916, %v2850
          %v2918 = vadd.f32 %v2917, %v2851
          %v2919 = vadd.f32 %v2918, %v2852
          %v2920 = vadd.f32 %v2919, %v2853
          %v2921 = vadd.f32 %v2920, %v2854
          %v2922 = vadd.f32 %v2921, %v2855
          %v2923 = vadd.f32 %v2922, %v2856
          %v2924 = vadd.f32 %v2923, %v2857
          %v2925 = vadd.f32 %v2924, %v2858
          %v2926 = vadd.f32 %v2925, %v2859
          %v2927 = vadd.f32 %v2926, %v2860
          %v2928 = vadd.f32 %v2927, %v2861
          %v2929 = vadd.f32 %v2928, %v2862
          %v2930 = vadd.f32 %v2929, %v2863
          %v2931 = vadd.f32 %v2930, %v2864
          %v2932 = vadd.f32 %v2931, %v2865
          %v2933 = vadd.f32 %v2932, %v2866
          %v2934 = vadd.f32 %v2933, %v2867
          %v2935 = vadd.f32 %v2934, %v2868
          %v2936 = vadd.f32 %v2935, %v2869
          %v2937 = vadd.f32 %v2936, %v2870
          %v2938 = vadd.f32 %v2937, %v2871
          %v2939 = vadd.f32 %v2938, %v2872
          %v2940 = vadd.f32 %v2939, %v2873
          %v2941 = vadd.f32 %v2940, %v2874
          %v2942 = vadd.f32 %v2941, %v2875
          %v2943 = vadd.f32 %v2942, %v2876
          %v2944 = vadd.f32 %v2943, %v2877
          %v2945 = vadd.f32 %v2944, %v2878
          %v2946 = vadd.f32 %v2945, %v2879
          %v2947 = vadd.f32 %v2946, %v2880
          %v2948 = vadd.f32 %v2947, %v2881
          %v2949 = vadd.f32 %v2948, %v2882
          %v2950 = vadd.f32 %v2949, %v2883
          %v2951 = vadd.f32 %v2950, %v2884
          %v2952 = vadd.f32 %v2951, %v2885
          %v2953 = vadd.f32 %v2952, %v2886
          %v2954 = vadd.f32 %v2953, %v2887
          %v2955 = vadd.f32 %v2954, %v2888
          %v2956 = vadd.f32 %v2955, %v2889
          %v2957 = vadd.f32 %v2956, %v2890
          %v2958 = vadd.f32 %v2957, %v2891
          %v2959 = vadd.f32 %v2958, %v2892
          %v2960 = vadd.f32 %v2959, %v2893
          %v2961 = vadd.f32 %v2960, %v2894
          %v2962 = vadd.f32 %v2961, %v2895
          %v2963 = vadd.f32 %v2962, %v2896
          %v2964 = vadd.f32 %v2963, %v2897
          %2965 = vst [vmem:[%s219] sm:$0xff] %v2964
        $region52: #{tpu_custom_call.1} parent=27 // pred_fallthru
          _
        %s2966 = sand.u32 %s98, 1
        %s2967 = scalar_lea.sflag [#allocation5], %s2966
        %s2968 = sand.u32 %s98, 1
        %s2969 = smul.addr %s2968, 8
        %s2970 = scalar_lea.vmem [#allocation8], %s2969
        // Predicated region
        $region53: #{tpu_custom_call.1} parent=27 // pred_check
          %p2971 = pneg %p108
        $region54: #{tpu_custom_call.1} parent=27 // pred_check_branch
          %2973 = sbr.rel (%p2971) target = $region56
        $region55: #{tpu_custom_call.1} parent=27 // pred_region
          %s2975 = ssub.s32 128, 128
          %2976 = vsyncadd %s2967, %s2975
          %s2977 = smul.addr %s26, 128
          %s2978 = scalar_lea.hbm %s2, %s2977
          %s2980 = sshll.u32 %s2970, 4
          %s2981 = int_to_ptr.vmem [resolvable:$true] %s2980
          %2983 = dma.vmem_to_hbm [thread:$0]  %s2981, 128, %s2978, %s2967
        $region56: #{tpu_custom_call.1} parent=27 // pred_fallthru
          _
      $region28: #{tpu_custom_call.1} parent=5 // pred_fallthru
        _
      %p2984 = scmp.le.s32.totalorder 2, %s17
      // Predicated region
      $region57: #{tpu_custom_call.1} parent=5 // pred_check
        %p2985 = pneg %p2984
      $region58: #{tpu_custom_call.1} parent=5 // pred_check_branch
        %2987 = sbr.rel (%p2985) target = $region60
      $region59: #{tpu_custom_call.1} parent=5 // pred_region
        %s2988 = ssub.s32 %s17, 2
        // Predicated region
        $region61: #{tpu_custom_call.1} parent=59 // pred_check
          %p2989 = pneg %p114
        $region62: #{tpu_custom_call.1} parent=59 // pred_check_branch
          %2991 = sbr.rel (%p2989) target = $region64
        $region63: #{tpu_custom_call.1} parent=59 // pred_region
          %s2992 = sand.u32 %s99, 1
          %s2993 = scalar_lea.sflag [#allocation5], %s2992
          %s2994 = sand.u32 %s99, 1
          %s2995 = smul.addr %s2994, 8
          %s2996 = scalar_lea.vmem [#allocation8], %s2995
          %2997 = dma.done %s2993, 128
        $region64: #{tpu_custom_call.1} parent=59 // pred_fallthru
          _
      $region60: #{tpu_custom_call.1} parent=5 // pred_fallthru
        _
    $region6: #{tpu_custom_call.1} parent=1 // loop_footer
      %s21 = sadd.s32 1, %s17
    $region7: #{tpu_custom_call.1} parent=1 // loop_footer_branch
      %16 = sbr.rel target = $region3
    $region8: #{tpu_custom_call.1} parent=1 // loop_exit
      _
    %2998 = vsyncpa [#allocation4], 1
    %s2999 = scalar_lea.sflag [#allocation4], 1
    %3000 = vsyncpa %s2999, 1
    %3001 = vsyncpa [#allocation7], 1
    %s3002 = scalar_lea.sflag [#allocation7], 1
    %3003 = vsyncpa %s3002, 1
    %3004 = vsyncpa [#allocation5], 1
    %s3005 = scalar_lea.sflag [#allocation5], 1
    %3006 = vsyncpa %s3005, 1

</llo_original>
